<compile_context>
chip_gen: v6e
topology: v6e:2x2x1
jax: 0.10.0
libtpu: 0.0.40
codegen_flags: <defaults>
</compile_context>

<pallas_src>
import functools

import jax
import jax.numpy as jnp
from jax.experimental import pallas as pl
from jax.experimental.pallas import tpu as pltpu

F32 = jnp.float32
BF16 = jnp.bfloat16


# --------------------------------------------------------------------------------------
# Fused ResidualConv kernel (single grid step, whole batch).
#
# Spatial layout trick: the padded input is phase-split (space-to-depth for stride>1) and
# the spatial dims of every phase plane are flattened to the lane axis with pitch
# Wp = Wo + 2.  Every 3x3 tap is then a *contiguous* lane slice of length Ho*Wp whose valid
# entries sit at lane oh*Wp + ow (ow < Wo) for every tap, so per-tap MXU dots accumulate
# directly into a lane-dense (Cout, Ho*Wp) result; the (Wp - Wo) junk columns are masked off
# before feeding conv2 and sliced off by the wrapper at the very end.
# --------------------------------------------------------------------------------------
def _residual_conv_kernel(x_ref, amask_ref, omask_ref, w1_ref, ws_ref, w2_ref,
                          pre_s_ref, pre_t_ref, post1_s_ref, post1_t_ref,
                          b2_ref, bskip_ref, o_ref, y1pad_ref,
                          *, N, s, Cout, Ho, Wp):
    L = Ho * Wp                                     # lane length of every conv result

    # Zero the padded-y1 canvas once; its pad ring stays zero across batch iterations.
    y1pad_ref[...] = jnp.zeros(y1pad_ref.shape, y1pad_ref.dtype)

    w1 = w1_ref[...]                                # (9, Cout, Cin)  bf16
    ws = ws_ref[...]                                # (9, Cout, Cin)  bf16 (skip-BN folded)
    w2 = w2_ref[...]                                # (9, Cout, Cout) bf16
    amask = amask_ref[...]                          # (s*s, 1, Lb) f32: 1 on real pixels
    omask = omask_ref[...]                          # (1, L)       f32: 1 on valid columns
    pre_s = pre_s_ref[...]                          # (1, Cin, 1)  f32
    pre_t = pre_t_ref[...]                          # (1, Cin, 1)  f32

    for n in range(N):                              # tiny unrolled batch loop (N=2)
        xb = x_ref[n]                               # (s*s, Cin, Lb) bf16 phase-split canvas

        # BN1 + ReLU.  The conv's zero-pad ring must stay exactly zero, so mask the affine.
        a1 = jnp.maximum(xb.astype(jnp.float32) * pre_s + pre_t, 0.0)
        a1 = (a1 * amask).astype(jnp.bfloat16)

        acc1 = jnp.zeros((Cout, L), jnp.float32)    # conv1 accumulator   (lane-dense)
        accs = jnp.zeros((Cout, L), jnp.float32)    # skip-conv accumulator
        for kh in range(3):
            for kw in range(3):
                k = kh * 3 + kw
                ph = (kh % s) * s + (kw % s)        # phase plane of this tap
                st = (kh // s) * Wp + (kw // s)     # flat offset inside the plane
                acc1 = acc1 + jnp.dot(w1[k], a1[ph, :, st:st + L],
                                      preferred_element_type=jnp.float32)
                accs = accs + jnp.dot(ws[k], xb[ph, :, st:st + L],
                                      preferred_element_type=jnp.float32)

        # BN2 + ReLU (bias b1 folded into the shift), zero junk columns, write into the
        # zero canvas at (row+1, col+1) -> padding=1 for conv2, all in VMEM.
        y1 = jnp.maximum(acc1 * post1_s_ref[...] + post1_t_ref[...], 0.0)
        y1 = (y1 * omask).astype(jnp.bfloat16)
        y1pad_ref[:, Wp + 1:Wp + 1 + L] = y1

        acc2 = jnp.zeros((Cout, L), jnp.float32)    # conv2 accumulator
        for kh in range(3):
            for kw in range(3):
                st = kh * Wp + kw
                acc2 = acc2 + jnp.dot(w2[kh * 3 + kw], y1pad_ref[:, st:st + L],
                                      preferred_element_type=jnp.float32)

        # f32 epilogue: conv2 bias + skip conv (+ folded skip-BN bias) residual add.
        out = acc2 + b2_ref[...] + accs + bskip_ref[...]
        o_ref[n] = out.astype(o_ref.dtype)


def _bn_affine(bn, eps=1e-5):
    scale = bn["gamma"] * jax.lax.rsqrt(bn["var"] + eps)
    return scale, bn["beta"] - bn["mean"] * scale


# --------------------------------------------------------------------------------------
# ResidualConv forward (NCHW in / NCHW out, matching the PyTorch module)
# --------------------------------------------------------------------------------------
def residual_conv_forward(params, x_nchw, stride, padding, eps=1e-5):
    if padding != 1:
        # TODO(synk): the fused kernel shares one padded canvas between conv1 (pad=padding)
        #             and conv_skip (pad=1); ResidualConv is only ever used with padding=1.
        raise NotImplementedError("fused ResidualConv kernel assumes padding == 1")
    N, Cin, H, W = x_nchw.shape
    Cout = params["w1"].shape[0]
    s = int(stride)
    Ho = (H + 2 - 3) // s + 1
    Wo = (W + 2 - 3) // s + 1
    qh = (3 - 1) // s                            # max tap row offset inside a phase plane
    Wp = Wo + 2                                  # lane pitch == phase-plane width
    Hp = max(-(-(H + 2) // s), Ho + qh + 1)      # phase-plane height (+1 slack row)
    Lb = Hp * Wp
    L = Ho * Wp
    Hc2 = Ho + 3                                 # padded-y1 canvas rows (1+Ho+1 pad + slack)

    pad_h = (1, s * Hp - H - 1)
    pad_w = (1, s * Wp - W - 1)

    def phase_split(arr):                        # (n, c, H, W) -> (n, s*s, c, Hp*Wp)
        n, c = arr.shape[:2]
        xp = jnp.pad(arr, ((0, 0), (0, 0), pad_h, pad_w))
        if s == 1:                               # stride-1: pure pad + flatten, no transpose
            return xp.reshape(n, 1, c, Lb)
        xp = xp.reshape(n, c, Hp, s, Wp, s).transpose(0, 3, 5, 1, 2, 4)
        return xp.reshape(n, s * s, c, Lb)

    phases = phase_split(x_nchw.astype(BF16))                      # (N, s*s, Cin, Lb) bf16
    amask = phase_split(jnp.ones((1, 1, H, W), F32))[0]            # (s*s, 1, Lb)
    omask = (jnp.arange(L, dtype=jnp.int32) % Wp < Wo).astype(F32).reshape(1, L)

    s1, t1 = _bn_affine(params["bn1"], eps)
    s2, t2 = _bn_affine(params["bn2"], eps)
    ss, ts = _bn_affine(params["bns"], eps)

    def taps(w_oihw):                            # (Cout, Cin, 3, 3) -> (9, Cout, Cin) bf16
        co, ci = w_oihw.shape[0], w_oihw.shape[1]
        return w_oihw.transpose(2, 3, 0, 1).reshape(9, co, ci).astype(BF16)

    w1_t = taps(params["w1"])
    w2_t = taps(params["w2"])
    ws_t = taps(params["ws"] * ss.reshape(-1, 1, 1, 1))            # fold skip-BN scale

    pre_s = s1.reshape(1, Cin, 1)
    pre_t = t1.reshape(1, Cin, 1)
    post1_s = s2.reshape(Cout, 1)
    post1_t = (s2 * params["b1"] + t2).reshape(Cout, 1)
    b2 = params["b2"].reshape(Cout, 1)
    bsk = (ss * params["bs"] + ts).reshape(Cout, 1)

    kern = functools.partial(_residual_conv_kernel, N=N, s=s, Cout=Cout, Ho=Ho, Wp=Wp)
    out = pl.pallas_call(
        kern,
        out_shape=jax.ShapeDtypeStruct((N, Cout, L), F32),
        grid=(1,),
        in_specs=[
            pl.BlockSpec((N, s * s, Cin, Lb), lambda i: (0, 0, 0, 0)),
            pl.BlockSpec((s * s, 1, Lb), lambda i: (0, 0, 0)),
            pl.BlockSpec((1, L), lambda i: (0, 0)),
            pl.BlockSpec((9, Cout, Cin), lambda i: (0, 0, 0)),
            pl.BlockSpec((9, Cout, Cin), lambda i: (0, 0, 0)),
            pl.BlockSpec((9, Cout, Cout), lambda i: (0, 0, 0)),
            pl.BlockSpec((1, Cin, 1), lambda i: (0, 0, 0)),
            pl.BlockSpec((1, Cin, 1), lambda i: (0, 0, 0)),
            pl.BlockSpec((Cout, 1), lambda i: (0, 0)),
            pl.BlockSpec((Cout, 1), lambda i: (0, 0)),
            pl.BlockSpec((Cout, 1), lambda i: (0, 0)),
            pl.BlockSpec((Cout, 1), lambda i: (0, 0)),
        ],
        out_specs=pl.BlockSpec((N, Cout, L), lambda i: (0, 0, 0)),
        scratch_shapes=[pltpu.VMEM((Cout, Hc2 * Wp), BF16)],
        compiler_params=pltpu.CompilerParams(dimension_semantics=("arbitrary",)),
    )(phases, amask, omask, w1_t, ws_t, w2_t, pre_s, pre_t, post1_s, post1_t, b2, bsk)

    # Drop the pitch-padding columns -> NCHW output, no transpose needed.
    return out.reshape(N, Cout, Ho, Wp)[:, :, :, :Wo]


# --------------------------------------------------------------------------------------
# Pure-JAX reference with the same bf16 quantization points as the kernel
# --------------------------------------------------------------------------------------
def residual_conv_reference(params, x_nchw, stride, padding, eps=1e-5):
    q = lambda t: t.astype(BF16)
    s1, t1 = _bn_affine(params["bn1"], eps)
    s2, t2 = _bn_affine(params["bn2"], eps)
    ss, ts = _bn_affine(params["bns"], eps)
    dn = ("NCHW", "OIHW", "NCHW")

    def conv(xin, w, b, s, p):
        y = jax.lax.conv_general_dilated(xin, w, (s, s), [(p, p), (p, p)],
                                         dimension_numbers=dn,
                                         preferred_element_type=jnp.float32)
        return y + b.reshape(1, -1, 1, 1)

    xq = q(x_nchw)
    skip = conv(xq, q(params["ws"] * ss.reshape(-1, 1, 1, 1)),
                ss * params["bs"] + ts, stride, 1)
    a1 = jnp.maximum(xq.astype(F32) * s1.reshape(1, -1, 1, 1) + t1.reshape(1, -1, 1, 1), 0.0)
    y1 = conv(q(a1), q(params["w1"]), params["b1"], stride, padding)
    y1 = jnp.maximum(y1 * s2.reshape(1, -1, 1, 1) + t2.reshape(1, -1, 1, 1), 0.0)
    out = conv(q(y1), q(params["w2"]), params["b2"], 1, 1)
    return out + skip


# --------------------------------------------------------------------------------------
# Deterministic synthetic parameters (torch-style OIHW conv weights)
# --------------------------------------------------------------------------------------
def init_params(key, cin, cout):
    ks = jax.random.split(key, 9)

    def conv_init(kw_, kb_, ci, co):
        std = (2.0 / (9 * ci)) ** 0.5
        return (jax.random.normal(kw_, (co, ci, 3, 3), F32) * std,
                jax.random.normal(kb_, (co,), F32) * 0.05)

    def bn_init(k, c):
        a, b, c_, d = jax.random.split(k, 4)
        return dict(gamma=1.0 + 0.1 * jax.random.normal(a, (c,), F32),
                    beta=0.1 * jax.random.normal(b, (c,), F32),
                    mean=0.1 * jax.random.normal(c_, (c,), F32),
                    var=1.0 + 0.1 * jax.random.uniform(d, (c,), F32))

    w1, b1 = conv_init(ks[0], ks[1], cin, cout)
    w2, b2 = conv_init(ks[2], ks[3], cout, cout)
    ws, bs = conv_init(ks[4], ks[5], cin, cout)
    return dict(bn1=bn_init(ks[6], cin), w1=w1, b1=b1,
                bn2=bn_init(ks[7], cout), w2=w2, b2=b2,
                ws=ws, bs=bs, bns=bn_init(ks[8], cout))


if __name__ == "__main__":
    key = jax.random.PRNGKey(0)
    kp, kx = jax.random.split(key)
    N, Cin, Cout, H, W = 2, 4, 8, 16, 16
    params = init_params(kp, Cin, Cout)
    x = jax.random.normal(kx, (N, Cin, H, W), F32)

    for stride in (2, 1):                       # encoder (downsampling) and decoder usage
        fwd = jax.jit(functools.partial(residual_conv_forward, stride=stride, padding=1))
        ref_fn = jax.jit(functools.partial(residual_conv_reference, stride=stride, padding=1))
        out = jax.block_until_ready(fwd(params, x))
        ref = jax.block_until_ready(ref_fn(params, x))
        Ho = (H + 2 - 3) // stride + 1
        assert out.shape == (N, Cout, Ho, Ho), out.shape
        assert bool(jnp.all(jnp.isfinite(out)))
        err = float(jnp.max(jnp.abs(out - ref)))
        assert err < 2e-2, f"stride={stride}: max |pallas - reference| = {err}"
    print("KERNEL_OK")
</pallas_src>

<mosaic_0001>
module attributes {stable_mosaic.version = 11 : i64} {
  func.func @_residual_conv_kernel(%arg0: i32, %arg1: memref<2x4x4x100xbf16, #tpu.memory_space<vmem>>, %arg2: memref<4x1x100xf32, #tpu.memory_space<vmem>>, %arg3: memref<1x80xf32, #tpu.memory_space<vmem>>, %arg4: memref<9x8x4xbf16, #tpu.memory_space<vmem>>, %arg5: memref<9x8x4xbf16, #tpu.memory_space<vmem>>, %arg6: memref<9x8x8xbf16, #tpu.memory_space<vmem>>, %arg7: memref<1x4x1xf32, #tpu.memory_space<vmem>>, %arg8: memref<1x4x1xf32, #tpu.memory_space<vmem>>, %arg9: memref<8x1xf32, #tpu.memory_space<vmem>>, %arg10: memref<8x1xf32, #tpu.memory_space<vmem>>, %arg11: memref<8x1xf32, #tpu.memory_space<vmem>>, %arg12: memref<8x1xf32, #tpu.memory_space<vmem>>, %arg13: memref<2x8x80xf32, #tpu.memory_space<vmem>>, %arg14: memref<8x110xbf16, #tpu.memory_space<vmem>>) attributes {dimension_semantics = [#tpu.dimension_semantics<arbitrary>], iteration_bounds = array<i64: 1>, scalar_prefetch = 0 : i64, scratch_operands = 1 : i64, tpu.core_type = #tpu.core_type<tc>, window_params = [{pipeline_mode = #tpu.pipeline_mode<synchronous>, transform_indices = @transform_0, window_bounds = array<i64: 2, 4, 4, 100>}, {pipeline_mode = #tpu.pipeline_mode<synchronous>, transform_indices = @transform_1, window_bounds = array<i64: 4, 1, 100>}, {pipeline_mode = #tpu.pipeline_mode<synchronous>, transform_indices = @transform_2, window_bounds = array<i64: 1, 80>}, {pipeline_mode = #tpu.pipeline_mode<synchronous>, transform_indices = @transform_3, window_bounds = array<i64: 9, 8, 4>}, {pipeline_mode = #tpu.pipeline_mode<synchronous>, transform_indices = @transform_4, window_bounds = array<i64: 9, 8, 4>}, {pipeline_mode = #tpu.pipeline_mode<synchronous>, transform_indices = @transform_5, window_bounds = array<i64: 9, 8, 8>}, {pipeline_mode = #tpu.pipeline_mode<synchronous>, transform_indices = @transform_6, window_bounds = array<i64: 1, 4, 1>}, {pipeline_mode = #tpu.pipeline_mode<synchronous>, transform_indices = @transform_7, window_bounds = array<i64: 1, 4, 1>}, {pipeline_mode = #tpu.pipeline_mode<synchronous>, transform_indices = @transform_8, window_bounds = array<i64: 8, 1>}, {pipeline_mode = #tpu.pipeline_mode<synchronous>, transform_indices = @transform_9, window_bounds = array<i64: 8, 1>}, {pipeline_mode = #tpu.pipeline_mode<synchronous>, transform_indices = @transform_10, window_bounds = array<i64: 8, 1>}, {pipeline_mode = #tpu.pipeline_mode<synchronous>, transform_indices = @transform_11, window_bounds = array<i64: 8, 1>}, {pipeline_mode = #tpu.pipeline_mode<synchronous>, transform_indices = @transform_12, window_bounds = array<i64: 2, 8, 80>}]} {
    %cst = arith.constant 0.000000e+00 : bf16
    %0 = vector.broadcast %cst : bf16 to vector<8x110xbf16>
    %c0 = arith.constant 0 : index
    %c0_0 = arith.constant 0 : index
    %1 = vector.load %arg14[%c0, %c0_0] : memref<8x110xbf16, #tpu.memory_space<vmem>>, vector<8x110xbf16>
    tpu.vector_store %arg14[%c0, %c0_0], %0 {strides = array<i32>} : memref<8x110xbf16, #tpu.memory_space<vmem>>, vector<8x110xbf16>,
    %c0_1 = arith.constant 0 : index
    %c0_2 = arith.constant 0 : index
    %c0_3 = arith.constant 0 : index
    %2 = vector.load %arg4[%c0_1, %c0_2, %c0_3] : memref<9x8x4xbf16, #tpu.memory_space<vmem>>, vector<9x8x4xbf16>
    %c0_4 = arith.constant 0 : index
    %c0_5 = arith.constant 0 : index
    %c0_6 = arith.constant 0 : index
    %3 = vector.load %arg5[%c0_4, %c0_5, %c0_6] : memref<9x8x4xbf16, #tpu.memory_space<vmem>>, vector<9x8x4xbf16>
    %c0_7 = arith.constant 0 : index
    %c0_8 = arith.constant 0 : index
    %c0_9 = arith.constant 0 : index
    %4 = vector.load %arg6[%c0_7, %c0_8, %c0_9] : memref<9x8x8xbf16, #tpu.memory_space<vmem>>, vector<9x8x8xbf16>
    %c0_10 = arith.constant 0 : index
    %c0_11 = arith.constant 0 : index
    %c0_12 = arith.constant 0 : index
    %5 = vector.load %arg2[%c0_10, %c0_11, %c0_12] : memref<4x1x100xf32, #tpu.memory_space<vmem>>, vector<4x1x100xf32>
    %c0_13 = arith.constant 0 : index
    %c0_14 = arith.constant 0 : index
    %6 = vector.load %arg3[%c0_13, %c0_14] : memref<1x80xf32, #tpu.memory_space<vmem>>, vector<1x80xf32>
    %c0_15 = arith.constant 0 : index
    %c0_16 = arith.constant 0 : index
    %c0_17 = arith.constant 0 : index
    %7 = vector.load %arg7[%c0_15, %c0_16, %c0_17] : memref<1x4x1xf32, #tpu.memory_space<vmem>>, vector<1x4x1xf32>
    %c0_18 = arith.constant 0 : index
    %c0_19 = arith.constant 0 : index
    %c0_20 = arith.constant 0 : index
    %8 = vector.load %arg8[%c0_18, %c0_19, %c0_20] : memref<1x4x1xf32, #tpu.memory_space<vmem>>, vector<1x4x1xf32>
    %c0_21 = arith.constant 0 : index
    %c0_22 = arith.constant 0 : index
    %c0_23 = arith.constant 0 : index
    %c0_24 = arith.constant 0 : index
    %9 = vector.load %arg1[%c0_21, %c0_22, %c0_23, %c0_24] : memref<2x4x4x100xbf16, #tpu.memory_space<vmem>>, vector<1x4x4x100xbf16>
    %10 = vector.shape_cast %9 : vector<1x4x4x100xbf16> to vector<4x4x100xbf16>
    %11 = arith.extf %10 : vector<4x4x100xbf16> to vector<4x4x100xf32>
    %12 = vector.broadcast %7 : vector<1x4x1xf32> to vector<4x4x100xf32>
    %13 = arith.mulf %11, %12 : vector<4x4x100xf32>
    %14 = vector.broadcast %8 : vector<1x4x1xf32> to vector<4x4x100xf32>
    %15 = arith.addf %13, %14 : vector<4x4x100xf32>
    %cst_25 = arith.constant 0.000000e+00 : f32
    %16 = vector.broadcast %cst_25 : f32 to vector<4x4x100xf32>
    %17 = arith.maximumf %15, %16 : vector<4x4x100xf32>
    %18 = vector.broadcast %5 : vector<4x1x100xf32> to vector<4x4x100xf32>
    %19 = arith.mulf %17, %18 : vector<4x4x100xf32>
    %20 = arith.truncf %19 : vector<4x4x100xf32> to vector<4x4x100xbf16>
    %cst_26 = arith.constant 0.000000e+00 : f32
    %21 = vector.broadcast %cst_26 : f32 to vector<8x80xf32>
    %cst_27 = arith.constant 0.000000e+00 : f32
    %22 = vector.broadcast %cst_27 : f32 to vector<8x80xf32>
    %23 = vector.extract_strided_slice %2 {offsets = [0, 0, 0], sizes = [1, 8, 4], strides = [1, 1, 1]} : vector<9x8x4xbf16> to vector<1x8x4xbf16>
    %24 = vector.shape_cast %23 : vector<1x8x4xbf16> to vector<8x4xbf16>
    %25 = vector.extract_strided_slice %20 {offsets = [0, 0, 0], sizes = [1, 4, 80], strides = [1, 1, 1]} : vector<4x4x100xbf16> to vector<1x4x80xbf16>
    %26 = vector.shape_cast %25 : vector<1x4x80xbf16> to vector<4x80xbf16>
    %cst_28 = arith.constant dense<0.000000e+00> : vector<8x80xf32>
    %27 = tpu.matmul %24, %26, %cst_28 {dimension_numbers = #tpu.dot_dimension_numbers<[1], [0], [0], [1], [0, 0, 1, 1], [], []>} : vector<8x4xbf16>, vector<4x80xbf16>, vector<8x80xf32> -> vector<8x80xf32>
    %28 = arith.addf %21, %27 : vector<8x80xf32>
    %29 = vector.extract_strided_slice %3 {offsets = [0, 0, 0], sizes = [1, 8, 4], strides = [1, 1, 1]} : vector<9x8x4xbf16> to vector<1x8x4xbf16>
    %30 = vector.shape_cast %29 : vector<1x8x4xbf16> to vector<8x4xbf16>
    %31 = vector.extract_strided_slice %10 {offsets = [0, 0, 0], sizes = [1, 4, 80], strides = [1, 1, 1]} : vector<4x4x100xbf16> to vector<1x4x80xbf16>
    %32 = vector.shape_cast %31 : vector<1x4x80xbf16> to vector<4x80xbf16>
    %cst_29 = arith.constant dense<0.000000e+00> : vector<8x80xf32>
    %33 = tpu.matmul %30, %32, %cst_29 {dimension_numbers = #tpu.dot_dimension_numbers<[1], [0], [0], [1], [0, 0, 1, 1], [], []>} : vector<8x4xbf16>, vector<4x80xbf16>, vector<8x80xf32> -> vector<8x80xf32>
    %34 = arith.addf %22, %33 : vector<8x80xf32>
    %35 = vector.extract_strided_slice %2 {offsets = [1, 0, 0], sizes = [1, 8, 4], strides = [1, 1, 1]} : vector<9x8x4xbf16> to vector<1x8x4xbf16>
    %36 = vector.shape_cast %35 : vector<1x8x4xbf16> to vector<8x4xbf16>
    %37 = vector.extract_strided_slice %20 {offsets = [1, 0, 0], sizes = [1, 4, 80], strides = [1, 1, 1]} : vector<4x4x100xbf16> to vector<1x4x80xbf16>
    %38 = vector.shape_cast %37 : vector<1x4x80xbf16> to vector<4x80xbf16>
    %cst_30 = arith.constant dense<0.000000e+00> : vector<8x80xf32>
    %39 = tpu.matmul %36, %38, %cst_30 {dimension_numbers = #tpu.dot_dimension_numbers<[1], [0], [0], [1], [0, 0, 1, 1], [], []>} : vector<8x4xbf16>, vector<4x80xbf16>, vector<8x80xf32> -> vector<8x80xf32>
    %40 = arith.addf %28, %39 : vector<8x80xf32>
    %41 = vector.extract_strided_slice %3 {offsets = [1, 0, 0], sizes = [1, 8, 4], strides = [1, 1, 1]} : vector<9x8x4xbf16> to vector<1x8x4xbf16>
    %42 = vector.shape_cast %41 : vector<1x8x4xbf16> to vector<8x4xbf16>
    %43 = vector.extract_strided_slice %10 {offsets = [1, 0, 0], sizes = [1, 4, 80], strides = [1, 1, 1]} : vector<4x4x100xbf16> to vector<1x4x80xbf16>
    %44 = vector.shape_cast %43 : vector<1x4x80xbf16> to vector<4x80xbf16>
    %cst_31 = arith.constant dense<0.000000e+00> : vector<8x80xf32>
    %45 = tpu.matmul %42, %44, %cst_31 {dimension_numbers = #tpu.dot_dimension_numbers<[1], [0], [0], [1], [0, 0, 1, 1], [], []>} : vector<8x4xbf16>, vector<4x80xbf16>, vector<8x80xf32> -> vector<8x80xf32>
    %46 = arith.addf %34, %45 : vector<8x80xf32>
    %47 = vector.extract_strided_slice %2 {offsets = [2, 0, 0], sizes = [1, 8, 4], strides = [1, 1, 1]} : vector<9x8x4xbf16> to vector<1x8x4xbf16>
    %48 = vector.shape_cast %47 : vector<1x8x4xbf16> to vector<8x4xbf16>
    %49 = vector.extract_strided_slice %20 {offsets = [0, 0, 1], sizes = [1, 4, 80], strides = [1, 1, 1]} : vector<4x4x100xbf16> to vector<1x4x80xbf16>
    %50 = vector.shape_cast %49 : vector<1x4x80xbf16> to vector<4x80xbf16>
    %cst_32 = arith.constant dense<0.000000e+00> : vector<8x80xf32>
    %51 = tpu.matmul %48, %50, %cst_32 {dimension_numbers = #tpu.dot_dimension_numbers<[1], [0], [0], [1], [0, 0, 1, 1], [], []>} : vector<8x4xbf16>, vector<4x80xbf16>, vector<8x80xf32> -> vector<8x80xf32>
    %52 = arith.addf %40, %51 : vector<8x80xf32>
    %53 = vector.extract_strided_slice %3 {offsets = [2, 0, 0], sizes = [1, 8, 4], strides = [1, 1, 1]} : vector<9x8x4xbf16> to vector<1x8x4xbf16>
    %54 = vector.shape_cast %53 : vector<1x8x4xbf16> to vector<8x4xbf16>
    %55 = vector.extract_strided_slice %10 {offsets = [0, 0, 1], sizes = [1, 4, 80], strides = [1, 1, 1]} : vector<4x4x100xbf16> to vector<1x4x80xbf16>
    %56 = vector.shape_cast %55 : vector<1x4x80xbf16> to vector<4x80xbf16>
    %cst_33 = arith.constant dense<0.000000e+00> : vector<8x80xf32>
    %57 = tpu.matmul %54, %56, %cst_33 {dimension_numbers = #tpu.dot_dimension_numbers<[1], [0], [0], [1], [0, 0, 1, 1], [], []>} : vector<8x4xbf16>, vector<4x80xbf16>, vector<8x80xf32> -> vector<8x80xf32>
    %58 = arith.addf %46, %57 : vector<8x80xf32>
    %59 = vector.extract_strided_slice %2 {offsets = [3, 0, 0], sizes = [1, 8, 4], strides = [1, 1, 1]} : vector<9x8x4xbf16> to vector<1x8x4xbf16>
    %60 = vector.shape_cast %59 : vector<1x8x4xbf16> to vector<8x4xbf16>
    %61 = vector.extract_strided_slice %20 {offsets = [2, 0, 0], sizes = [1, 4, 80], strides = [1, 1, 1]} : vector<4x4x100xbf16> to vector<1x4x80xbf16>
    %62 = vector.shape_cast %61 : vector<1x4x80xbf16> to vector<4x80xbf16>
    %cst_34 = arith.constant dense<0.000000e+00> : vector<8x80xf32>
    %63 = tpu.matmul %60, %62, %cst_34 {dimension_numbers = #tpu.dot_dimension_numbers<[1], [0], [0], [1], [0, 0, 1, 1], [], []>} : vector<8x4xbf16>, vector<4x80xbf16>, vector<8x80xf32> -> vector<8x80xf32>
    %64 = arith.addf %52, %63 : vector<8x80xf32>
    %65 = vector.extract_strided_slice %3 {offsets = [3, 0, 0], sizes = [1, 8, 4], strides = [1, 1, 1]} : vector<9x8x4xbf16> to vector<1x8x4xbf16>
    %66 = vector.shape_cast %65 : vector<1x8x4xbf16> to vector<8x4xbf16>
    %67 = vector.extract_strided_slice %10 {offsets = [2, 0, 0], sizes = [1, 4, 80], strides = [1, 1, 1]} : vector<4x4x100xbf16> to vector<1x4x80xbf16>
    %68 = vector.shape_cast %67 : vector<1x4x80xbf16> to vector<4x80xbf16>
    %cst_35 = arith.constant dense<0.000000e+00> : vector<8x80xf32>
    %69 = tpu.matmul %66, %68, %cst_35 {dimension_numbers = #tpu.dot_dimension_numbers<[1], [0], [0], [1], [0, 0, 1, 1], [], []>} : vector<8x4xbf16>, vector<4x80xbf16>, vector<8x80xf32> -> vector<8x80xf32>
    %70 = arith.addf %58, %69 : vector<8x80xf32>
    %71 = vector.extract_strided_slice %2 {offsets = [4, 0, 0], sizes = [1, 8, 4], strides = [1, 1, 1]} : vector<9x8x4xbf16> to vector<1x8x4xbf16>
    %72 = vector.shape_cast %71 : vector<1x8x4xbf16> to vector<8x4xbf16>
    %73 = vector.extract_strided_slice %20 {offsets = [3, 0, 0], sizes = [1, 4, 80], strides = [1, 1, 1]} : vector<4x4x100xbf16> to vector<1x4x80xbf16>
    %74 = vector.shape_cast %73 : vector<1x4x80xbf16> to vector<4x80xbf16>
    %cst_36 = arith.constant dense<0.000000e+00> : vector<8x80xf32>
    %75 = tpu.matmul %72, %74, %cst_36 {dimension_numbers = #tpu.dot_dimension_numbers<[1], [0], [0], [1], [0, 0, 1, 1], [], []>} : vector<8x4xbf16>, vector<4x80xbf16>, vector<8x80xf32> -> vector<8x80xf32>
    %76 = arith.addf %64, %75 : vector<8x80xf32>
    %77 = vector.extract_strided_slice %3 {offsets = [4, 0, 0], sizes = [1, 8, 4], strides = [1, 1, 1]} : vector<9x8x4xbf16> to vector<1x8x4xbf16>
    %78 = vector.shape_cast %77 : vector<1x8x4xbf16> to vector<8x4xbf16>
    %79 = vector.extract_strided_slice %10 {offsets = [3, 0, 0], sizes = [1, 4, 80], strides = [1, 1, 1]} : vector<4x4x100xbf16> to vector<1x4x80xbf16>
    %80 = vector.shape_cast %79 : vector<1x4x80xbf16> to vector<4x80xbf16>
    %cst_37 = arith.constant dense<0.000000e+00> : vector<8x80xf32>
    %81 = tpu.matmul %78, %80, %cst_37 {dimension_numbers = #tpu.dot_dimension_numbers<[1], [0], [0], [1], [0, 0, 1, 1], [], []>} : vector<8x4xbf16>, vector<4x80xbf16>, vector<8x80xf32> -> vector<8x80xf32>
    %82 = arith.addf %70, %81 : vector<8x80xf32>
    %83 = vector.extract_strided_slice %2 {offsets = [5, 0, 0], sizes = [1, 8, 4], strides = [1, 1, 1]} : vector<9x8x4xbf16> to vector<1x8x4xbf16>
    %84 = vector.shape_cast %83 : vector<1x8x4xbf16> to vector<8x4xbf16>
    %85 = vector.extract_strided_slice %20 {offsets = [2, 0, 1], sizes = [1, 4, 80], strides = [1, 1, 1]} : vector<4x4x100xbf16> to vector<1x4x80xbf16>
    %86 = vector.shape_cast %85 : vector<1x4x80xbf16> to vector<4x80xbf16>
    %cst_38 = arith.constant dense<0.000000e+00> : vector<8x80xf32>
    %87 = tpu.matmul %84, %86, %cst_38 {dimension_numbers = #tpu.dot_dimension_numbers<[1], [0], [0], [1], [0, 0, 1, 1], [], []>} : vector<8x4xbf16>, vector<4x80xbf16>, vector<8x80xf32> -> vector<8x80xf32>
    %88 = arith.addf %76, %87 : vector<8x80xf32>
    %89 = vector.extract_strided_slice %3 {offsets = [5, 0, 0], sizes = [1, 8, 4], strides = [1, 1, 1]} : vector<9x8x4xbf16> to vector<1x8x4xbf16>
    %90 = vector.shape_cast %89 : vector<1x8x4xbf16> to vector<8x4xbf16>
    %91 = vector.extract_strided_slice %10 {offsets = [2, 0, 1], sizes = [1, 4, 80], strides = [1, 1, 1]} : vector<4x4x100xbf16> to vector<1x4x80xbf16>
    %92 = vector.shape_cast %91 : vector<1x4x80xbf16> to vector<4x80xbf16>
    %cst_39 = arith.constant dense<0.000000e+00> : vector<8x80xf32>
    %93 = tpu.matmul %90, %92, %cst_39 {dimension_numbers = #tpu.dot_dimension_numbers<[1], [0], [0], [1], [0, 0, 1, 1], [], []>} : vector<8x4xbf16>, vector<4x80xbf16>, vector<8x80xf32> -> vector<8x80xf32>
    %94 = arith.addf %82, %93 : vector<8x80xf32>
    %95 = vector.extract_strided_slice %2 {offsets = [6, 0, 0], sizes = [1, 8, 4], strides = [1, 1, 1]} : vector<9x8x4xbf16> to vector<1x8x4xbf16>
    %96 = vector.shape_cast %95 : vector<1x8x4xbf16> to vector<8x4xbf16>
    %97 = vector.extract_strided_slice %20 {offsets = [0, 0, 10], sizes = [1, 4, 80], strides = [1, 1, 1]} : vector<4x4x100xbf16> to vector<1x4x80xbf16>
    %98 = vector.shape_cast %97 : vector<1x4x80xbf16> to vector<4x80xbf16>
    %cst_40 = arith.constant dense<0.000000e+00> : vector<8x80xf32>
    %99 = tpu.matmul %96, %98, %cst_40 {dimension_numbers = #tpu.dot_dimension_numbers<[1], [0], [0], [1], [0, 0, 1, 1], [], []>} : vector<8x4xbf16>, vector<4x80xbf16>, vector<8x80xf32> -> vector<8x80xf32>
    %100 = arith.addf %88, %99 : vector<8x80xf32>
    %101 = vector.extract_strided_slice %3 {offsets = [6, 0, 0], sizes = [1, 8, 4], strides = [1, 1, 1]} : vector<9x8x4xbf16> to vector<1x8x4xbf16>
    %102 = vector.shape_cast %101 : vector<1x8x4xbf16> to vector<8x4xbf16>
    %103 = vector.extract_strided_slice %10 {offsets = [0, 0, 10], sizes = [1, 4, 80], strides = [1, 1, 1]} : vector<4x4x100xbf16> to vector<1x4x80xbf16>
    %104 = vector.shape_cast %103 : vector<1x4x80xbf16> to vector<4x80xbf16>
    %cst_41 = arith.constant dense<0.000000e+00> : vector<8x80xf32>
    %105 = tpu.matmul %102, %104, %cst_41 {dimension_numbers = #tpu.dot_dimension_numbers<[1], [0], [0], [1], [0, 0, 1, 1], [], []>} : vector<8x4xbf16>, vector<4x80xbf16>, vector<8x80xf32> -> vector<8x80xf32>
    %106 = arith.addf %94, %105 : vector<8x80xf32>
    %107 = vector.extract_strided_slice %2 {offsets = [7, 0, 0], sizes = [1, 8, 4], strides = [1, 1, 1]} : vector<9x8x4xbf16> to vector<1x8x4xbf16>
    %108 = vector.shape_cast %107 : vector<1x8x4xbf16> to vector<8x4xbf16>
    %109 = vector.extract_strided_slice %20 {offsets = [1, 0, 10], sizes = [1, 4, 80], strides = [1, 1, 1]} : vector<4x4x100xbf16> to vector<1x4x80xbf16>
    %110 = vector.shape_cast %109 : vector<1x4x80xbf16> to vector<4x80xbf16>
    %cst_42 = arith.constant dense<0.000000e+00> : vector<8x80xf32>
    %111 = tpu.matmul %108, %110, %cst_42 {dimension_numbers = #tpu.dot_dimension_numbers<[1], [0], [0], [1], [0, 0, 1, 1], [], []>} : vector<8x4xbf16>, vector<4x80xbf16>, vector<8x80xf32> -> vector<8x80xf32>
    %112 = arith.addf %100, %111 : vector<8x80xf32>
    %113 = vector.extract_strided_slice %3 {offsets = [7, 0, 0], sizes = [1, 8, 4], strides = [1, 1, 1]} : vector<9x8x4xbf16> to vector<1x8x4xbf16>
    %114 = vector.shape_cast %113 : vector<1x8x4xbf16> to vector<8x4xbf16>
    %115 = vector.extract_strided_slice %10 {offsets = [1, 0, 10], sizes = [1, 4, 80], strides = [1, 1, 1]} : vector<4x4x100xbf16> to vector<1x4x80xbf16>
    %116 = vector.shape_cast %115 : vector<1x4x80xbf16> to vector<4x80xbf16>
    %cst_43 = arith.constant dense<0.000000e+00> : vector<8x80xf32>
    %117 = tpu.matmul %114, %116, %cst_43 {dimension_numbers = #tpu.dot_dimension_numbers<[1], [0], [0], [1], [0, 0, 1, 1], [], []>} : vector<8x4xbf16>, vector<4x80xbf16>, vector<8x80xf32> -> vector<8x80xf32>
    %118 = arith.addf %106, %117 : vector<8x80xf32>
    %119 = vector.extract_strided_slice %2 {offsets = [8, 0, 0], sizes = [1, 8, 4], strides = [1, 1, 1]} : vector<9x8x4xbf16> to vector<1x8x4xbf16>
    %120 = vector.shape_cast %119 : vector<1x8x4xbf16> to vector<8x4xbf16>
    %121 = vector.extract_strided_slice %20 {offsets = [0, 0, 11], sizes = [1, 4, 80], strides = [1, 1, 1]} : vector<4x4x100xbf16> to vector<1x4x80xbf16>
    %122 = vector.shape_cast %121 : vector<1x4x80xbf16> to vector<4x80xbf16>
    %cst_44 = arith.constant dense<0.000000e+00> : vector<8x80xf32>
    %123 = tpu.matmul %120, %122, %cst_44 {dimension_numbers = #tpu.dot_dimension_numbers<[1], [0], [0], [1], [0, 0, 1, 1], [], []>} : vector<8x4xbf16>, vector<4x80xbf16>, vector<8x80xf32> -> vector<8x80xf32>
    %124 = arith.addf %112, %123 : vector<8x80xf32>
    %125 = vector.extract_strided_slice %3 {offsets = [8, 0, 0], sizes = [1, 8, 4], strides = [1, 1, 1]} : vector<9x8x4xbf16> to vector<1x8x4xbf16>
    %126 = vector.shape_cast %125 : vector<1x8x4xbf16> to vector<8x4xbf16>
    %127 = vector.extract_strided_slice %10 {offsets = [0, 0, 11], sizes = [1, 4, 80], strides = [1, 1, 1]} : vector<4x4x100xbf16> to vector<1x4x80xbf16>
    %128 = vector.shape_cast %127 : vector<1x4x80xbf16> to vector<4x80xbf16>
    %cst_45 = arith.constant dense<0.000000e+00> : vector<8x80xf32>
    %129 = tpu.matmul %126, %128, %cst_45 {dimension_numbers = #tpu.dot_dimension_numbers<[1], [0], [0], [1], [0, 0, 1, 1], [], []>} : vector<8x4xbf16>, vector<4x80xbf16>, vector<8x80xf32> -> vector<8x80xf32>
    %130 = arith.addf %118, %129 : vector<8x80xf32>
    %c0_46 = arith.constant 0 : index
    %c0_47 = arith.constant 0 : index
    %131 = vector.load %arg9[%c0_46, %c0_47] : memref<8x1xf32, #tpu.memory_space<vmem>>, vector<8x1xf32>
    %132 = vector.broadcast %131 : vector<8x1xf32> to vector<8x80xf32>
    %133 = arith.mulf %124, %132 : vector<8x80xf32>
    %c0_48 = arith.constant 0 : index
    %c0_49 = arith.constant 0 : index
    %134 = vector.load %arg10[%c0_48, %c0_49] : memref<8x1xf32, #tpu.memory_space<vmem>>, vector<8x1xf32>
    %135 = vector.broadcast %134 : vector<8x1xf32> to vector<8x80xf32>
    %136 = arith.addf %133, %135 : vector<8x80xf32>
    %cst_50 = arith.constant 0.000000e+00 : f32
    %137 = vector.broadcast %cst_50 : f32 to vector<8x80xf32>
    %138 = arith.maximumf %136, %137 : vector<8x80xf32>
    %139 = vector.broadcast %6 : vector<1x80xf32> to vector<8x80xf32>
    %140 = arith.mulf %138, %139 : vector<8x80xf32>
    %141 = arith.truncf %140 : vector<8x80xf32> to vector<8x80xbf16>
    %c0_51 = arith.constant 0 : index
    %c11 = arith.constant 11 : index
    %142 = vector.load %arg14[%c0_51, %c11] : memref<8x110xbf16, #tpu.memory_space<vmem>>, vector<8x80xbf16>
    tpu.vector_store %arg14[%c0_51, %c11], %141 {strides = array<i32>} : memref<8x110xbf16, #tpu.memory_space<vmem>>, vector<8x80xbf16>,
    %cst_52 = arith.constant 0.000000e+00 : f32
    %143 = vector.broadcast %cst_52 : f32 to vector<8x80xf32>
    %144 = vector.extract_strided_slice %4 {offsets = [0, 0, 0], sizes = [1, 8, 8], strides = [1, 1, 1]} : vector<9x8x8xbf16> to vector<1x8x8xbf16>
    %145 = vector.shape_cast %144 : vector<1x8x8xbf16> to vector<8x8xbf16>
    %c0_53 = arith.constant 0 : index
    %c0_54 = arith.constant 0 : index
    %146 = vector.load %arg14[%c0_53, %c0_54] : memref<8x110xbf16, #tpu.memory_space<vmem>>, vector<8x80xbf16>
    %cst_55 = arith.constant dense<0.000000e+00> : vector<8x80xf32>
    %147 = tpu.matmul %145, %146, %cst_55 {dimension_numbers = #tpu.dot_dimension_numbers<[1], [0], [0], [1], [0, 0, 1, 1], [], []>} : vector<8x8xbf16>, vector<8x80xbf16>, vector<8x80xf32> -> vector<8x80xf32>
    %148 = arith.addf %143, %147 : vector<8x80xf32>
    %149 = vector.extract_strided_slice %4 {offsets = [1, 0, 0], sizes = [1, 8, 8], strides = [1, 1, 1]} : vector<9x8x8xbf16> to vector<1x8x8xbf16>
    %150 = vector.shape_cast %149 : vector<1x8x8xbf16> to vector<8x8xbf16>
    %c0_56 = arith.constant 0 : index
    %c1 = arith.constant 1 : index
    %151 = vector.load %arg14[%c0_56, %c1] : memref<8x110xbf16, #tpu.memory_space<vmem>>, vector<8x80xbf16>
    %cst_57 = arith.constant dense<0.000000e+00> : vector<8x80xf32>
    %152 = tpu.matmul %150, %151, %cst_57 {dimension_numbers = #tpu.dot_dimension_numbers<[1], [0], [0], [1], [0, 0, 1, 1], [], []>} : vector<8x8xbf16>, vector<8x80xbf16>, vector<8x80xf32> -> vector<8x80xf32>
    %153 = arith.addf %148, %152 : vector<8x80xf32>
    %154 = vector.extract_strided_slice %4 {offsets = [2, 0, 0], sizes = [1, 8, 8], strides = [1, 1, 1]} : vector<9x8x8xbf16> to vector<1x8x8xbf16>
    %155 = vector.shape_cast %154 : vector<1x8x8xbf16> to vector<8x8xbf16>
    %c0_58 = arith.constant 0 : index
    %c2 = arith.constant 2 : index
    %156 = vector.load %arg14[%c0_58, %c2] : memref<8x110xbf16, #tpu.memory_space<vmem>>, vector<8x80xbf16>
    %cst_59 = arith.constant dense<0.000000e+00> : vector<8x80xf32>
    %157 = tpu.matmul %155, %156, %cst_59 {dimension_numbers = #tpu.dot_dimension_numbers<[1], [0], [0], [1], [0, 0, 1, 1], [], []>} : vector<8x8xbf16>, vector<8x80xbf16>, vector<8x80xf32> -> vector<8x80xf32>
    %158 = arith.addf %153, %157 : vector<8x80xf32>
    %159 = vector.extract_strided_slice %4 {offsets = [3, 0, 0], sizes = [1, 8, 8], strides = [1, 1, 1]} : vector<9x8x8xbf16> to vector<1x8x8xbf16>
    %160 = vector.shape_cast %159 : vector<1x8x8xbf16> to vector<8x8xbf16>
    %c0_60 = arith.constant 0 : index
    %c10 = arith.constant 10 : index
    %161 = vector.load %arg14[%c0_60, %c10] : memref<8x110xbf16, #tpu.memory_space<vmem>>, vector<8x80xbf16>
    %cst_61 = arith.constant dense<0.000000e+00> : vector<8x80xf32>
    %162 = tpu.matmul %160, %161, %cst_61 {dimension_numbers = #tpu.dot_dimension_numbers<[1], [0], [0], [1], [0, 0, 1, 1], [], []>} : vector<8x8xbf16>, vector<8x80xbf16>, vector<8x80xf32> -> vector<8x80xf32>
    %163 = arith.addf %158, %162 : vector<8x80xf32>
    %164 = vector.extract_strided_slice %4 {offsets = [4, 0, 0], sizes = [1, 8, 8], strides = [1, 1, 1]} : vector<9x8x8xbf16> to vector<1x8x8xbf16>
    %165 = vector.shape_cast %164 : vector<1x8x8xbf16> to vector<8x8xbf16>
    %c0_62 = arith.constant 0 : index
    %c11_63 = arith.constant 11 : index
    %166 = vector.load %arg14[%c0_62, %c11_63] : memref<8x110xbf16, #tpu.memory_space<vmem>>, vector<8x80xbf16>
    %cst_64 = arith.constant dense<0.000000e+00> : vector<8x80xf32>
    %167 = tpu.matmul %165, %166, %cst_64 {dimension_numbers = #tpu.dot_dimension_numbers<[1], [0], [0], [1], [0, 0, 1, 1], [], []>} : vector<8x8xbf16>, vector<8x80xbf16>, vector<8x80xf32> -> vector<8x80xf32>
    %168 = arith.addf %163, %167 : vector<8x80xf32>
    %169 = vector.extract_strided_slice %4 {offsets = [5, 0, 0], sizes = [1, 8, 8], strides = [1, 1, 1]} : vector<9x8x8xbf16> to vector<1x8x8xbf16>
    %170 = vector.shape_cast %169 : vector<1x8x8xbf16> to vector<8x8xbf16>
    %c0_65 = arith.constant 0 : index
    %c12 = arith.constant 12 : index
    %171 = vector.load %arg14[%c0_65, %c12] : memref<8x110xbf16, #tpu.memory_space<vmem>>, vector<8x80xbf16>
    %cst_66 = arith.constant dense<0.000000e+00> : vector<8x80xf32>
    %172 = tpu.matmul %170, %171, %cst_66 {dimension_numbers = #tpu.dot_dimension_numbers<[1], [0], [0], [1], [0, 0, 1, 1], [], []>} : vector<8x8xbf16>, vector<8x80xbf16>, vector<8x80xf32> -> vector<8x80xf32>
    %173 = arith.addf %168, %172 : vector<8x80xf32>
    %174 = vector.extract_strided_slice %4 {offsets = [6, 0, 0], sizes = [1, 8, 8], strides = [1, 1, 1]} : vector<9x8x8xbf16> to vector<1x8x8xbf16>
    %175 = vector.shape_cast %174 : vector<1x8x8xbf16> to vector<8x8xbf16>
    %c0_67 = arith.constant 0 : index
    %c20 = arith.constant 20 : index
    %176 = vector.load %arg14[%c0_67, %c20] : memref<8x110xbf16, #tpu.memory_space<vmem>>, vector<8x80xbf16>
    %cst_68 = arith.constant dense<0.000000e+00> : vector<8x80xf32>
    %177 = tpu.matmul %175, %176, %cst_68 {dimension_numbers = #tpu.dot_dimension_numbers<[1], [0], [0], [1], [0, 0, 1, 1], [], []>} : vector<8x8xbf16>, vector<8x80xbf16>, vector<8x80xf32> -> vector<8x80xf32>
    %178 = arith.addf %173, %177 : vector<8x80xf32>
    %179 = vector.extract_strided_slice %4 {offsets = [7, 0, 0], sizes = [1, 8, 8], strides = [1, 1, 1]} : vector<9x8x8xbf16> to vector<1x8x8xbf16>
    %180 = vector.shape_cast %179 : vector<1x8x8xbf16> to vector<8x8xbf16>
    %c0_69 = arith.constant 0 : index
    %c21 = arith.constant 21 : index
    %181 = vector.load %arg14[%c0_69, %c21] : memref<8x110xbf16, #tpu.memory_space<vmem>>, vector<8x80xbf16>
    %cst_70 = arith.constant dense<0.000000e+00> : vector<8x80xf32>
    %182 = tpu.matmul %180, %181, %cst_70 {dimension_numbers = #tpu.dot_dimension_numbers<[1], [0], [0], [1], [0, 0, 1, 1], [], []>} : vector<8x8xbf16>, vector<8x80xbf16>, vector<8x80xf32> -> vector<8x80xf32>
    %183 = arith.addf %178, %182 : vector<8x80xf32>
    %184 = vector.extract_strided_slice %4 {offsets = [8, 0, 0], sizes = [1, 8, 8], strides = [1, 1, 1]} : vector<9x8x8xbf16> to vector<1x8x8xbf16>
    %185 = vector.shape_cast %184 : vector<1x8x8xbf16> to vector<8x8xbf16>
    %c0_71 = arith.constant 0 : index
    %c22 = arith.constant 22 : index
    %186 = vector.load %arg14[%c0_71, %c22] : memref<8x110xbf16, #tpu.memory_space<vmem>>, vector<8x80xbf16>
    %cst_72 = arith.constant dense<0.000000e+00> : vector<8x80xf32>
    %187 = tpu.matmul %185, %186, %cst_72 {dimension_numbers = #tpu.dot_dimension_numbers<[1], [0], [0], [1], [0, 0, 1, 1], [], []>} : vector<8x8xbf16>, vector<8x80xbf16>, vector<8x80xf32> -> vector<8x80xf32>
    %188 = arith.addf %183, %187 : vector<8x80xf32>
    %c0_73 = arith.constant 0 : index
    %c0_74 = arith.constant 0 : index
    %189 = vector.load %arg11[%c0_73, %c0_74] : memref<8x1xf32, #tpu.memory_space<vmem>>, vector<8x1xf32>
    %190 = vector.broadcast %189 : vector<8x1xf32> to vector<8x80xf32>
    %191 = arith.addf %188, %190 : vector<8x80xf32>
    %192 = arith.addf %191, %130 : vector<8x80xf32>
    %c0_75 = arith.constant 0 : index
    %c0_76 = arith.constant 0 : index
    %193 = vector.load %arg12[%c0_75, %c0_76] : memref<8x1xf32, #tpu.memory_space<vmem>>, vector<8x1xf32>
    %194 = vector.broadcast %193 : vector<8x1xf32> to vector<8x80xf32>
    %195 = arith.addf %192, %194 : vector<8x80xf32>
    %c0_77 = arith.constant 0 : index
    %c0_78 = arith.constant 0 : index
    %c0_79 = arith.constant 0 : index
    %196 = vector.load %arg13[%c0_77, %c0_78, %c0_79] : memref<2x8x80xf32, #tpu.memory_space<vmem>>, vector<1x8x80xf32>
    %197 = vector.shape_cast %196 : vector<1x8x80xf32> to vector<8x80xf32>
    %198 = vector.shape_cast %195 : vector<8x80xf32> to vector<1x8x80xf32>
    tpu.vector_store %arg13[%c0_77, %c0_78, %c0_79], %198 {strides = array<i32>} : memref<2x8x80xf32, #tpu.memory_space<vmem>>, vector<1x8x80xf32>,
    %c1_80 = arith.constant 1 : index
    %c0_81 = arith.constant 0 : index
    %c0_82 = arith.constant 0 : index
    %c0_83 = arith.constant 0 : index
    %199 = vector.load %arg1[%c1_80, %c0_81, %c0_82, %c0_83] : memref<2x4x4x100xbf16, #tpu.memory_space<vmem>>, vector<1x4x4x100xbf16>
    %200 = vector.shape_cast %199 : vector<1x4x4x100xbf16> to vector<4x4x100xbf16>
    %201 = arith.extf %200 : vector<4x4x100xbf16> to vector<4x4x100xf32>
    %202 = vector.broadcast %7 : vector<1x4x1xf32> to vector<4x4x100xf32>
    %203 = arith.mulf %201, %202 : vector<4x4x100xf32>
    %204 = vector.broadcast %8 : vector<1x4x1xf32> to vector<4x4x100xf32>
    %205 = arith.addf %203, %204 : vector<4x4x100xf32>
    %cst_84 = arith.constant 0.000000e+00 : f32
    %206 = vector.broadcast %cst_84 : f32 to vector<4x4x100xf32>
    %207 = arith.maximumf %205, %206 : vector<4x4x100xf32>
    %208 = vector.broadcast %5 : vector<4x1x100xf32> to vector<4x4x100xf32>
    %209 = arith.mulf %207, %208 : vector<4x4x100xf32>
    %210 = arith.truncf %209 : vector<4x4x100xf32> to vector<4x4x100xbf16>
    %cst_85 = arith.constant 0.000000e+00 : f32
    %211 = vector.broadcast %cst_85 : f32 to vector<8x80xf32>
    %cst_86 = arith.constant 0.000000e+00 : f32
    %212 = vector.broadcast %cst_86 : f32 to vector<8x80xf32>
    %213 = vector.extract_strided_slice %2 {offsets = [0, 0, 0], sizes = [1, 8, 4], strides = [1, 1, 1]} : vector<9x8x4xbf16> to vector<1x8x4xbf16>
    %214 = vector.shape_cast %213 : vector<1x8x4xbf16> to vector<8x4xbf16>
    %215 = vector.extract_strided_slice %210 {offsets = [0, 0, 0], sizes = [1, 4, 80], strides = [1, 1, 1]} : vector<4x4x100xbf16> to vector<1x4x80xbf16>
    %216 = vector.shape_cast %215 : vector<1x4x80xbf16> to vector<4x80xbf16>
    %cst_87 = arith.constant dense<0.000000e+00> : vector<8x80xf32>
    %217 = tpu.matmul %214, %216, %cst_87 {dimension_numbers = #tpu.dot_dimension_numbers<[1], [0], [0], [1], [0, 0, 1, 1], [], []>} : vector<8x4xbf16>, vector<4x80xbf16>, vector<8x80xf32> -> vector<8x80xf32>
    %218 = arith.addf %211, %217 : vector<8x80xf32>
    %219 = vector.extract_strided_slice %3 {offsets = [0, 0, 0], sizes = [1, 8, 4], strides = [1, 1, 1]} : vector<9x8x4xbf16> to vector<1x8x4xbf16>
    %220 = vector.shape_cast %219 : vector<1x8x4xbf16> to vector<8x4xbf16>
    %221 = vector.extract_strided_slice %200 {offsets = [0, 0, 0], sizes = [1, 4, 80], strides = [1, 1, 1]} : vector<4x4x100xbf16> to vector<1x4x80xbf16>
    %222 = vector.shape_cast %221 : vector<1x4x80xbf16> to vector<4x80xbf16>
    %cst_88 = arith.constant dense<0.000000e+00> : vector<8x80xf32>
    %223 = tpu.matmul %220, %222, %cst_88 {dimension_numbers = #tpu.dot_dimension_numbers<[1], [0], [0], [1], [0, 0, 1, 1], [], []>} : vector<8x4xbf16>, vector<4x80xbf16>, vector<8x80xf32> -> vector<8x80xf32>
    %224 = arith.addf %212, %223 : vector<8x80xf32>
    %225 = vector.extract_strided_slice %2 {offsets = [1, 0, 0], sizes = [1, 8, 4], strides = [1, 1, 1]} : vector<9x8x4xbf16> to vector<1x8x4xbf16>
    %226 = vector.shape_cast %225 : vector<1x8x4xbf16> to vector<8x4xbf16>
    %227 = vector.extract_strided_slice %210 {offsets = [1, 0, 0], sizes = [1, 4, 80], strides = [1, 1, 1]} : vector<4x4x100xbf16> to vector<1x4x80xbf16>
    %228 = vector.shape_cast %227 : vector<1x4x80xbf16> to vector<4x80xbf16>
    %cst_89 = arith.constant dense<0.000000e+00> : vector<8x80xf32>
    %229 = tpu.matmul %226, %228, %cst_89 {dimension_numbers = #tpu.dot_dimension_numbers<[1], [0], [0], [1], [0, 0, 1, 1], [], []>} : vector<8x4xbf16>, vector<4x80xbf16>, vector<8x80xf32> -> vector<8x80xf32>
    %230 = arith.addf %218, %229 : vector<8x80xf32>
    %231 = vector.extract_strided_slice %3 {offsets = [1, 0, 0], sizes = [1, 8, 4], strides = [1, 1, 1]} : vector<9x8x4xbf16> to vector<1x8x4xbf16>
    %232 = vector.shape_cast %231 : vector<1x8x4xbf16> to vector<8x4xbf16>
    %233 = vector.extract_strided_slice %200 {offsets = [1, 0, 0], sizes = [1, 4, 80], strides = [1, 1, 1]} : vector<4x4x100xbf16> to vector<1x4x80xbf16>
    %234 = vector.shape_cast %233 : vector<1x4x80xbf16> to vector<4x80xbf16>
    %cst_90 = arith.constant dense<0.000000e+00> : vector<8x80xf32>
    %235 = tpu.matmul %232, %234, %cst_90 {dimension_numbers = #tpu.dot_dimension_numbers<[1], [0], [0], [1], [0, 0, 1, 1], [], []>} : vector<8x4xbf16>, vector<4x80xbf16>, vector<8x80xf32> -> vector<8x80xf32>
    %236 = arith.addf %224, %235 : vector<8x80xf32>
    %237 = vector.extract_strided_slice %2 {offsets = [2, 0, 0], sizes = [1, 8, 4], strides = [1, 1, 1]} : vector<9x8x4xbf16> to vector<1x8x4xbf16>
    %238 = vector.shape_cast %237 : vector<1x8x4xbf16> to vector<8x4xbf16>
    %239 = vector.extract_strided_slice %210 {offsets = [0, 0, 1], sizes = [1, 4, 80], strides = [1, 1, 1]} : vector<4x4x100xbf16> to vector<1x4x80xbf16>
    %240 = vector.shape_cast %239 : vector<1x4x80xbf16> to vector<4x80xbf16>
    %cst_91 = arith.constant dense<0.000000e+00> : vector<8x80xf32>
    %241 = tpu.matmul %238, %240, %cst_91 {dimension_numbers = #tpu.dot_dimension_numbers<[1], [0], [0], [1], [0, 0, 1, 1], [], []>} : vector<8x4xbf16>, vector<4x80xbf16>, vector<8x80xf32> -> vector<8x80xf32>
    %242 = arith.addf %230, %241 : vector<8x80xf32>
    %243 = vector.extract_strided_slice %3 {offsets = [2, 0, 0], sizes = [1, 8, 4], strides = [1, 1, 1]} : vector<9x8x4xbf16> to vector<1x8x4xbf16>
    %244 = vector.shape_cast %243 : vector<1x8x4xbf16> to vector<8x4xbf16>
    %245 = vector.extract_strided_slice %200 {offsets = [0, 0, 1], sizes = [1, 4, 80], strides = [1, 1, 1]} : vector<4x4x100xbf16> to vector<1x4x80xbf16>
    %246 = vector.shape_cast %245 : vector<1x4x80xbf16> to vector<4x80xbf16>
    %cst_92 = arith.constant dense<0.000000e+00> : vector<8x80xf32>
    %247 = tpu.matmul %244, %246, %cst_92 {dimension_numbers = #tpu.dot_dimension_numbers<[1], [0], [0], [1], [0, 0, 1, 1], [], []>} : vector<8x4xbf16>, vector<4x80xbf16>, vector<8x80xf32> -> vector<8x80xf32>
    %248 = arith.addf %236, %247 : vector<8x80xf32>
    %249 = vector.extract_strided_slice %2 {offsets = [3, 0, 0], sizes = [1, 8, 4], strides = [1, 1, 1]} : vector<9x8x4xbf16> to vector<1x8x4xbf16>
    %250 = vector.shape_cast %249 : vector<1x8x4xbf16> to vector<8x4xbf16>
    %251 = vector.extract_strided_slice %210 {offsets = [2, 0, 0], sizes = [1, 4, 80], strides = [1, 1, 1]} : vector<4x4x100xbf16> to vector<1x4x80xbf16>
    %252 = vector.shape_cast %251 : vector<1x4x80xbf16> to vector<4x80xbf16>
    %cst_93 = arith.constant dense<0.000000e+00> : vector<8x80xf32>
    %253 = tpu.matmul %250, %252, %cst_93 {dimension_numbers = #tpu.dot_dimension_numbers<[1], [0], [0], [1], [0, 0, 1, 1], [], []>} : vector<8x4xbf16>, vector<4x80xbf16>, vector<8x80xf32> -> vector<8x80xf32>
    %254 = arith.addf %242, %253 : vector<8x80xf32>
    %255 = vector.extract_strided_slice %3 {offsets = [3, 0, 0], sizes = [1, 8, 4], strides = [1, 1, 1]} : vector<9x8x4xbf16> to vector<1x8x4xbf16>
    %256 = vector.shape_cast %255 : vector<1x8x4xbf16> to vector<8x4xbf16>
    %257 = vector.extract_strided_slice %200 {offsets = [2, 0, 0], sizes = [1, 4, 80], strides = [1, 1, 1]} : vector<4x4x100xbf16> to vector<1x4x80xbf16>
    %258 = vector.shape_cast %257 : vector<1x4x80xbf16> to vector<4x80xbf16>
    %cst_94 = arith.constant dense<0.000000e+00> : vector<8x80xf32>
    %259 = tpu.matmul %256, %258, %cst_94 {dimension_numbers = #tpu.dot_dimension_numbers<[1], [0], [0], [1], [0, 0, 1, 1], [], []>} : vector<8x4xbf16>, vector<4x80xbf16>, vector<8x80xf32> -> vector<8x80xf32>
    %260 = arith.addf %248, %259 : vector<8x80xf32>
    %261 = vector.extract_strided_slice %2 {offsets = [4, 0, 0], sizes = [1, 8, 4], strides = [1, 1, 1]} : vector<9x8x4xbf16> to vector<1x8x4xbf16>
    %262 = vector.shape_cast %261 : vector<1x8x4xbf16> to vector<8x4xbf16>
    %263 = vector.extract_strided_slice %210 {offsets = [3, 0, 0], sizes = [1, 4, 80], strides = [1, 1, 1]} : vector<4x4x100xbf16> to vector<1x4x80xbf16>
    %264 = vector.shape_cast %263 : vector<1x4x80xbf16> to vector<4x80xbf16>
    %cst_95 = arith.constant dense<0.000000e+00> : vector<8x80xf32>
    %265 = tpu.matmul %262, %264, %cst_95 {dimension_numbers = #tpu.dot_dimension_numbers<[1], [0], [0], [1], [0, 0, 1, 1], [], []>} : vector<8x4xbf16>, vector<4x80xbf16>, vector<8x80xf32> -> vector<8x80xf32>
    %266 = arith.addf %254, %265 : vector<8x80xf32>
    %267 = vector.extract_strided_slice %3 {offsets = [4, 0, 0], sizes = [1, 8, 4], strides = [1, 1, 1]} : vector<9x8x4xbf16> to vector<1x8x4xbf16>
    %268 = vector.shape_cast %267 : vector<1x8x4xbf16> to vector<8x4xbf16>
    %269 = vector.extract_strided_slice %200 {offsets = [3, 0, 0], sizes = [1, 4, 80], strides = [1, 1, 1]} : vector<4x4x100xbf16> to vector<1x4x80xbf16>
    %270 = vector.shape_cast %269 : vector<1x4x80xbf16> to vector<4x80xbf16>
    %cst_96 = arith.constant dense<0.000000e+00> : vector<8x80xf32>
    %271 = tpu.matmul %268, %270, %cst_96 {dimension_numbers = #tpu.dot_dimension_numbers<[1], [0], [0], [1], [0, 0, 1, 1], [], []>} : vector<8x4xbf16>, vector<4x80xbf16>, vector<8x80xf32> -> vector<8x80xf32>
    %272 = arith.addf %260, %271 : vector<8x80xf32>
    %273 = vector.extract_strided_slice %2 {offsets = [5, 0, 0], sizes = [1, 8, 4], strides = [1, 1, 1]} : vector<9x8x4xbf16> to vector<1x8x4xbf16>
    %274 = vector.shape_cast %273 : vector<1x8x4xbf16> to vector<8x4xbf16>
    %275 = vector.extract_strided_slice %210 {offsets = [2, 0, 1], sizes = [1, 4, 80], strides = [1, 1, 1]} : vector<4x4x100xbf16> to vector<1x4x80xbf16>
    %276 = vector.shape_cast %275 : vector<1x4x80xbf16> to vector<4x80xbf16>
    %cst_97 = arith.constant dense<0.000000e+00> : vector<8x80xf32>
    %277 = tpu.matmul %274, %276, %cst_97 {dimension_numbers = #tpu.dot_dimension_numbers<[1], [0], [0], [1], [0, 0, 1, 1], [], []>} : vector<8x4xbf16>, vector<4x80xbf16>, vector<8x80xf32> -> vector<8x80xf32>
    %278 = arith.addf %266, %277 : vector<8x80xf32>
    %279 = vector.extract_strided_slice %3 {offsets = [5, 0, 0], sizes = [1, 8, 4], strides = [1, 1, 1]} : vector<9x8x4xbf16> to vector<1x8x4xbf16>
    %280 = vector.shape_cast %279 : vector<1x8x4xbf16> to vector<8x4xbf16>
    %281 = vector.extract_strided_slice %200 {offsets = [2, 0, 1], sizes = [1, 4, 80], strides = [1, 1, 1]} : vector<4x4x100xbf16> to vector<1x4x80xbf16>
    %282 = vector.shape_cast %281 : vector<1x4x80xbf16> to vector<4x80xbf16>
    %cst_98 = arith.constant dense<0.000000e+00> : vector<8x80xf32>
    %283 = tpu.matmul %280, %282, %cst_98 {dimension_numbers = #tpu.dot_dimension_numbers<[1], [0], [0], [1], [0, 0, 1, 1], [], []>} : vector<8x4xbf16>, vector<4x80xbf16>, vector<8x80xf32> -> vector<8x80xf32>
    %284 = arith.addf %272, %283 : vector<8x80xf32>
    %285 = vector.extract_strided_slice %2 {offsets = [6, 0, 0], sizes = [1, 8, 4], strides = [1, 1, 1]} : vector<9x8x4xbf16> to vector<1x8x4xbf16>
    %286 = vector.shape_cast %285 : vector<1x8x4xbf16> to vector<8x4xbf16>
    %287 = vector.extract_strided_slice %210 {offsets = [0, 0, 10], sizes = [1, 4, 80], strides = [1, 1, 1]} : vector<4x4x100xbf16> to vector<1x4x80xbf16>
    %288 = vector.shape_cast %287 : vector<1x4x80xbf16> to vector<4x80xbf16>
    %cst_99 = arith.constant dense<0.000000e+00> : vector<8x80xf32>
    %289 = tpu.matmul %286, %288, %cst_99 {dimension_numbers = #tpu.dot_dimension_numbers<[1], [0], [0], [1], [0, 0, 1, 1], [], []>} : vector<8x4xbf16>, vector<4x80xbf16>, vector<8x80xf32> -> vector<8x80xf32>
    %290 = arith.addf %278, %289 : vector<8x80xf32>
    %291 = vector.extract_strided_slice %3 {offsets = [6, 0, 0], sizes = [1, 8, 4], strides = [1, 1, 1]} : vector<9x8x4xbf16> to vector<1x8x4xbf16>
    %292 = vector.shape_cast %291 : vector<1x8x4xbf16> to vector<8x4xbf16>
    %293 = vector.extract_strided_slice %200 {offsets = [0, 0, 10], sizes = [1, 4, 80], strides = [1, 1, 1]} : vector<4x4x100xbf16> to vector<1x4x80xbf16>
    %294 = vector.shape_cast %293 : vector<1x4x80xbf16> to vector<4x80xbf16>
    %cst_100 = arith.constant dense<0.000000e+00> : vector<8x80xf32>
    %295 = tpu.matmul %292, %294, %cst_100 {dimension_numbers = #tpu.dot_dimension_numbers<[1], [0], [0], [1], [0, 0, 1, 1], [], []>} : vector<8x4xbf16>, vector<4x80xbf16>, vector<8x80xf32> -> vector<8x80xf32>
    %296 = arith.addf %284, %295 : vector<8x80xf32>
    %297 = vector.extract_strided_slice %2 {offsets = [7, 0, 0], sizes = [1, 8, 4], strides = [1, 1, 1]} : vector<9x8x4xbf16> to vector<1x8x4xbf16>
    %298 = vector.shape_cast %297 : vector<1x8x4xbf16> to vector<8x4xbf16>
    %299 = vector.extract_strided_slice %210 {offsets = [1, 0, 10], sizes = [1, 4, 80], strides = [1, 1, 1]} : vector<4x4x100xbf16> to vector<1x4x80xbf16>
    %300 = vector.shape_cast %299 : vector<1x4x80xbf16> to vector<4x80xbf16>
    %cst_101 = arith.constant dense<0.000000e+00> : vector<8x80xf32>
    %301 = tpu.matmul %298, %300, %cst_101 {dimension_numbers = #tpu.dot_dimension_numbers<[1], [0], [0], [1], [0, 0, 1, 1], [], []>} : vector<8x4xbf16>, vector<4x80xbf16>, vector<8x80xf32> -> vector<8x80xf32>
    %302 = arith.addf %290, %301 : vector<8x80xf32>
    %303 = vector.extract_strided_slice %3 {offsets = [7, 0, 0], sizes = [1, 8, 4], strides = [1, 1, 1]} : vector<9x8x4xbf16> to vector<1x8x4xbf16>
    %304 = vector.shape_cast %303 : vector<1x8x4xbf16> to vector<8x4xbf16>
    %305 = vector.extract_strided_slice %200 {offsets = [1, 0, 10], sizes = [1, 4, 80], strides = [1, 1, 1]} : vector<4x4x100xbf16> to vector<1x4x80xbf16>
    %306 = vector.shape_cast %305 : vector<1x4x80xbf16> to vector<4x80xbf16>
    %cst_102 = arith.constant dense<0.000000e+00> : vector<8x80xf32>
    %307 = tpu.matmul %304, %306, %cst_102 {dimension_numbers = #tpu.dot_dimension_numbers<[1], [0], [0], [1], [0, 0, 1, 1], [], []>} : vector<8x4xbf16>, vector<4x80xbf16>, vector<8x80xf32> -> vector<8x80xf32>
    %308 = arith.addf %296, %307 : vector<8x80xf32>
    %309 = vector.extract_strided_slice %2 {offsets = [8, 0, 0], sizes = [1, 8, 4], strides = [1, 1, 1]} : vector<9x8x4xbf16> to vector<1x8x4xbf16>
    %310 = vector.shape_cast %309 : vector<1x8x4xbf16> to vector<8x4xbf16>
    %311 = vector.extract_strided_slice %210 {offsets = [0, 0, 11], sizes = [1, 4, 80], strides = [1, 1, 1]} : vector<4x4x100xbf16> to vector<1x4x80xbf16>
    %312 = vector.shape_cast %311 : vector<1x4x80xbf16> to vector<4x80xbf16>
    %cst_103 = arith.constant dense<0.000000e+00> : vector<8x80xf32>
    %313 = tpu.matmul %310, %312, %cst_103 {dimension_numbers = #tpu.dot_dimension_numbers<[1], [0], [0], [1], [0, 0, 1, 1], [], []>} : vector<8x4xbf16>, vector<4x80xbf16>, vector<8x80xf32> -> vector<8x80xf32>
    %314 = arith.addf %302, %313 : vector<8x80xf32>
    %315 = vector.extract_strided_slice %3 {offsets = [8, 0, 0], sizes = [1, 8, 4], strides = [1, 1, 1]} : vector<9x8x4xbf16> to vector<1x8x4xbf16>
    %316 = vector.shape_cast %315 : vector<1x8x4xbf16> to vector<8x4xbf16>
    %317 = vector.extract_strided_slice %200 {offsets = [0, 0, 11], sizes = [1, 4, 80], strides = [1, 1, 1]} : vector<4x4x100xbf16> to vector<1x4x80xbf16>
    %318 = vector.shape_cast %317 : vector<1x4x80xbf16> to vector<4x80xbf16>
    %cst_104 = arith.constant dense<0.000000e+00> : vector<8x80xf32>
    %319 = tpu.matmul %316, %318, %cst_104 {dimension_numbers = #tpu.dot_dimension_numbers<[1], [0], [0], [1], [0, 0, 1, 1], [], []>} : vector<8x4xbf16>, vector<4x80xbf16>, vector<8x80xf32> -> vector<8x80xf32>
    %320 = arith.addf %308, %319 : vector<8x80xf32>
    %c0_105 = arith.constant 0 : index
    %c0_106 = arith.constant 0 : index
    %321 = vector.load %arg9[%c0_105, %c0_106] : memref<8x1xf32, #tpu.memory_space<vmem>>, vector<8x1xf32>
    %322 = vector.broadcast %321 : vector<8x1xf32> to vector<8x80xf32>
    %323 = arith.mulf %314, %322 : vector<8x80xf32>
    %c0_107 = arith.constant 0 : index
    %c0_108 = arith.constant 0 : index
    %324 = vector.load %arg10[%c0_107, %c0_108] : memref<8x1xf32, #tpu.memory_space<vmem>>, vector<8x1xf32>
    %325 = vector.broadcast %324 : vector<8x1xf32> to vector<8x80xf32>
    %326 = arith.addf %323, %325 : vector<8x80xf32>
    %cst_109 = arith.constant 0.000000e+00 : f32
    %327 = vector.broadcast %cst_109 : f32 to vector<8x80xf32>
    %328 = arith.maximumf %326, %327 : vector<8x80xf32>
    %329 = vector.broadcast %6 : vector<1x80xf32> to vector<8x80xf32>
    %330 = arith.mulf %328, %329 : vector<8x80xf32>
    %331 = arith.truncf %330 : vector<8x80xf32> to vector<8x80xbf16>
    %c0_110 = arith.constant 0 : index
    %c11_111 = arith.constant 11 : index
    %332 = vector.load %arg14[%c0_110, %c11_111] : memref<8x110xbf16, #tpu.memory_space<vmem>>, vector<8x80xbf16>
    tpu.vector_store %arg14[%c0_110, %c11_111], %331 {strides = array<i32>} : memref<8x110xbf16, #tpu.memory_space<vmem>>, vector<8x80xbf16>,
    %cst_112 = arith.constant 0.000000e+00 : f32
    %333 = vector.broadcast %cst_112 : f32 to vector<8x80xf32>
    %334 = vector.extract_strided_slice %4 {offsets = [0, 0, 0], sizes = [1, 8, 8], strides = [1, 1, 1]} : vector<9x8x8xbf16> to vector<1x8x8xbf16>
    %335 = vector.shape_cast %334 : vector<1x8x8xbf16> to vector<8x8xbf16>
    %c0_113 = arith.constant 0 : index
    %c0_114 = arith.constant 0 : index
    %336 = vector.load %arg14[%c0_113, %c0_114] : memref<8x110xbf16, #tpu.memory_space<vmem>>, vector<8x80xbf16>
    %cst_115 = arith.constant dense<0.000000e+00> : vector<8x80xf32>
    %337 = tpu.matmul %335, %336, %cst_115 {dimension_numbers = #tpu.dot_dimension_numbers<[1], [0], [0], [1], [0, 0, 1, 1], [], []>} : vector<8x8xbf16>, vector<8x80xbf16>, vector<8x80xf32> -> vector<8x80xf32>
    %338 = arith.addf %333, %337 : vector<8x80xf32>
    %339 = vector.extract_strided_slice %4 {offsets = [1, 0, 0], sizes = [1, 8, 8], strides = [1, 1, 1]} : vector<9x8x8xbf16> to vector<1x8x8xbf16>
    %340 = vector.shape_cast %339 : vector<1x8x8xbf16> to vector<8x8xbf16>
    %c0_116 = arith.constant 0 : index
    %c1_117 = arith.constant 1 : index
    %341 = vector.load %arg14[%c0_116, %c1_117] : memref<8x110xbf16, #tpu.memory_space<vmem>>, vector<8x80xbf16>
    %cst_118 = arith.constant dense<0.000000e+00> : vector<8x80xf32>
    %342 = tpu.matmul %340, %341, %cst_118 {dimension_numbers = #tpu.dot_dimension_numbers<[1], [0], [0], [1], [0, 0, 1, 1], [], []>} : vector<8x8xbf16>, vector<8x80xbf16>, vector<8x80xf32> -> vector<8x80xf32>
    %343 = arith.addf %338, %342 : vector<8x80xf32>
    %344 = vector.extract_strided_slice %4 {offsets = [2, 0, 0], sizes = [1, 8, 8], strides = [1, 1, 1]} : vector<9x8x8xbf16> to vector<1x8x8xbf16>
    %345 = vector.shape_cast %344 : vector<1x8x8xbf16> to vector<8x8xbf16>
    %c0_119 = arith.constant 0 : index
    %c2_120 = arith.constant 2 : index
    %346 = vector.load %arg14[%c0_119, %c2_120] : memref<8x110xbf16, #tpu.memory_space<vmem>>, vector<8x80xbf16>
    %cst_121 = arith.constant dense<0.000000e+00> : vector<8x80xf32>
    %347 = tpu.matmul %345, %346, %cst_121 {dimension_numbers = #tpu.dot_dimension_numbers<[1], [0], [0], [1], [0, 0, 1, 1], [], []>} : vector<8x8xbf16>, vector<8x80xbf16>, vector<8x80xf32> -> vector<8x80xf32>
    %348 = arith.addf %343, %347 : vector<8x80xf32>
    %349 = vector.extract_strided_slice %4 {offsets = [3, 0, 0], sizes = [1, 8, 8], strides = [1, 1, 1]} : vector<9x8x8xbf16> to vector<1x8x8xbf16>
    %350 = vector.shape_cast %349 : vector<1x8x8xbf16> to vector<8x8xbf16>
    %c0_122 = arith.constant 0 : index
    %c10_123 = arith.constant 10 : index
    %351 = vector.load %arg14[%c0_122, %c10_123] : memref<8x110xbf16, #tpu.memory_space<vmem>>, vector<8x80xbf16>
    %cst_124 = arith.constant dense<0.000000e+00> : vector<8x80xf32>
    %352 = tpu.matmul %350, %351, %cst_124 {dimension_numbers = #tpu.dot_dimension_numbers<[1], [0], [0], [1], [0, 0, 1, 1], [], []>} : vector<8x8xbf16>, vector<8x80xbf16>, vector<8x80xf32> -> vector<8x80xf32>
    %353 = arith.addf %348, %352 : vector<8x80xf32>
    %354 = vector.extract_strided_slice %4 {offsets = [4, 0, 0], sizes = [1, 8, 8], strides = [1, 1, 1]} : vector<9x8x8xbf16> to vector<1x8x8xbf16>
    %355 = vector.shape_cast %354 : vector<1x8x8xbf16> to vector<8x8xbf16>
    %c0_125 = arith.constant 0 : index
    %c11_126 = arith.constant 11 : index
    %356 = vector.load %arg14[%c0_125, %c11_126] : memref<8x110xbf16, #tpu.memory_space<vmem>>, vector<8x80xbf16>
    %cst_127 = arith.constant dense<0.000000e+00> : vector<8x80xf32>
    %357 = tpu.matmul %355, %356, %cst_127 {dimension_numbers = #tpu.dot_dimension_numbers<[1], [0], [0], [1], [0, 0, 1, 1], [], []>} : vector<8x8xbf16>, vector<8x80xbf16>, vector<8x80xf32> -> vector<8x80xf32>
    %358 = arith.addf %353, %357 : vector<8x80xf32>
    %359 = vector.extract_strided_slice %4 {offsets = [5, 0, 0], sizes = [1, 8, 8], strides = [1, 1, 1]} : vector<9x8x8xbf16> to vector<1x8x8xbf16>
    %360 = vector.shape_cast %359 : vector<1x8x8xbf16> to vector<8x8xbf16>
    %c0_128 = arith.constant 0 : index
    %c12_129 = arith.constant 12 : index
    %361 = vector.load %arg14[%c0_128, %c12_129] : memref<8x110xbf16, #tpu.memory_space<vmem>>, vector<8x80xbf16>
    %cst_130 = arith.constant dense<0.000000e+00> : vector<8x80xf32>
    %362 = tpu.matmul %360, %361, %cst_130 {dimension_numbers = #tpu.dot_dimension_numbers<[1], [0], [0], [1], [0, 0, 1, 1], [], []>} : vector<8x8xbf16>, vector<8x80xbf16>, vector<8x80xf32> -> vector<8x80xf32>
    %363 = arith.addf %358, %362 : vector<8x80xf32>
    %364 = vector.extract_strided_slice %4 {offsets = [6, 0, 0], sizes = [1, 8, 8], strides = [1, 1, 1]} : vector<9x8x8xbf16> to vector<1x8x8xbf16>
    %365 = vector.shape_cast %364 : vector<1x8x8xbf16> to vector<8x8xbf16>
    %c0_131 = arith.constant 0 : index
    %c20_132 = arith.constant 20 : index
    %366 = vector.load %arg14[%c0_131, %c20_132] : memref<8x110xbf16, #tpu.memory_space<vmem>>, vector<8x80xbf16>
    %cst_133 = arith.constant dense<0.000000e+00> : vector<8x80xf32>
    %367 = tpu.matmul %365, %366, %cst_133 {dimension_numbers = #tpu.dot_dimension_numbers<[1], [0], [0], [1], [0, 0, 1, 1], [], []>} : vector<8x8xbf16>, vector<8x80xbf16>, vector<8x80xf32> -> vector<8x80xf32>
    %368 = arith.addf %363, %367 : vector<8x80xf32>
    %369 = vector.extract_strided_slice %4 {offsets = [7, 0, 0], sizes = [1, 8, 8], strides = [1, 1, 1]} : vector<9x8x8xbf16> to vector<1x8x8xbf16>
    %370 = vector.shape_cast %369 : vector<1x8x8xbf16> to vector<8x8xbf16>
    %c0_134 = arith.constant 0 : index
    %c21_135 = arith.constant 21 : index
    %371 = vector.load %arg14[%c0_134, %c21_135] : memref<8x110xbf16, #tpu.memory_space<vmem>>, vector<8x80xbf16>
    %cst_136 = arith.constant dense<0.000000e+00> : vector<8x80xf32>
    %372 = tpu.matmul %370, %371, %cst_136 {dimension_numbers = #tpu.dot_dimension_numbers<[1], [0], [0], [1], [0, 0, 1, 1], [], []>} : vector<8x8xbf16>, vector<8x80xbf16>, vector<8x80xf32> -> vector<8x80xf32>
    %373 = arith.addf %368, %372 : vector<8x80xf32>
    %374 = vector.extract_strided_slice %4 {offsets = [8, 0, 0], sizes = [1, 8, 8], strides = [1, 1, 1]} : vector<9x8x8xbf16> to vector<1x8x8xbf16>
    %375 = vector.shape_cast %374 : vector<1x8x8xbf16> to vector<8x8xbf16>
    %c0_137 = arith.constant 0 : index
    %c22_138 = arith.constant 22 : index
    %376 = vector.load %arg14[%c0_137, %c22_138] : memref<8x110xbf16, #tpu.memory_space<vmem>>, vector<8x80xbf16>
    %cst_139 = arith.constant dense<0.000000e+00> : vector<8x80xf32>
    %377 = tpu.matmul %375, %376, %cst_139 {dimension_numbers = #tpu.dot_dimension_numbers<[1], [0], [0], [1], [0, 0, 1, 1], [], []>} : vector<8x8xbf16>, vector<8x80xbf16>, vector<8x80xf32> -> vector<8x80xf32>
    %378 = arith.addf %373, %377 : vector<8x80xf32>
    %c0_140 = arith.constant 0 : index
    %c0_141 = arith.constant 0 : index
    %379 = vector.load %arg11[%c0_140, %c0_141] : memref<8x1xf32, #tpu.memory_space<vmem>>, vector<8x1xf32>
    %380 = vector.broadcast %379 : vector<8x1xf32> to vector<8x80xf32>
    %381 = arith.addf %378, %380 : vector<8x80xf32>
    %382 = arith.addf %381, %320 : vector<8x80xf32>
    %c0_142 = arith.constant 0 : index
    %c0_143 = arith.constant 0 : index
    %383 = vector.load %arg12[%c0_142, %c0_143] : memref<8x1xf32, #tpu.memory_space<vmem>>, vector<8x1xf32>
    %384 = vector.broadcast %383 : vector<8x1xf32> to vector<8x80xf32>
    %385 = arith.addf %382, %384 : vector<8x80xf32>
    %c1_144 = arith.constant 1 : index
    %c0_145 = arith.constant 0 : index
    %c0_146 = arith.constant 0 : index
    %386 = vector.load %arg13[%c1_144, %c0_145, %c0_146] : memref<2x8x80xf32, #tpu.memory_space<vmem>>, vector<1x8x80xf32>
    %387 = vector.shape_cast %386 : vector<1x8x80xf32> to vector<8x80xf32>
    %388 = vector.shape_cast %385 : vector<8x80xf32> to vector<1x8x80xf32>
    tpu.vector_store %arg13[%c1_144, %c0_145, %c0_146], %388 {strides = array<i32>} : memref<2x8x80xf32, #tpu.memory_space<vmem>>, vector<1x8x80xf32>,
    return
  }
  func.func @transform_0(%arg0: i32) -> (i32, i32, i32, i32) {
    %c0_i32 = arith.constant 0 : i32
    %c0_i32_0 = arith.constant 0 : i32
    %c0_i32_1 = arith.constant 0 : i32
    %c0_i32_2 = arith.constant 0 : i32
    %c0_i32_3 = arith.constant 0 : i32
    return %c0_i32, %c0_i32_0, %c0_i32_1, %c0_i32_2 : i32, i32, i32, i32
  }
  func.func @transform_1(%arg0: i32) -> (i32, i32, i32) {
    %c0_i32 = arith.constant 0 : i32
    %c0_i32_0 = arith.constant 0 : i32
    %c0_i32_1 = arith.constant 0 : i32
    %c0_i32_2 = arith.constant 0 : i32
    return %c0_i32, %c0_i32_0, %c0_i32_1 : i32, i32, i32
  }
  func.func @transform_2(%arg0: i32) -> (i32, i32) {
    %c0_i32 = arith.constant 0 : i32
    %c0_i32_0 = arith.constant 0 : i32
    %c0_i32_1 = arith.constant 0 : i32
    return %c0_i32, %c0_i32_0 : i32, i32
  }
  func.func @transform_3(%arg0: i32) -> (i32, i32, i32) {
    %c0_i32 = arith.constant 0 : i32
    %c0_i32_0 = arith.constant 0 : i32
    %c0_i32_1 = arith.constant 0 : i32
    %c0_i32_2 = arith.constant 0 : i32
    return %c0_i32, %c0_i32_0, %c0_i32_1 : i32, i32, i32
  }
  func.func @transform_4(%arg0: i32) -> (i32, i32, i32) {
    %c0_i32 = arith.constant 0 : i32
    %c0_i32_0 = arith.constant 0 : i32
    %c0_i32_1 = arith.constant 0 : i32
    %c0_i32_2 = arith.constant 0 : i32
    return %c0_i32, %c0_i32_0, %c0_i32_1 : i32, i32, i32
  }
  func.func @transform_5(%arg0: i32) -> (i32, i32, i32) {
    %c0_i32 = arith.constant 0 : i32
    %c0_i32_0 = arith.constant 0 : i32
    %c0_i32_1 = arith.constant 0 : i32
    %c0_i32_2 = arith.constant 0 : i32
    return %c0_i32, %c0_i32_0, %c0_i32_1 : i32, i32, i32
  }
  func.func @transform_6(%arg0: i32) -> (i32, i32, i32) {
    %c0_i32 = arith.constant 0 : i32
    %c0_i32_0 = arith.constant 0 : i32
    %c0_i32_1 = arith.constant 0 : i32
    %c0_i32_2 = arith.constant 0 : i32
    return %c0_i32, %c0_i32_0, %c0_i32_1 : i32, i32, i32
  }
  func.func @transform_7(%arg0: i32) -> (i32, i32, i32) {
    %c0_i32 = arith.constant 0 : i32
    %c0_i32_0 = arith.constant 0 : i32
    %c0_i32_1 = arith.constant 0 : i32
    %c0_i32_2 = arith.constant 0 : i32
    return %c0_i32, %c0_i32_0, %c0_i32_1 : i32, i32, i32
  }
  func.func @transform_8(%arg0: i32) -> (i32, i32) {
    %c0_i32 = arith.constant 0 : i32
    %c0_i32_0 = arith.constant 0 : i32
    %c0_i32_1 = arith.constant 0 : i32
    return %c0_i32, %c0_i32_0 : i32, i32
  }
  func.func @transform_9(%arg0: i32) -> (i32, i32) {
    %c0_i32 = arith.constant 0 : i32
    %c0_i32_0 = arith.constant 0 : i32
    %c0_i32_1 = arith.constant 0 : i32
    return %c0_i32, %c0_i32_0 : i32, i32
  }
  func.func @transform_10(%arg0: i32) -> (i32, i32) {
    %c0_i32 = arith.constant 0 : i32
    %c0_i32_0 = arith.constant 0 : i32
    %c0_i32_1 = arith.constant 0 : i32
    return %c0_i32, %c0_i32_0 : i32, i32
  }
  func.func @transform_11(%arg0: i32) -> (i32, i32) {
    %c0_i32 = arith.constant 0 : i32
    %c0_i32_0 = arith.constant 0 : i32
    %c0_i32_1 = arith.constant 0 : i32
    return %c0_i32, %c0_i32_0 : i32, i32
  }
  func.func @transform_12(%arg0: i32) -> (i32, i32, i32) {
    %c0_i32 = arith.constant 0 : i32
    %c0_i32_0 = arith.constant 0 : i32
    %c0_i32_1 = arith.constant 0 : i32
    %c0_i32_2 = arith.constant 0 : i32
    return %c0_i32, %c0_i32_0, %c0_i32_1 : i32, i32, i32
  }
}

</mosaic_0001>

<llo_original>
// kernel: residual_conv_forward.1
$region0: #{residual_conv_forward.1}
  #allocation0 [shape = 'u32[]', space=smem, size = 0x4, offset = 0x4, fixed_abs, tag = 'smem constant byte address 0x4 - core index']
  #allocation1 [shape = 'u32[144,128]{1,0:T(1,128)}', space=vmem, size = 0x12000, scoped, tag = 'internal scratch']
  #allocation2 [shape = 'bf16[8,110]{1,0:T(8,128)(2,1)}', space=vmem, size = 0x800, scoped, tag = 'scratch operand']
  %s0 = inlined_call_operand.vmem [shape: bf16[2,4,4,100], index: 0, kind: input, shape index: {}]
  %s1 = inlined_call_operand.vmem [shape: f32[4,1,100], index: 1, kind: input, shape index: {}]
  %s2 = inlined_call_operand.vmem [shape: f32[1,80], index: 2, kind: input, shape index: {}]
  %s3 = inlined_call_operand.vmem [shape: bf16[9,8,4], index: 3, kind: input, shape index: {}]
  %s4 = inlined_call_operand.vmem [shape: bf16[9,8,4], index: 4, kind: input, shape index: {}]
  %s5 = inlined_call_operand.vmem [shape: bf16[9,8,8], index: 5, kind: input, shape index: {}]
  %s6 = inlined_call_operand.vmem [shape: f32[1,4,1], index: 6, kind: input, shape index: {}]
  %s7 = inlined_call_operand.vmem [shape: f32[1,4,1], index: 7, kind: input, shape index: {}]
  %s8 = inlined_call_operand.vmem [shape: f32[8,1], index: 8, kind: input, shape index: {}]
  %s9 = inlined_call_operand.vmem [shape: f32[8,1], index: 9, kind: input, shape index: {}]
  %s10 = inlined_call_operand.vmem [shape: f32[8,1], index: 10, kind: input, shape index: {}]
  %s11 = inlined_call_operand.vmem [shape: f32[8,1], index: 11, kind: input, shape index: {}]
  %s12 = inlined_call_operand.vmem [shape: f32[2,8,80], index: 12, kind: output, shape index: {}]
  %s13 = sld [smem:[#allocation0]]
  $region58: #{residual_conv_forward.1} parent=0
    _
  %s15 = ssub.s32 1, %s13
  %s16 = scalar_select 0, %s15, %s13
  // Predicated region
  $region2: #{residual_conv_forward.1} parent=0 // pred_check
    _
  $region3: #{residual_conv_forward.1} parent=0 // pred_check_branch
    %18 = sbr.rel (0) target = $region5
  $region4: #{residual_conv_forward.1} parent=0 // pred_region
    _
  $region5: #{residual_conv_forward.1} parent=0 // pred_fallthru
    _
  // Predicated region
  $region6: #{residual_conv_forward.1} parent=0 // pred_check
    _
  $region7: #{residual_conv_forward.1} parent=0 // pred_check_branch
    %20 = sbr.rel (0) target = $region9
  $region8: #{residual_conv_forward.1} parent=0 // pred_region
    _
  $region9: #{residual_conv_forward.1} parent=0 // pred_fallthru
    _
  // Predicated region
  $region10: #{residual_conv_forward.1} parent=0 // pred_check
    _
  $region11: #{residual_conv_forward.1} parent=0 // pred_check_branch
    %22 = sbr.rel (0) target = $region13
  $region12: #{residual_conv_forward.1} parent=0 // pred_region
    _
  $region13: #{residual_conv_forward.1} parent=0 // pred_fallthru
    _
  // Predicated region
  $region14: #{residual_conv_forward.1} parent=0 // pred_check
    _
  $region15: #{residual_conv_forward.1} parent=0 // pred_check_branch
    %24 = sbr.rel (0) target = $region17
  $region16: #{residual_conv_forward.1} parent=0 // pred_region
    _
  $region17: #{residual_conv_forward.1} parent=0 // pred_fallthru
    _
  // Predicated region
  $region18: #{residual_conv_forward.1} parent=0 // pred_check
    _
  $region19: #{residual_conv_forward.1} parent=0 // pred_check_branch
    %26 = sbr.rel (0) target = $region21
  $region20: #{residual_conv_forward.1} parent=0 // pred_region
    _
  $region21: #{residual_conv_forward.1} parent=0 // pred_fallthru
    _
  // Predicated region
  $region22: #{residual_conv_forward.1} parent=0 // pred_check
    _
  $region23: #{residual_conv_forward.1} parent=0 // pred_check_branch
    %28 = sbr.rel (0) target = $region25
  $region24: #{residual_conv_forward.1} parent=0 // pred_region
    _
  $region25: #{residual_conv_forward.1} parent=0 // pred_fallthru
    _
  // Predicated region
  $region26: #{residual_conv_forward.1} parent=0 // pred_check
    _
  $region27: #{residual_conv_forward.1} parent=0 // pred_check_branch
    %30 = sbr.rel (0) target = $region29
  $region28: #{residual_conv_forward.1} parent=0 // pred_region
    _
  $region29: #{residual_conv_forward.1} parent=0 // pred_fallthru
    _
  // Predicated region
  $region30: #{residual_conv_forward.1} parent=0 // pred_check
    _
  $region31: #{residual_conv_forward.1} parent=0 // pred_check_branch
    %32 = sbr.rel (0) target = $region33
  $region32: #{residual_conv_forward.1} parent=0 // pred_region
    _
  $region33: #{residual_conv_forward.1} parent=0 // pred_fallthru
    _
  // Predicated region
  $region34: #{residual_conv_forward.1} parent=0 // pred_check
    _
  $region35: #{residual_conv_forward.1} parent=0 // pred_check_branch
    %34 = sbr.rel (0) target = $region37
  $region36: #{residual_conv_forward.1} parent=0 // pred_region
    _
  $region37: #{residual_conv_forward.1} parent=0 // pred_fallthru
    _
  // Predicated region
  $region38: #{residual_conv_forward.1} parent=0 // pred_check
    _
  $region39: #{residual_conv_forward.1} parent=0 // pred_check_branch
    %36 = sbr.rel (0) target = $region41
  $region40: #{residual_conv_forward.1} parent=0 // pred_region
    _
  $region41: #{residual_conv_forward.1} parent=0 // pred_fallthru
    _
  // Predicated region
  $region42: #{residual_conv_forward.1} parent=0 // pred_check
    _
  $region43: #{residual_conv_forward.1} parent=0 // pred_check_branch
    %38 = sbr.rel (0) target = $region45
  $region44: #{residual_conv_forward.1} parent=0 // pred_region
    _
  $region45: #{residual_conv_forward.1} parent=0 // pred_fallthru
    _
  // Predicated region
  $region46: #{residual_conv_forward.1} parent=0 // pred_check
    _
  $region47: #{residual_conv_forward.1} parent=0 // pred_check_branch
    %40 = sbr.rel (0) target = $region49
  $region48: #{residual_conv_forward.1} parent=0 // pred_region
    _
  $region49: #{residual_conv_forward.1} parent=0 // pred_fallthru
    _
  %vm42 = vcmask 896000
  %43 = vst.msk [vmem:[#allocation2] sm:$0xf] %vm42, 0
  %v44 = vld [vmem:[%s3] sm:$0xf]
  %v45 = vld [vmem:[%s3 + $0x4] sm:$0xf]
  %v46 = vld [vmem:[%s3 + $0x8] sm:$0xf]
  %v47 = vld [vmem:[%s3 + $0xc] sm:$0xf]
  %v48 = vld [vmem:[%s3 + $0x10] sm:$0xf]
  %v49 = vld [vmem:[%s3 + $0x14] sm:$0xf]
  %v50 = vld [vmem:[%s3 + $0x18] sm:$0xf]
  %v51 = vld [vmem:[%s3 + $0x1c] sm:$0xf]
  %v52 = vld [vmem:[%s3 + $0x20] sm:$0xf]
  %v53 = vld [vmem:[%s4] sm:$0xf]
  %v54 = vld [vmem:[%s4 + $0x4] sm:$0xf]
  %v55 = vld [vmem:[%s4 + $0x8] sm:$0xf]
  %v56 = vld [vmem:[%s4 + $0xc] sm:$0xf]
  %v57 = vld [vmem:[%s4 + $0x10] sm:$0xf]
  %v58 = vld [vmem:[%s4 + $0x14] sm:$0xf]
  %v59 = vld [vmem:[%s4 + $0x18] sm:$0xf]
  %v60 = vld [vmem:[%s4 + $0x1c] sm:$0xf]
  %v61 = vld [vmem:[%s4 + $0x20] sm:$0xf]
  %v62 = vld [vmem:[%s5] sm:$0xf]
  %v63 = vld [vmem:[%s5 + $0x4] sm:$0xf]
  %v64 = vld [vmem:[%s5 + $0x8] sm:$0xf]
  %v65 = vld [vmem:[%s5 + $0xc] sm:$0xf]
  %v66 = vld [vmem:[%s5 + $0x10] sm:$0xf]
  %v67 = vld [vmem:[%s5 + $0x14] sm:$0xf]
  %v68 = vld [vmem:[%s5 + $0x18] sm:$0xf]
  %v69 = vld [vmem:[%s5 + $0x1c] sm:$0xf]
  %v70 = vld [vmem:[%s5 + $0x20] sm:$0xf]
  %v71 = vld [vmem:[%s1] sm:$0x1]
  %v72 = vld [vmem:[%s1 + $0x1] sm:$0x1]
  %v73 = vld [vmem:[%s1 + $0x2] sm:$0x1]
  %v74 = vld [vmem:[%s1 + $0x3] sm:$0x1]
  %v75 = vld [vmem:[%s2] sm:$0x1]
  %v76 = vld [vmem:[%s6] sm:$0xf]
  %v77 = vld [vmem:[%s7] sm:$0xf]
  %v78 = vld [vmem:[%s0] sm:$0x3]
  %v79 = vld [vmem:[%s0 + $0x2] sm:$0x3]
  %v80 = vld [vmem:[%s0 + $0x4] sm:$0x3]
  %v81 = vld [vmem:[%s0 + $0x6] sm:$0x3]
  %v82 = vunpack.c.l.bf16 %v78
  %v83 = vunpack.c.l.bf16 %v79
  %v84 = vunpack.c.l.bf16 %v80
  %v85 = vunpack.c.l.bf16 %v81
  %87 = vset.pattern.permute.xlu0 0
  %88 = vperm.xlu0 %87, %v76
  %v89 = vpop.permute.xlu0 %88
  %v91 = vmul.f32 %v82, %v89
  %v92 = vmul.f32 %v83, %v89
  %v93 = vmul.f32 %v84, %v89
  %v94 = vmul.f32 %v85, %v89
  %96 = vset.pattern.permute.xlu0 0
  %97 = vperm.xlu0 %96, %v77
  %v98 = vpop.permute.xlu0 %97
  %v100 = vadd.f32 %v91, %v98
  %v101 = vadd.f32 %v92, %v98
  %v102 = vadd.f32 %v93, %v98
  %v103 = vadd.f32 %v94, %v98
  %v104 = vmax.f32 %v100, 0.0
  %v105 = vmax.f32 %v101, 0.0
  %v106 = vmax.f32 %v102, 0.0
  %v107 = vmax.f32 %v103, 0.0
  %v112 = vlaneseq
  %v113 = vshrl.u32 %v112, 7
  %v114 = vsub.s32 0, %v113
  %v115 = vrot.slane %v71, %v114
  %v116 = vlaneseq
  %v117 = vshrl.u32 %v116, 7
  %v118 = vsub.s32 0, %v117
  %v119 = vrot.slane %v72, %v118
  %v120 = vlaneseq
  %v121 = vshrl.u32 %v120, 7
  %v122 = vsub.s32 0, %v121
  %v123 = vrot.slane %v73, %v122
  %v124 = vlaneseq
  %v125 = vshrl.u32 %v124, 7
  %v126 = vsub.s32 0, %v125
  %v127 = vrot.slane %v74, %v126
  %v132 = vmul.f32 %v104, %v115
  %v133 = vmul.f32 %v105, %v119
  %v134 = vmul.f32 %v106, %v123
  %v135 = vmul.f32 %v107, %v127
  %v136 = vpack.c.bf16 %v132, %v132
  %v137 = vpack.c.bf16 %v133, %v133
  %v138 = vpack.c.bf16 %v134, %v134
  %v139 = vpack.c.bf16 %v135, %v135
  %vm140 = vcmask 31744
  %v142 = vsel %vm140, %v45, 0
  %vm144 = vcmask 1041408
  %v146 = vsel %vm144, %v137, 0
  %148 = vmatprep.subr.bf16.mxu0 0
  %149 = vmatpush1.bf16.msra.mxu0 0
  %150 = vmatprep.subr.bf16.mxu0 0
  %151 = vmatpush1.bf16.msra.mxu0 0
  %152 = vmatprep.subr.bf16.mxu0 0
  %153 = vmatpush1.bf16.msra.mxu0 0
  %154 = vmatprep.subr.bf16.mxu0 0
  %155 = vmatpush1.bf16.msra.mxu0 0
  %156 = vmatprep.subr.bf16.mxu0 0
  %157 = vmatpush1.bf16.msra.mxu0 0
  %158 = vmatprep.subr.bf16.mxu0 0
  %159 = vmatpush1.bf16.msra.mxu0 0
  %160 = vmatprep.subr.bf16.mxu0 0
  %161 = vmatpush1.bf16.msra.mxu0 0
  %162 = vmatprep.subr.bf16.mxu0 0
  %163 = vmatpush1.bf16.msra.mxu0 %v146
  %164 = vmatprep.subr.bf16.mxu0 0
  %165 = vmatpush2.bf16.msra.mxu0 0
  %166 = vmatprep.subr.bf16.mxu0 0
  %167 = vmatpush2.bf16.msra.mxu0 0
  %168 = vmatprep.subr.bf16.mxu0 0
  %169 = vmatpush2.bf16.msra.mxu0 0
  %170 = vmatprep.subr.bf16.mxu0 0
  %171 = vmatpush2.bf16.msra.mxu0 0
  %172 = vmatprep.subr.bf16.mxu0 0
  %173 = vmatpush2.bf16.msra.mxu0 0
  %174 = vmatprep.subr.bf16.mxu0 0
  %175 = vmatpush2.bf16.msra.mxu0 0
  %176 = vmatprep.subr.bf16.mxu0 0
  %177 = vmatpush2.bf16.msra.mxu0 0
  %178 = vmatprep.subr.bf16.mxu0 0
  %179 = vmatpush2.bf16.msra.mxu0 0
  %180 = vmatprep.mubr.bf16.mxu0 0
  %181 = vmatmul.mubr.bf16.gmra.mxu0 %v142
  %v182 = vpop.f32.mrf.mxu0
  %v183 = vadd.f32 0.0, %v182
  %v184 = vpop.f32.mrf.mxu0
  %v185 = vpop.f32.mrf.mxu0
  %v186 = vpop.f32.mrf.mxu0
  %187 = vdwg.mxu0
  %v189 = vsel %vm140, %v44, 0
  %v192 = vsel %vm144, %v136, 0
  %194 = vmatprep.subr.bf16.mxu0 0
  %195 = vmatpush1.bf16.msra.mxu0 0
  %196 = vmatprep.subr.bf16.mxu0 0
  %197 = vmatpush1.bf16.msra.mxu0 0
  %198 = vmatprep.subr.bf16.mxu0 0
  %199 = vmatpush1.bf16.msra.mxu0 0
  %200 = vmatprep.subr.bf16.mxu0 0
  %201 = vmatpush1.bf16.msra.mxu0 0
  %202 = vmatprep.subr.bf16.mxu0 0
  %203 = vmatpush1.bf16.msra.mxu0 0
  %204 = vmatprep.subr.bf16.mxu0 0
  %205 = vmatpush1.bf16.msra.mxu0 0
  %206 = vmatprep.subr.bf16.mxu0 0
  %207 = vmatpush1.bf16.msra.mxu0 0
  %208 = vmatprep.subr.bf16.mxu0 0
  %209 = vmatpush1.bf16.msra.mxu0 %v192
  %210 = vmatprep.subr.bf16.mxu0 0
  %211 = vmatpush2.bf16.msra.mxu0 0
  %212 = vmatprep.subr.bf16.mxu0 0
  %213 = vmatpush2.bf16.msra.mxu0 0
  %214 = vmatprep.subr.bf16.mxu0 0
  %215 = vmatpush2.bf16.msra.mxu0 0
  %216 = vmatprep.subr.bf16.mxu0 0
  %217 = vmatpush2.bf16.msra.mxu0 0
  %218 = vmatprep.subr.bf16.mxu0 0
  %219 = vmatpush2.bf16.msra.mxu0 0
  %220 = vmatprep.subr.bf16.mxu0 0
  %221 = vmatpush2.bf16.msra.mxu0 0
  %222 = vmatprep.subr.bf16.mxu0 0
  %223 = vmatpush2.bf16.msra.mxu0 0
  %224 = vmatprep.subr.bf16.mxu0 0
  %225 = vmatpush2.bf16.msra.mxu0 0
  %226 = vmatprep.mubr.bf16.mxu0 0
  %227 = vmatmul.mubr.bf16.gmra.mxu0 %v189
  %v228 = vpop.f32.mrf.mxu0
  %v229 = vadd.f32 %v183, %v228
  %v230 = vpop.f32.mrf.mxu0
  %v231 = vpop.f32.mrf.mxu0
  %v232 = vpop.f32.mrf.mxu0
  %233 = vdwg.mxu0
  %v235 = vsel %vm140, %v54, 0
  %v238 = vsel %vm144, %v79, 0
  %240 = vmatprep.subr.bf16.mxu0 0
  %241 = vmatpush1.bf16.msra.mxu0 0
  %242 = vmatprep.subr.bf16.mxu0 0
  %243 = vmatpush1.bf16.msra.mxu0 0
  %244 = vmatprep.subr.bf16.mxu0 0
  %245 = vmatpush1.bf16.msra.mxu0 0
  %246 = vmatprep.subr.bf16.mxu0 0
  %247 = vmatpush1.bf16.msra.mxu0 0
  %248 = vmatprep.subr.bf16.mxu0 0
  %249 = vmatpush1.bf16.msra.mxu0 0
  %250 = vmatprep.subr.bf16.mxu0 0
  %251 = vmatpush1.bf16.msra.mxu0 0
  %252 = vmatprep.subr.bf16.mxu0 0
  %253 = vmatpush1.bf16.msra.mxu0 0
  %254 = vmatprep.subr.bf16.mxu0 0
  %255 = vmatpush1.bf16.msra.mxu0 %v238
  %256 = vmatprep.subr.bf16.mxu0 0
  %257 = vmatpush2.bf16.msra.mxu0 0
  %258 = vmatprep.subr.bf16.mxu0 0
  %259 = vmatpush2.bf16.msra.mxu0 0
  %260 = vmatprep.subr.bf16.mxu0 0
  %261 = vmatpush2.bf16.msra.mxu0 0
  %262 = vmatprep.subr.bf16.mxu0 0
  %263 = vmatpush2.bf16.msra.mxu0 0
  %264 = vmatprep.subr.bf16.mxu0 0
  %265 = vmatpush2.bf16.msra.mxu0 0
  %266 = vmatprep.subr.bf16.mxu0 0
  %267 = vmatpush2.bf16.msra.mxu0 0
  %268 = vmatprep.subr.bf16.mxu0 0
  %269 = vmatpush2.bf16.msra.mxu0 0
  %270 = vmatprep.subr.bf16.mxu0 0
  %271 = vmatpush2.bf16.msra.mxu0 0
  %272 = vmatprep.mubr.bf16.mxu0 0
  %273 = vmatmul.mubr.bf16.gmra.mxu0 %v235
  %v274 = vpop.f32.mrf.mxu0
  %v275 = vadd.f32 0.0, %v274
  %v276 = vpop.f32.mrf.mxu0
  %v277 = vpop.f32.mrf.mxu0
  %v278 = vpop.f32.mrf.mxu0
  %279 = vdwg.mxu0
  %v281 = vsel %vm140, %v53, 0
  %v284 = vsel %vm144, %v78, 0
  %286 = vmatprep.subr.bf16.mxu0 0
  %287 = vmatpush1.bf16.msra.mxu0 0
  %288 = vmatprep.subr.bf16.mxu0 0
  %289 = vmatpush1.bf16.msra.mxu0 0
  %290 = vmatprep.subr.bf16.mxu0 0
  %291 = vmatpush1.bf16.msra.mxu0 0
  %292 = vmatprep.subr.bf16.mxu0 0
  %293 = vmatpush1.bf16.msra.mxu0 0
  %294 = vmatprep.subr.bf16.mxu0 0
  %295 = vmatpush1.bf16.msra.mxu0 0
  %296 = vmatprep.subr.bf16.mxu0 0
  %297 = vmatpush1.bf16.msra.mxu0 0
  %298 = vmatprep.subr.bf16.mxu0 0
  %299 = vmatpush1.bf16.msra.mxu0 0
  %300 = vmatprep.subr.bf16.mxu0 0
  %301 = vmatpush1.bf16.msra.mxu0 %v284
  %302 = vmatprep.subr.bf16.mxu0 0
  %303 = vmatpush2.bf16.msra.mxu0 0
  %304 = vmatprep.subr.bf16.mxu0 0
  %305 = vmatpush2.bf16.msra.mxu0 0
  %306 = vmatprep.subr.bf16.mxu0 0
  %307 = vmatpush2.bf16.msra.mxu0 0
  %308 = vmatprep.subr.bf16.mxu0 0
  %309 = vmatpush2.bf16.msra.mxu0 0
  %310 = vmatprep.subr.bf16.mxu0 0
  %311 = vmatpush2.bf16.msra.mxu0 0
  %312 = vmatprep.subr.bf16.mxu0 0
  %313 = vmatpush2.bf16.msra.mxu0 0
  %314 = vmatprep.subr.bf16.mxu0 0
  %315 = vmatpush2.bf16.msra.mxu0 0
  %316 = vmatprep.subr.bf16.mxu0 0
  %317 = vmatpush2.bf16.msra.mxu0 0
  %318 = vmatprep.mubr.bf16.mxu0 0
  %319 = vmatmul.mubr.bf16.gmra.mxu0 %v281
  %v320 = vpop.f32.mrf.mxu0
  %v321 = vadd.f32 %v275, %v320
  %v322 = vpop.f32.mrf.mxu0
  %v323 = vpop.f32.mrf.mxu0
  %v324 = vpop.f32.mrf.mxu0
  %325 = vdwg.mxu0
  %327 = vrot.lane.b32.xlu0 %v136, 127
  %v328 = vpop.permute.xlu0 %327
  %v330 = vsel %vm140, %v46, 0
  %v333 = vsel %vm144, %v328, 0
  %335 = vmatprep.subr.bf16.mxu0 0
  %336 = vmatpush1.bf16.msra.mxu0 0
  %337 = vmatprep.subr.bf16.mxu0 0
  %338 = vmatpush1.bf16.msra.mxu0 0
  %339 = vmatprep.subr.bf16.mxu0 0
  %340 = vmatpush1.bf16.msra.mxu0 0
  %341 = vmatprep.subr.bf16.mxu0 0
  %342 = vmatpush1.bf16.msra.mxu0 0
  %343 = vmatprep.subr.bf16.mxu0 0
  %344 = vmatpush1.bf16.msra.mxu0 0
  %345 = vmatprep.subr.bf16.mxu0 0
  %346 = vmatpush1.bf16.msra.mxu0 0
  %347 = vmatprep.subr.bf16.mxu0 0
  %348 = vmatpush1.bf16.msra.mxu0 0
  %349 = vmatprep.subr.bf16.mxu0 0
  %350 = vmatpush1.bf16.msra.mxu0 %v333
  %351 = vmatprep.subr.bf16.mxu0 0
  %352 = vmatpush2.bf16.msra.mxu0 0
  %353 = vmatprep.subr.bf16.mxu0 0
  %354 = vmatpush2.bf16.msra.mxu0 0
  %355 = vmatprep.subr.bf16.mxu0 0
  %356 = vmatpush2.bf16.msra.mxu0 0
  %357 = vmatprep.subr.bf16.mxu0 0
  %358 = vmatpush2.bf16.msra.mxu0 0
  %359 = vmatprep.subr.bf16.mxu0 0
  %360 = vmatpush2.bf16.msra.mxu0 0
  %361 = vmatprep.subr.bf16.mxu0 0
  %362 = vmatpush2.bf16.msra.mxu0 0
  %363 = vmatprep.subr.bf16.mxu0 0
  %364 = vmatpush2.bf16.msra.mxu0 0
  %365 = vmatprep.subr.bf16.mxu0 0
  %366 = vmatpush2.bf16.msra.mxu0 0
  %367 = vmatprep.mubr.bf16.mxu0 0
  %368 = vmatmul.mubr.bf16.gmra.mxu0 %v330
  %v369 = vpop.f32.mrf.mxu0
  %v370 = vadd.f32 0.0, %v369
  %v371 = vpop.f32.mrf.mxu0
  %v372 = vpop.f32.mrf.mxu0
  %v373 = vpop.f32.mrf.mxu0
  %374 = vdwg.mxu0
  %v375 = vadd.f32 %v229, %v370
  %v378 = vunpack.c.l.s4 1983009808
  %v379 = vunpack.c.0.s8 %v378
  %v380 = vlaneseq
  %v381 = vshrl.u32 %v380, 7
  %v382 = vsub.s32 %v379, %v381
  %v383 = vrot.slane %v78, %v382
  %384 = vrot.lane.b32.xlu0 %v383, 127
  %v385 = vpop.permute.xlu0 %384
  %v387 = vsel %vm140, %v55, 0
  %v390 = vsel %vm144, %v385, 0
  %392 = vmatprep.subr.bf16.mxu0 0
  %393 = vmatpush1.bf16.msra.mxu0 0
  %394 = vmatprep.subr.bf16.mxu0 0
  %395 = vmatpush1.bf16.msra.mxu0 0
  %396 = vmatprep.subr.bf16.mxu0 0
  %397 = vmatpush1.bf16.msra.mxu0 0
  %398 = vmatprep.subr.bf16.mxu0 0
  %399 = vmatpush1.bf16.msra.mxu0 0
  %400 = vmatprep.subr.bf16.mxu0 0
  %401 = vmatpush1.bf16.msra.mxu0 0
  %402 = vmatprep.subr.bf16.mxu0 0
  %403 = vmatpush1.bf16.msra.mxu0 0
  %404 = vmatprep.subr.bf16.mxu0 0
  %405 = vmatpush1.bf16.msra.mxu0 0
  %406 = vmatprep.subr.bf16.mxu0 0
  %407 = vmatpush1.bf16.msra.mxu0 %v390
  %408 = vmatprep.subr.bf16.mxu0 0
  %409 = vmatpush2.bf16.msra.mxu0 0
  %410 = vmatprep.subr.bf16.mxu0 0
  %411 = vmatpush2.bf16.msra.mxu0 0
  %412 = vmatprep.subr.bf16.mxu0 0
  %413 = vmatpush2.bf16.msra.mxu0 0
  %414 = vmatprep.subr.bf16.mxu0 0
  %415 = vmatpush2.bf16.msra.mxu0 0
  %416 = vmatprep.subr.bf16.mxu0 0
  %417 = vmatpush2.bf16.msra.mxu0 0
  %418 = vmatprep.subr.bf16.mxu0 0
  %419 = vmatpush2.bf16.msra.mxu0 0
  %420 = vmatprep.subr.bf16.mxu0 0
  %421 = vmatpush2.bf16.msra.mxu0 0
  %422 = vmatprep.subr.bf16.mxu0 0
  %423 = vmatpush2.bf16.msra.mxu0 0
  %424 = vmatprep.mubr.bf16.mxu0 0
  %425 = vmatmul.mubr.bf16.gmra.mxu0 %v387
  %v426 = vpop.f32.mrf.mxu0
  %v427 = vadd.f32 0.0, %v426
  %v428 = vpop.f32.mrf.mxu0
  %v429 = vpop.f32.mrf.mxu0
  %v430 = vpop.f32.mrf.mxu0
  %431 = vdwg.mxu0
  %v432 = vadd.f32 %v321, %v427
  %v434 = vsel %vm140, %v47, 0
  %v437 = vsel %vm144, %v138, 0
  %439 = vmatprep.subr.bf16.mxu0 0
  %440 = vmatpush1.bf16.msra.mxu0 0
  %441 = vmatprep.subr.bf16.mxu0 0
  %442 = vmatpush1.bf16.msra.mxu0 0
  %443 = vmatprep.subr.bf16.mxu0 0
  %444 = vmatpush1.bf16.msra.mxu0 0
  %445 = vmatprep.subr.bf16.mxu0 0
  %446 = vmatpush1.bf16.msra.mxu0 0
  %447 = vmatprep.subr.bf16.mxu0 0
  %448 = vmatpush1.bf16.msra.mxu0 0
  %449 = vmatprep.subr.bf16.mxu0 0
  %450 = vmatpush1.bf16.msra.mxu0 0
  %451 = vmatprep.subr.bf16.mxu0 0
  %452 = vmatpush1.bf16.msra.mxu0 0
  %453 = vmatprep.subr.bf16.mxu0 0
  %454 = vmatpush1.bf16.msra.mxu0 %v437
  %455 = vmatprep.subr.bf16.mxu0 0
  %456 = vmatpush2.bf16.msra.mxu0 0
  %457 = vmatprep.subr.bf16.mxu0 0
  %458 = vmatpush2.bf16.msra.mxu0 0
  %459 = vmatprep.subr.bf16.mxu0 0
  %460 = vmatpush2.bf16.msra.mxu0 0
  %461 = vmatprep.subr.bf16.mxu0 0
  %462 = vmatpush2.bf16.msra.mxu0 0
  %463 = vmatprep.subr.bf16.mxu0 0
  %464 = vmatpush2.bf16.msra.mxu0 0
  %465 = vmatprep.subr.bf16.mxu0 0
  %466 = vmatpush2.bf16.msra.mxu0 0
  %467 = vmatprep.subr.bf16.mxu0 0
  %468 = vmatpush2.bf16.msra.mxu0 0
  %469 = vmatprep.subr.bf16.mxu0 0
  %470 = vmatpush2.bf16.msra.mxu0 0
  %471 = vmatprep.mubr.bf16.mxu0 0
  %472 = vmatmul.mubr.bf16.gmra.mxu0 %v434
  %v473 = vpop.f32.mrf.mxu0
  %v474 = vadd.f32 0.0, %v473
  %v475 = vpop.f32.mrf.mxu0
  %v476 = vpop.f32.mrf.mxu0
  %v477 = vpop.f32.mrf.mxu0
  %478 = vdwg.mxu0
  %v479 = vadd.f32 %v375, %v474
  %v481 = vsel %vm140, %v56, 0
  %v484 = vsel %vm144, %v80, 0
  %486 = vmatprep.subr.bf16.mxu0 0
  %487 = vmatpush1.bf16.msra.mxu0 0
  %488 = vmatprep.subr.bf16.mxu0 0
  %489 = vmatpush1.bf16.msra.mxu0 0
  %490 = vmatprep.subr.bf16.mxu0 0
  %491 = vmatpush1.bf16.msra.mxu0 0
  %492 = vmatprep.subr.bf16.mxu0 0
  %493 = vmatpush1.bf16.msra.mxu0 0
  %494 = vmatprep.subr.bf16.mxu0 0
  %495 = vmatpush1.bf16.msra.mxu0 0
  %496 = vmatprep.subr.bf16.mxu0 0
  %497 = vmatpush1.bf16.msra.mxu0 0
  %498 = vmatprep.subr.bf16.mxu0 0
  %499 = vmatpush1.bf16.msra.mxu0 0
  %500 = vmatprep.subr.bf16.mxu0 0
  %501 = vmatpush1.bf16.msra.mxu0 %v484
  %502 = vmatprep.subr.bf16.mxu0 0
  %503 = vmatpush2.bf16.msra.mxu0 0
  %504 = vmatprep.subr.bf16.mxu0 0
  %505 = vmatpush2.bf16.msra.mxu0 0
  %506 = vmatprep.subr.bf16.mxu0 0
  %507 = vmatpush2.bf16.msra.mxu0 0
  %508 = vmatprep.subr.bf16.mxu0 0
  %509 = vmatpush2.bf16.msra.mxu0 0
  %510 = vmatprep.subr.bf16.mxu0 0
  %511 = vmatpush2.bf16.msra.mxu0 0
  %512 = vmatprep.subr.bf16.mxu0 0
  %513 = vmatpush2.bf16.msra.mxu0 0
  %514 = vmatprep.subr.bf16.mxu0 0
  %515 = vmatpush2.bf16.msra.mxu0 0
  %516 = vmatprep.subr.bf16.mxu0 0
  %517 = vmatpush2.bf16.msra.mxu0 0
  %518 = vmatprep.mubr.bf16.mxu0 0
  %519 = vmatmul.mubr.bf16.gmra.mxu0 %v481
  %v520 = vpop.f32.mrf.mxu0
  %v521 = vadd.f32 0.0, %v520
  %v522 = vpop.f32.mrf.mxu0
  %v523 = vpop.f32.mrf.mxu0
  %v524 = vpop.f32.mrf.mxu0
  %525 = vdwg.mxu0
  %v526 = vadd.f32 %v432, %v521
  %v528 = vsel %vm140, %v48, 0
  %v531 = vsel %vm144, %v139, 0
  %533 = vmatprep.subr.bf16.mxu0 0
  %534 = vmatpush1.bf16.msra.mxu0 0
  %535 = vmatprep.subr.bf16.mxu0 0
  %536 = vmatpush1.bf16.msra.mxu0 0
  %537 = vmatprep.subr.bf16.mxu0 0
  %538 = vmatpush1.bf16.msra.mxu0 0
  %539 = vmatprep.subr.bf16.mxu0 0
  %540 = vmatpush1.bf16.msra.mxu0 0
  %541 = vmatprep.subr.bf16.mxu0 0
  %542 = vmatpush1.bf16.msra.mxu0 0
  %543 = vmatprep.subr.bf16.mxu0 0
  %544 = vmatpush1.bf16.msra.mxu0 0
  %545 = vmatprep.subr.bf16.mxu0 0
  %546 = vmatpush1.bf16.msra.mxu0 0
  %547 = vmatprep.subr.bf16.mxu0 0
  %548 = vmatpush1.bf16.msra.mxu0 %v531
  %549 = vmatprep.subr.bf16.mxu0 0
  %550 = vmatpush2.bf16.msra.mxu0 0
  %551 = vmatprep.subr.bf16.mxu0 0
  %552 = vmatpush2.bf16.msra.mxu0 0
  %553 = vmatprep.subr.bf16.mxu0 0
  %554 = vmatpush2.bf16.msra.mxu0 0
  %555 = vmatprep.subr.bf16.mxu0 0
  %556 = vmatpush2.bf16.msra.mxu0 0
  %557 = vmatprep.subr.bf16.mxu0 0
  %558 = vmatpush2.bf16.msra.mxu0 0
  %559 = vmatprep.subr.bf16.mxu0 0
  %560 = vmatpush2.bf16.msra.mxu0 0
  %561 = vmatprep.subr.bf16.mxu0 0
  %562 = vmatpush2.bf16.msra.mxu0 0
  %563 = vmatprep.subr.bf16.mxu0 0
  %564 = vmatpush2.bf16.msra.mxu0 0
  %565 = vmatprep.mubr.bf16.mxu0 0
  %566 = vmatmul.mubr.bf16.gmra.mxu0 %v528
  %v567 = vpop.f32.mrf.mxu0
  %v568 = vadd.f32 0.0, %v567
  %v569 = vpop.f32.mrf.mxu0
  %v570 = vpop.f32.mrf.mxu0
  %v571 = vpop.f32.mrf.mxu0
  %572 = vdwg.mxu0
  %v573 = vadd.f32 %v479, %v568
  %v575 = vsel %vm140, %v57, 0
  %v578 = vsel %vm144, %v81, 0
  %580 = vmatprep.subr.bf16.mxu0 0
  %581 = vmatpush1.bf16.msra.mxu0 0
  %582 = vmatprep.subr.bf16.mxu0 0
  %583 = vmatpush1.bf16.msra.mxu0 0
  %584 = vmatprep.subr.bf16.mxu0 0
  %585 = vmatpush1.bf16.msra.mxu0 0
  %586 = vmatprep.subr.bf16.mxu0 0
  %587 = vmatpush1.bf16.msra.mxu0 0
  %588 = vmatprep.subr.bf16.mxu0 0
  %589 = vmatpush1.bf16.msra.mxu0 0
  %590 = vmatprep.subr.bf16.mxu0 0
  %591 = vmatpush1.bf16.msra.mxu0 0
  %592 = vmatprep.subr.bf16.mxu0 0
  %593 = vmatpush1.bf16.msra.mxu0 0
  %594 = vmatprep.subr.bf16.mxu0 0
  %595 = vmatpush1.bf16.msra.mxu0 %v578
  %596 = vmatprep.subr.bf16.mxu0 0
  %597 = vmatpush2.bf16.msra.mxu0 0
  %598 = vmatprep.subr.bf16.mxu0 0
  %599 = vmatpush2.bf16.msra.mxu0 0
  %600 = vmatprep.subr.bf16.mxu0 0
  %601 = vmatpush2.bf16.msra.mxu0 0
  %602 = vmatprep.subr.bf16.mxu0 0
  %603 = vmatpush2.bf16.msra.mxu0 0
  %604 = vmatprep.subr.bf16.mxu0 0
  %605 = vmatpush2.bf16.msra.mxu0 0
  %606 = vmatprep.subr.bf16.mxu0 0
  %607 = vmatpush2.bf16.msra.mxu0 0
  %608 = vmatprep.subr.bf16.mxu0 0
  %609 = vmatpush2.bf16.msra.mxu0 0
  %610 = vmatprep.subr.bf16.mxu0 0
  %611 = vmatpush2.bf16.msra.mxu0 0
  %612 = vmatprep.mubr.bf16.mxu0 0
  %613 = vmatmul.mubr.bf16.gmra.mxu0 %v575
  %v614 = vpop.f32.mrf.mxu0
  %v615 = vadd.f32 0.0, %v614
  %v616 = vpop.f32.mrf.mxu0
  %v617 = vpop.f32.mrf.mxu0
  %v618 = vpop.f32.mrf.mxu0
  %619 = vdwg.mxu0
  %v620 = vadd.f32 %v526, %v615
  %622 = vrot.lane.b32.xlu0 %v138, 127
  %v623 = vpop.permute.xlu0 %622
  %v625 = vsel %vm140, %v49, 0
  %v628 = vsel %vm144, %v623, 0
  %630 = vmatprep.subr.bf16.mxu0 0
  %631 = vmatpush1.bf16.msra.mxu0 0
  %632 = vmatprep.subr.bf16.mxu0 0
  %633 = vmatpush1.bf16.msra.mxu0 0
  %634 = vmatprep.subr.bf16.mxu0 0
  %635 = vmatpush1.bf16.msra.mxu0 0
  %636 = vmatprep.subr.bf16.mxu0 0
  %637 = vmatpush1.bf16.msra.mxu0 0
  %638 = vmatprep.subr.bf16.mxu0 0
  %639 = vmatpush1.bf16.msra.mxu0 0
  %640 = vmatprep.subr.bf16.mxu0 0
  %641 = vmatpush1.bf16.msra.mxu0 0
  %642 = vmatprep.subr.bf16.mxu0 0
  %643 = vmatpush1.bf16.msra.mxu0 0
  %644 = vmatprep.subr.bf16.mxu0 0
  %645 = vmatpush1.bf16.msra.mxu0 %v628
  %646 = vmatprep.subr.bf16.mxu0 0
  %647 = vmatpush2.bf16.msra.mxu0 0
  %648 = vmatprep.subr.bf16.mxu0 0
  %649 = vmatpush2.bf16.msra.mxu0 0
  %650 = vmatprep.subr.bf16.mxu0 0
  %651 = vmatpush2.bf16.msra.mxu0 0
  %652 = vmatprep.subr.bf16.mxu0 0
  %653 = vmatpush2.bf16.msra.mxu0 0
  %654 = vmatprep.subr.bf16.mxu0 0
  %655 = vmatpush2.bf16.msra.mxu0 0
  %656 = vmatprep.subr.bf16.mxu0 0
  %657 = vmatpush2.bf16.msra.mxu0 0
  %658 = vmatprep.subr.bf16.mxu0 0
  %659 = vmatpush2.bf16.msra.mxu0 0
  %660 = vmatprep.subr.bf16.mxu0 0
  %661 = vmatpush2.bf16.msra.mxu0 0
  %662 = vmatprep.mubr.bf16.mxu0 0
  %663 = vmatmul.mubr.bf16.gmra.mxu0 %v625
  %v664 = vpop.f32.mrf.mxu0
  %v665 = vadd.f32 0.0, %v664
  %v666 = vpop.f32.mrf.mxu0
  %v667 = vpop.f32.mrf.mxu0
  %v668 = vpop.f32.mrf.mxu0
  %669 = vdwg.mxu0
  %v670 = vadd.f32 %v573, %v665
  %v673 = vunpack.c.l.s4 1983009808
  %v674 = vunpack.c.0.s8 %v673
  %v675 = vlaneseq
  %v676 = vshrl.u32 %v675, 7
  %v677 = vsub.s32 %v674, %v676
  %v678 = vrot.slane %v80, %v677
  %679 = vrot.lane.b32.xlu0 %v678, 127
  %v680 = vpop.permute.xlu0 %679
  %v682 = vsel %vm140, %v58, 0
  %v685 = vsel %vm144, %v680, 0
  %687 = vmatprep.subr.bf16.mxu0 0
  %688 = vmatpush1.bf16.msra.mxu0 0
  %689 = vmatprep.subr.bf16.mxu0 0
  %690 = vmatpush1.bf16.msra.mxu0 0
  %691 = vmatprep.subr.bf16.mxu0 0
  %692 = vmatpush1.bf16.msra.mxu0 0
  %693 = vmatprep.subr.bf16.mxu0 0
  %694 = vmatpush1.bf16.msra.mxu0 0
  %695 = vmatprep.subr.bf16.mxu0 0
  %696 = vmatpush1.bf16.msra.mxu0 0
  %697 = vmatprep.subr.bf16.mxu0 0
  %698 = vmatpush1.bf16.msra.mxu0 0
  %699 = vmatprep.subr.bf16.mxu0 0
  %700 = vmatpush1.bf16.msra.mxu0 0
  %701 = vmatprep.subr.bf16.mxu0 0
  %702 = vmatpush1.bf16.msra.mxu0 %v685
  %703 = vmatprep.subr.bf16.mxu0 0
  %704 = vmatpush2.bf16.msra.mxu0 0
  %705 = vmatprep.subr.bf16.mxu0 0
  %706 = vmatpush2.bf16.msra.mxu0 0
  %707 = vmatprep.subr.bf16.mxu0 0
  %708 = vmatpush2.bf16.msra.mxu0 0
  %709 = vmatprep.subr.bf16.mxu0 0
  %710 = vmatpush2.bf16.msra.mxu0 0
  %711 = vmatprep.subr.bf16.mxu0 0
  %712 = vmatpush2.bf16.msra.mxu0 0
  %713 = vmatprep.subr.bf16.mxu0 0
  %714 = vmatpush2.bf16.msra.mxu0 0
  %715 = vmatprep.subr.bf16.mxu0 0
  %716 = vmatpush2.bf16.msra.mxu0 0
  %717 = vmatprep.subr.bf16.mxu0 0
  %718 = vmatpush2.bf16.msra.mxu0 0
  %719 = vmatprep.mubr.bf16.mxu0 0
  %720 = vmatmul.mubr.bf16.gmra.mxu0 %v682
  %v721 = vpop.f32.mrf.mxu0
  %v722 = vadd.f32 0.0, %v721
  %v723 = vpop.f32.mrf.mxu0
  %v724 = vpop.f32.mrf.mxu0
  %v725 = vpop.f32.mrf.mxu0
  %726 = vdwg.mxu0
  %v727 = vadd.f32 %v620, %v722
  %728 = vrot.lane.b32.xlu0 %v136, 118
  %v729 = vpop.permute.xlu0 %728
  %v731 = vsel %vm140, %v50, 0
  %v734 = vsel %vm144, %v729, 0
  %736 = vmatprep.subr.bf16.mxu0 0
  %737 = vmatpush1.bf16.msra.mxu0 0
  %738 = vmatprep.subr.bf16.mxu0 0
  %739 = vmatpush1.bf16.msra.mxu0 0
  %740 = vmatprep.subr.bf16.mxu0 0
  %741 = vmatpush1.bf16.msra.mxu0 0
  %742 = vmatprep.subr.bf16.mxu0 0
  %743 = vmatpush1.bf16.msra.mxu0 0
  %744 = vmatprep.subr.bf16.mxu0 0
  %745 = vmatpush1.bf16.msra.mxu0 0
  %746 = vmatprep.subr.bf16.mxu0 0
  %747 = vmatpush1.bf16.msra.mxu0 0
  %748 = vmatprep.subr.bf16.mxu0 0
  %749 = vmatpush1.bf16.msra.mxu0 0
  %750 = vmatprep.subr.bf16.mxu0 0
  %751 = vmatpush1.bf16.msra.mxu0 %v734
  %752 = vmatprep.subr.bf16.mxu0 0
  %753 = vmatpush2.bf16.msra.mxu0 0
  %754 = vmatprep.subr.bf16.mxu0 0
  %755 = vmatpush2.bf16.msra.mxu0 0
  %756 = vmatprep.subr.bf16.mxu0 0
  %757 = vmatpush2.bf16.msra.mxu0 0
  %758 = vmatprep.subr.bf16.mxu0 0
  %759 = vmatpush2.bf16.msra.mxu0 0
  %760 = vmatprep.subr.bf16.mxu0 0
  %761 = vmatpush2.bf16.msra.mxu0 0
  %762 = vmatprep.subr.bf16.mxu0 0
  %763 = vmatpush2.bf16.msra.mxu0 0
  %764 = vmatprep.subr.bf16.mxu0 0
  %765 = vmatpush2.bf16.msra.mxu0 0
  %766 = vmatprep.subr.bf16.mxu0 0
  %767 = vmatpush2.bf16.msra.mxu0 0
  %768 = vmatprep.mubr.bf16.mxu0 0
  %769 = vmatmul.mubr.bf16.gmra.mxu0 %v731
  %v770 = vpop.f32.mrf.mxu0
  %v771 = vadd.f32 0.0, %v770
  %v772 = vpop.f32.mrf.mxu0
  %v773 = vpop.f32.mrf.mxu0
  %v774 = vpop.f32.mrf.mxu0
  %775 = vdwg.mxu0
  %v776 = vadd.f32 %v670, %v771
  %777 = vrot.lane.b32.xlu0 %v383, 118
  %v778 = vpop.permute.xlu0 %777
  %v780 = vsel %vm140, %v59, 0
  %v783 = vsel %vm144, %v778, 0
  %785 = vmatprep.subr.bf16.mxu0 0
  %786 = vmatpush1.bf16.msra.mxu0 0
  %787 = vmatprep.subr.bf16.mxu0 0
  %788 = vmatpush1.bf16.msra.mxu0 0
  %789 = vmatprep.subr.bf16.mxu0 0
  %790 = vmatpush1.bf16.msra.mxu0 0
  %791 = vmatprep.subr.bf16.mxu0 0
  %792 = vmatpush1.bf16.msra.mxu0 0
  %793 = vmatprep.subr.bf16.mxu0 0
  %794 = vmatpush1.bf16.msra.mxu0 0
  %795 = vmatprep.subr.bf16.mxu0 0
  %796 = vmatpush1.bf16.msra.mxu0 0
  %797 = vmatprep.subr.bf16.mxu0 0
  %798 = vmatpush1.bf16.msra.mxu0 0
  %799 = vmatprep.subr.bf16.mxu0 0
  %800 = vmatpush1.bf16.msra.mxu0 %v783
  %801 = vmatprep.subr.bf16.mxu0 0
  %802 = vmatpush2.bf16.msra.mxu0 0
  %803 = vmatprep.subr.bf16.mxu0 0
  %804 = vmatpush2.bf16.msra.mxu0 0
  %805 = vmatprep.subr.bf16.mxu0 0
  %806 = vmatpush2.bf16.msra.mxu0 0
  %807 = vmatprep.subr.bf16.mxu0 0
  %808 = vmatpush2.bf16.msra.mxu0 0
  %809 = vmatprep.subr.bf16.mxu0 0
  %810 = vmatpush2.bf16.msra.mxu0 0
  %811 = vmatprep.subr.bf16.mxu0 0
  %812 = vmatpush2.bf16.msra.mxu0 0
  %813 = vmatprep.subr.bf16.mxu0 0
  %814 = vmatpush2.bf16.msra.mxu0 0
  %815 = vmatprep.subr.bf16.mxu0 0
  %816 = vmatpush2.bf16.msra.mxu0 0
  %817 = vmatprep.mubr.bf16.mxu0 0
  %818 = vmatmul.mubr.bf16.gmra.mxu0 %v780
  %v819 = vpop.f32.mrf.mxu0
  %v820 = vadd.f32 0.0, %v819
  %v821 = vpop.f32.mrf.mxu0
  %v822 = vpop.f32.mrf.mxu0
  %v823 = vpop.f32.mrf.mxu0
  %824 = vdwg.mxu0
  %v825 = vadd.f32 %v727, %v820
  %827 = vrot.lane.b32.xlu0 %v137, 118
  %v828 = vpop.permute.xlu0 %827
  %v830 = vsel %vm140, %v51, 0
  %v833 = vsel %vm144, %v828, 0
  %835 = vmatprep.subr.bf16.mxu0 0
  %836 = vmatpush1.bf16.msra.mxu0 0
  %837 = vmatprep.subr.bf16.mxu0 0
  %838 = vmatpush1.bf16.msra.mxu0 0
  %839 = vmatprep.subr.bf16.mxu0 0
  %840 = vmatpush1.bf16.msra.mxu0 0
  %841 = vmatprep.subr.bf16.mxu0 0
  %842 = vmatpush1.bf16.msra.mxu0 0
  %843 = vmatprep.subr.bf16.mxu0 0
  %844 = vmatpush1.bf16.msra.mxu0 0
  %845 = vmatprep.subr.bf16.mxu0 0
  %846 = vmatpush1.bf16.msra.mxu0 0
  %847 = vmatprep.subr.bf16.mxu0 0
  %848 = vmatpush1.bf16.msra.mxu0 0
  %849 = vmatprep.subr.bf16.mxu0 0
  %850 = vmatpush1.bf16.msra.mxu0 %v833
  %851 = vmatprep.subr.bf16.mxu0 0
  %852 = vmatpush2.bf16.msra.mxu0 0
  %853 = vmatprep.subr.bf16.mxu0 0
  %854 = vmatpush2.bf16.msra.mxu0 0
  %855 = vmatprep.subr.bf16.mxu0 0
  %856 = vmatpush2.bf16.msra.mxu0 0
  %857 = vmatprep.subr.bf16.mxu0 0
  %858 = vmatpush2.bf16.msra.mxu0 0
  %859 = vmatprep.subr.bf16.mxu0 0
  %860 = vmatpush2.bf16.msra.mxu0 0
  %861 = vmatprep.subr.bf16.mxu0 0
  %862 = vmatpush2.bf16.msra.mxu0 0
  %863 = vmatprep.subr.bf16.mxu0 0
  %864 = vmatpush2.bf16.msra.mxu0 0
  %865 = vmatprep.subr.bf16.mxu0 0
  %866 = vmatpush2.bf16.msra.mxu0 0
  %867 = vmatprep.mubr.bf16.mxu0 0
  %868 = vmatmul.mubr.bf16.gmra.mxu0 %v830
  %v869 = vpop.f32.mrf.mxu0
  %v870 = vadd.f32 0.0, %v869
  %v871 = vpop.f32.mrf.mxu0
  %v872 = vpop.f32.mrf.mxu0
  %v873 = vpop.f32.mrf.mxu0
  %874 = vdwg.mxu0
  %v875 = vadd.f32 %v776, %v870
  %v878 = vunpack.c.l.s4 1983009808
  %v879 = vunpack.c.0.s8 %v878
  %v880 = vlaneseq
  %v881 = vshrl.u32 %v880, 7
  %v882 = vsub.s32 %v879, %v881
  %v883 = vrot.slane %v79, %v882
  %884 = vrot.lane.b32.xlu0 %v883, 118
  %v885 = vpop.permute.xlu0 %884
  %v887 = vsel %vm140, %v60, 0
  %v890 = vsel %vm144, %v885, 0
  %892 = vmatprep.subr.bf16.mxu0 0
  %893 = vmatpush1.bf16.msra.mxu0 0
  %894 = vmatprep.subr.bf16.mxu0 0
  %895 = vmatpush1.bf16.msra.mxu0 0
  %896 = vmatprep.subr.bf16.mxu0 0
  %897 = vmatpush1.bf16.msra.mxu0 0
  %898 = vmatprep.subr.bf16.mxu0 0
  %899 = vmatpush1.bf16.msra.mxu0 0
  %900 = vmatprep.subr.bf16.mxu0 0
  %901 = vmatpush1.bf16.msra.mxu0 0
  %902 = vmatprep.subr.bf16.mxu0 0
  %903 = vmatpush1.bf16.msra.mxu0 0
  %904 = vmatprep.subr.bf16.mxu0 0
  %905 = vmatpush1.bf16.msra.mxu0 0
  %906 = vmatprep.subr.bf16.mxu0 0
  %907 = vmatpush1.bf16.msra.mxu0 %v890
  %908 = vmatprep.subr.bf16.mxu0 0
  %909 = vmatpush2.bf16.msra.mxu0 0
  %910 = vmatprep.subr.bf16.mxu0 0
  %911 = vmatpush2.bf16.msra.mxu0 0
  %912 = vmatprep.subr.bf16.mxu0 0
  %913 = vmatpush2.bf16.msra.mxu0 0
  %914 = vmatprep.subr.bf16.mxu0 0
  %915 = vmatpush2.bf16.msra.mxu0 0
  %916 = vmatprep.subr.bf16.mxu0 0
  %917 = vmatpush2.bf16.msra.mxu0 0
  %918 = vmatprep.subr.bf16.mxu0 0
  %919 = vmatpush2.bf16.msra.mxu0 0
  %920 = vmatprep.subr.bf16.mxu0 0
  %921 = vmatpush2.bf16.msra.mxu0 0
  %922 = vmatprep.subr.bf16.mxu0 0
  %923 = vmatpush2.bf16.msra.mxu0 0
  %924 = vmatprep.mubr.bf16.mxu0 0
  %925 = vmatmul.mubr.bf16.gmra.mxu0 %v887
  %v926 = vpop.f32.mrf.mxu0
  %v927 = vadd.f32 0.0, %v926
  %v928 = vpop.f32.mrf.mxu0
  %v929 = vpop.f32.mrf.mxu0
  %v930 = vpop.f32.mrf.mxu0
  %931 = vdwg.mxu0
  %v932 = vadd.f32 %v825, %v927
  %933 = vrot.lane.b32.xlu0 %v136, 117
  %v934 = vpop.permute.xlu0 %933
  %v936 = vsel %vm140, %v52, 0
  %v939 = vsel %vm144, %v934, 0
  %941 = vmatprep.subr.bf16.mxu0 0
  %942 = vmatpush1.bf16.msra.mxu0 0
  %943 = vmatprep.subr.bf16.mxu0 0
  %944 = vmatpush1.bf16.msra.mxu0 0
  %945 = vmatprep.subr.bf16.mxu0 0
  %946 = vmatpush1.bf16.msra.mxu0 0
  %947 = vmatprep.subr.bf16.mxu0 0
  %948 = vmatpush1.bf16.msra.mxu0 0
  %949 = vmatprep.subr.bf16.mxu0 0
  %950 = vmatpush1.bf16.msra.mxu0 0
  %951 = vmatprep.subr.bf16.mxu0 0
  %952 = vmatpush1.bf16.msra.mxu0 0
  %953 = vmatprep.subr.bf16.mxu0 0
  %954 = vmatpush1.bf16.msra.mxu0 0
  %955 = vmatprep.subr.bf16.mxu0 0
  %956 = vmatpush1.bf16.msra.mxu0 %v939
  %957 = vmatprep.subr.bf16.mxu0 0
  %958 = vmatpush2.bf16.msra.mxu0 0
  %959 = vmatprep.subr.bf16.mxu0 0
  %960 = vmatpush2.bf16.msra.mxu0 0
  %961 = vmatprep.subr.bf16.mxu0 0
  %962 = vmatpush2.bf16.msra.mxu0 0
  %963 = vmatprep.subr.bf16.mxu0 0
  %964 = vmatpush2.bf16.msra.mxu0 0
  %965 = vmatprep.subr.bf16.mxu0 0
  %966 = vmatpush2.bf16.msra.mxu0 0
  %967 = vmatprep.subr.bf16.mxu0 0
  %968 = vmatpush2.bf16.msra.mxu0 0
  %969 = vmatprep.subr.bf16.mxu0 0
  %970 = vmatpush2.bf16.msra.mxu0 0
  %971 = vmatprep.subr.bf16.mxu0 0
  %972 = vmatpush2.bf16.msra.mxu0 0
  %973 = vmatprep.mubr.bf16.mxu0 0
  %974 = vmatmul.mubr.bf16.gmra.mxu0 %v936
  %v975 = vpop.f32.mrf.mxu0
  %v976 = vadd.f32 0.0, %v975
  %v977 = vpop.f32.mrf.mxu0
  %v978 = vpop.f32.mrf.mxu0
  %v979 = vpop.f32.mrf.mxu0
  %980 = vdwg.mxu0
  %v981 = vadd.f32 %v875, %v976
  %982 = vrot.lane.b32.xlu0 %v383, 117
  %v983 = vpop.permute.xlu0 %982
  %v985 = vsel %vm140, %v61, 0
  %v988 = vsel %vm144, %v983, 0
  %990 = vmatprep.subr.bf16.mxu0 0
  %991 = vmatpush1.bf16.msra.mxu0 0
  %992 = vmatprep.subr.bf16.mxu0 0
  %993 = vmatpush1.bf16.msra.mxu0 0
  %994 = vmatprep.subr.bf16.mxu0 0
  %995 = vmatpush1.bf16.msra.mxu0 0
  %996 = vmatprep.subr.bf16.mxu0 0
  %997 = vmatpush1.bf16.msra.mxu0 0
  %998 = vmatprep.subr.bf16.mxu0 0
  %999 = vmatpush1.bf16.msra.mxu0 0
  %1000 = vmatprep.subr.bf16.mxu0 0
  %1001 = vmatpush1.bf16.msra.mxu0 0
  %1002 = vmatprep.subr.bf16.mxu0 0
  %1003 = vmatpush1.bf16.msra.mxu0 0
  %1004 = vmatprep.subr.bf16.mxu0 0
  %1005 = vmatpush1.bf16.msra.mxu0 %v988
  %1006 = vmatprep.subr.bf16.mxu0 0
  %1007 = vmatpush2.bf16.msra.mxu0 0
  %1008 = vmatprep.subr.bf16.mxu0 0
  %1009 = vmatpush2.bf16.msra.mxu0 0
  %1010 = vmatprep.subr.bf16.mxu0 0
  %1011 = vmatpush2.bf16.msra.mxu0 0
  %1012 = vmatprep.subr.bf16.mxu0 0
  %1013 = vmatpush2.bf16.msra.mxu0 0
  %1014 = vmatprep.subr.bf16.mxu0 0
  %1015 = vmatpush2.bf16.msra.mxu0 0
  %1016 = vmatprep.subr.bf16.mxu0 0
  %1017 = vmatpush2.bf16.msra.mxu0 0
  %1018 = vmatprep.subr.bf16.mxu0 0
  %1019 = vmatpush2.bf16.msra.mxu0 0
  %1020 = vmatprep.subr.bf16.mxu0 0
  %1021 = vmatpush2.bf16.msra.mxu0 0
  %1022 = vmatprep.mubr.bf16.mxu0 0
  %1023 = vmatmul.mubr.bf16.gmra.mxu0 %v985
  %v1024 = vpop.f32.mrf.mxu0
  %v1025 = vadd.f32 0.0, %v1024
  %v1026 = vpop.f32.mrf.mxu0
  %v1027 = vpop.f32.mrf.mxu0
  %v1028 = vpop.f32.mrf.mxu0
  %1029 = vdwg.mxu0
  %v1030 = vadd.f32 %v932, %v1025
  %v1031 = vld [vmem:[%s8] sm:$0xff]
  %1033 = vset.pattern.permute.xlu0 0
  %1034 = vperm.xlu0 %1033, %v1031
  %v1035 = vpop.permute.xlu0 %1034
  %v1037 = vmul.f32 %v981, %v1035
  %v1038 = vld [vmem:[%s9] sm:$0xff]
  %1040 = vset.pattern.permute.xlu0 0
  %1041 = vperm.xlu0 %1040, %v1038
  %v1042 = vpop.permute.xlu0 %1041
  %v1044 = vadd.f32 %v1037, %v1042
  %v1045 = vmax.f32 %v1044, 0.0
  %v1047 = vlaneseq
  %v1048 = vshrl.u32 %v1047, 7
  %v1049 = vsub.s32 0, %v1048
  %v1050 = vrot.slane %v75, %v1049
  %v1052 = vmul.f32 %v1045, %v1050
  %v1053 = vpack.c.bf16 %v1052, %v1052
  %v1055 = vunpack.c.l.b16 %v1053
  %v1056 = vpack.c.b16 %v1055, %v1055
  %1057 = vrot.lane.b32.xlu0 %v1056, 11
  %v1058 = vpop.permute.xlu0 %1057
  %vm1060 = vcmask 740440
  %1061 = vst.msk [vmem:[#allocation2] sm:$0xf] %vm1060, %v1058
  %v1062 = vld [vmem:[#allocation2] sm:$0xf]
  %v1064 = vunpack.c.l.b16 %v1062
  %v1065 = vpack.c.b16 %v1064, %v1064
  %1066 = vrot.lane.b32.xlu0 %v1065, 127
  %v1067 = vpop.permute.xlu0 %1066
  %vm1068 = vcmask 64512
  %v1070 = vsel %vm1068, %v63, 0
  %vm1072 = vcmask 1043456
  %v1074 = vsel %vm1072, %v1067, 0
  %1076 = vmatprep.subr.bf16.mxu0 0
  %1077 = vmatpush1.bf16.msra.mxu0 0
  %1078 = vmatprep.subr.bf16.mxu0 0
  %1079 = vmatpush1.bf16.msra.mxu0 0
  %1080 = vmatprep.subr.bf16.mxu0 0
  %1081 = vmatpush1.bf16.msra.mxu0 0
  %1082 = vmatprep.subr.bf16.mxu0 0
  %1083 = vmatpush1.bf16.msra.mxu0 0
  %1084 = vmatprep.subr.bf16.mxu0 0
  %1085 = vmatpush1.bf16.msra.mxu0 0
  %1086 = vmatprep.subr.bf16.mxu0 0
  %1087 = vmatpush1.bf16.msra.mxu0 0
  %1088 = vmatprep.subr.bf16.mxu0 0
  %1089 = vmatpush1.bf16.msra.mxu0 0
  %1090 = vmatprep.subr.bf16.mxu0 0
  %1091 = vmatpush1.bf16.msra.mxu0 %v1074
  %1092 = vmatprep.subr.bf16.mxu0 0
  %1093 = vmatpush2.bf16.msra.mxu0 0
  %1094 = vmatprep.subr.bf16.mxu0 0
  %1095 = vmatpush2.bf16.msra.mxu0 0
  %1096 = vmatprep.subr.bf16.mxu0 0
  %1097 = vmatpush2.bf16.msra.mxu0 0
  %1098 = vmatprep.subr.bf16.mxu0 0
  %1099 = vmatpush2.bf16.msra.mxu0 0
  %1100 = vmatprep.subr.bf16.mxu0 0
  %1101 = vmatpush2.bf16.msra.mxu0 0
  %1102 = vmatprep.subr.bf16.mxu0 0
  %1103 = vmatpush2.bf16.msra.mxu0 0
  %1104 = vmatprep.subr.bf16.mxu0 0
  %1105 = vmatpush2.bf16.msra.mxu0 0
  %1106 = vmatprep.subr.bf16.mxu0 0
  %1107 = vmatpush2.bf16.msra.mxu0 0
  %1108 = vmatprep.mubr.bf16.mxu0 0
  %1109 = vmatmul.mubr.bf16.gmra.mxu0 %v1070
  %v1110 = vpop.f32.mrf.mxu0
  %v1111 = vadd.f32 0.0, %v1110
  %v1112 = vpop.f32.mrf.mxu0
  %v1113 = vpop.f32.mrf.mxu0
  %v1114 = vpop.f32.mrf.mxu0
  %1115 = vdwg.mxu0
  %v1117 = vsel %vm1068, %v62, 0
  %v1120 = vsel %vm1072, %v1062, 0
  %1122 = vmatprep.subr.bf16.mxu0 0
  %1123 = vmatpush1.bf16.msra.mxu0 0
  %1124 = vmatprep.subr.bf16.mxu0 0
  %1125 = vmatpush1.bf16.msra.mxu0 0
  %1126 = vmatprep.subr.bf16.mxu0 0
  %1127 = vmatpush1.bf16.msra.mxu0 0
  %1128 = vmatprep.subr.bf16.mxu0 0
  %1129 = vmatpush1.bf16.msra.mxu0 0
  %1130 = vmatprep.subr.bf16.mxu0 0
  %1131 = vmatpush1.bf16.msra.mxu0 0
  %1132 = vmatprep.subr.bf16.mxu0 0
  %1133 = vmatpush1.bf16.msra.mxu0 0
  %1134 = vmatprep.subr.bf16.mxu0 0
  %1135 = vmatpush1.bf16.msra.mxu0 0
  %1136 = vmatprep.subr.bf16.mxu0 0
  %1137 = vmatpush1.bf16.msra.mxu0 %v1120
  %1138 = vmatprep.subr.bf16.mxu0 0
  %1139 = vmatpush2.bf16.msra.mxu0 0
  %1140 = vmatprep.subr.bf16.mxu0 0
  %1141 = vmatpush2.bf16.msra.mxu0 0
  %1142 = vmatprep.subr.bf16.mxu0 0
  %1143 = vmatpush2.bf16.msra.mxu0 0
  %1144 = vmatprep.subr.bf16.mxu0 0
  %1145 = vmatpush2.bf16.msra.mxu0 0
  %1146 = vmatprep.subr.bf16.mxu0 0
  %1147 = vmatpush2.bf16.msra.mxu0 0
  %1148 = vmatprep.subr.bf16.mxu0 0
  %1149 = vmatpush2.bf16.msra.mxu0 0
  %1150 = vmatprep.subr.bf16.mxu0 0
  %1151 = vmatpush2.bf16.msra.mxu0 0
  %1152 = vmatprep.subr.bf16.mxu0 0
  %1153 = vmatpush2.bf16.msra.mxu0 0
  %1154 = vmatprep.mubr.bf16.mxu0 0
  %1155 = vmatmul.mubr.bf16.gmra.mxu0 %v1117
  %v1156 = vpop.f32.mrf.mxu0
  %v1157 = vadd.f32 %v1111, %v1156
  %v1158 = vpop.f32.mrf.mxu0
  %v1159 = vpop.f32.mrf.mxu0
  %v1160 = vpop.f32.mrf.mxu0
  %1161 = vdwg.mxu0
  %1162 = vrot.lane.b32.xlu0 %v1065, 126
  %v1163 = vpop.permute.xlu0 %1162
  %v1165 = vsel %vm1068, %v64, 0
  %v1168 = vsel %vm1072, %v1163, 0
  %1170 = vmatprep.subr.bf16.mxu0 0
  %1171 = vmatpush1.bf16.msra.mxu0 0
  %1172 = vmatprep.subr.bf16.mxu0 0
  %1173 = vmatpush1.bf16.msra.mxu0 0
  %1174 = vmatprep.subr.bf16.mxu0 0
  %1175 = vmatpush1.bf16.msra.mxu0 0
  %1176 = vmatprep.subr.bf16.mxu0 0
  %1177 = vmatpush1.bf16.msra.mxu0 0
  %1178 = vmatprep.subr.bf16.mxu0 0
  %1179 = vmatpush1.bf16.msra.mxu0 0
  %1180 = vmatprep.subr.bf16.mxu0 0
  %1181 = vmatpush1.bf16.msra.mxu0 0
  %1182 = vmatprep.subr.bf16.mxu0 0
  %1183 = vmatpush1.bf16.msra.mxu0 0
  %1184 = vmatprep.subr.bf16.mxu0 0
  %1185 = vmatpush1.bf16.msra.mxu0 %v1168
  %1186 = vmatprep.subr.bf16.mxu0 0
  %1187 = vmatpush2.bf16.msra.mxu0 0
  %1188 = vmatprep.subr.bf16.mxu0 0
  %1189 = vmatpush2.bf16.msra.mxu0 0
  %1190 = vmatprep.subr.bf16.mxu0 0
  %1191 = vmatpush2.bf16.msra.mxu0 0
  %1192 = vmatprep.subr.bf16.mxu0 0
  %1193 = vmatpush2.bf16.msra.mxu0 0
  %1194 = vmatprep.subr.bf16.mxu0 0
  %1195 = vmatpush2.bf16.msra.mxu0 0
  %1196 = vmatprep.subr.bf16.mxu0 0
  %1197 = vmatpush2.bf16.msra.mxu0 0
  %1198 = vmatprep.subr.bf16.mxu0 0
  %1199 = vmatpush2.bf16.msra.mxu0 0
  %1200 = vmatprep.subr.bf16.mxu0 0
  %1201 = vmatpush2.bf16.msra.mxu0 0
  %1202 = vmatprep.mubr.bf16.mxu0 0
  %1203 = vmatmul.mubr.bf16.gmra.mxu0 %v1165
  %v1204 = vpop.f32.mrf.mxu0
  %v1205 = vadd.f32 0.0, %v1204
  %v1206 = vpop.f32.mrf.mxu0
  %v1207 = vpop.f32.mrf.mxu0
  %v1208 = vpop.f32.mrf.mxu0
  %1209 = vdwg.mxu0
  %v1210 = vadd.f32 %v1157, %v1205
  %1211 = vrot.lane.b32.xlu0 %v1065, 118
  %v1212 = vpop.permute.xlu0 %1211
  %v1214 = vsel %vm1068, %v65, 0
  %v1217 = vsel %vm1072, %v1212, 0
  %1219 = vmatprep.subr.bf16.mxu0 0
  %1220 = vmatpush1.bf16.msra.mxu0 0
  %1221 = vmatprep.subr.bf16.mxu0 0
  %1222 = vmatpush1.bf16.msra.mxu0 0
  %1223 = vmatprep.subr.bf16.mxu0 0
  %1224 = vmatpush1.bf16.msra.mxu0 0
  %1225 = vmatprep.subr.bf16.mxu0 0
  %1226 = vmatpush1.bf16.msra.mxu0 0
  %1227 = vmatprep.subr.bf16.mxu0 0
  %1228 = vmatpush1.bf16.msra.mxu0 0
  %1229 = vmatprep.subr.bf16.mxu0 0
  %1230 = vmatpush1.bf16.msra.mxu0 0
  %1231 = vmatprep.subr.bf16.mxu0 0
  %1232 = vmatpush1.bf16.msra.mxu0 0
  %1233 = vmatprep.subr.bf16.mxu0 0
  %1234 = vmatpush1.bf16.msra.mxu0 %v1217
  %1235 = vmatprep.subr.bf16.mxu0 0
  %1236 = vmatpush2.bf16.msra.mxu0 0
  %1237 = vmatprep.subr.bf16.mxu0 0
  %1238 = vmatpush2.bf16.msra.mxu0 0
  %1239 = vmatprep.subr.bf16.mxu0 0
  %1240 = vmatpush2.bf16.msra.mxu0 0
  %1241 = vmatprep.subr.bf16.mxu0 0
  %1242 = vmatpush2.bf16.msra.mxu0 0
  %1243 = vmatprep.subr.bf16.mxu0 0
  %1244 = vmatpush2.bf16.msra.mxu0 0
  %1245 = vmatprep.subr.bf16.mxu0 0
  %1246 = vmatpush2.bf16.msra.mxu0 0
  %1247 = vmatprep.subr.bf16.mxu0 0
  %1248 = vmatpush2.bf16.msra.mxu0 0
  %1249 = vmatprep.subr.bf16.mxu0 0
  %1250 = vmatpush2.bf16.msra.mxu0 0
  %1251 = vmatprep.mubr.bf16.mxu0 0
  %1252 = vmatmul.mubr.bf16.gmra.mxu0 %v1214
  %v1253 = vpop.f32.mrf.mxu0
  %v1254 = vadd.f32 0.0, %v1253
  %v1255 = vpop.f32.mrf.mxu0
  %v1256 = vpop.f32.mrf.mxu0
  %v1257 = vpop.f32.mrf.mxu0
  %1258 = vdwg.mxu0
  %v1259 = vadd.f32 %v1210, %v1254
  %1260 = vrot.lane.b32.xlu0 %v1065, 117
  %v1261 = vpop.permute.xlu0 %1260
  %v1263 = vsel %vm1068, %v66, 0
  %v1266 = vsel %vm1072, %v1261, 0
  %1268 = vmatprep.subr.bf16.mxu0 0
  %1269 = vmatpush1.bf16.msra.mxu0 0
  %1270 = vmatprep.subr.bf16.mxu0 0
  %1271 = vmatpush1.bf16.msra.mxu0 0
  %1272 = vmatprep.subr.bf16.mxu0 0
  %1273 = vmatpush1.bf16.msra.mxu0 0
  %1274 = vmatprep.subr.bf16.mxu0 0
  %1275 = vmatpush1.bf16.msra.mxu0 0
  %1276 = vmatprep.subr.bf16.mxu0 0
  %1277 = vmatpush1.bf16.msra.mxu0 0
  %1278 = vmatprep.subr.bf16.mxu0 0
  %1279 = vmatpush1.bf16.msra.mxu0 0
  %1280 = vmatprep.subr.bf16.mxu0 0
  %1281 = vmatpush1.bf16.msra.mxu0 0
  %1282 = vmatprep.subr.bf16.mxu0 0
  %1283 = vmatpush1.bf16.msra.mxu0 %v1266
  %1284 = vmatprep.subr.bf16.mxu0 0
  %1285 = vmatpush2.bf16.msra.mxu0 0
  %1286 = vmatprep.subr.bf16.mxu0 0
  %1287 = vmatpush2.bf16.msra.mxu0 0
  %1288 = vmatprep.subr.bf16.mxu0 0
  %1289 = vmatpush2.bf16.msra.mxu0 0
  %1290 = vmatprep.subr.bf16.mxu0 0
  %1291 = vmatpush2.bf16.msra.mxu0 0
  %1292 = vmatprep.subr.bf16.mxu0 0
  %1293 = vmatpush2.bf16.msra.mxu0 0
  %1294 = vmatprep.subr.bf16.mxu0 0
  %1295 = vmatpush2.bf16.msra.mxu0 0
  %1296 = vmatprep.subr.bf16.mxu0 0
  %1297 = vmatpush2.bf16.msra.mxu0 0
  %1298 = vmatprep.subr.bf16.mxu0 0
  %1299 = vmatpush2.bf16.msra.mxu0 0
  %1300 = vmatprep.mubr.bf16.mxu0 0
  %1301 = vmatmul.mubr.bf16.gmra.mxu0 %v1263
  %v1302 = vpop.f32.mrf.mxu0
  %v1303 = vadd.f32 0.0, %v1302
  %v1304 = vpop.f32.mrf.mxu0
  %v1305 = vpop.f32.mrf.mxu0
  %v1306 = vpop.f32.mrf.mxu0
  %1307 = vdwg.mxu0
  %v1308 = vadd.f32 %v1259, %v1303
  %1309 = vrot.lane.b32.xlu0 %v1065, 116
  %v1310 = vpop.permute.xlu0 %1309
  %v1312 = vsel %vm1068, %v67, 0
  %v1315 = vsel %vm1072, %v1310, 0
  %1317 = vmatprep.subr.bf16.mxu0 0
  %1318 = vmatpush1.bf16.msra.mxu0 0
  %1319 = vmatprep.subr.bf16.mxu0 0
  %1320 = vmatpush1.bf16.msra.mxu0 0
  %1321 = vmatprep.subr.bf16.mxu0 0
  %1322 = vmatpush1.bf16.msra.mxu0 0
  %1323 = vmatprep.subr.bf16.mxu0 0
  %1324 = vmatpush1.bf16.msra.mxu0 0
  %1325 = vmatprep.subr.bf16.mxu0 0
  %1326 = vmatpush1.bf16.msra.mxu0 0
  %1327 = vmatprep.subr.bf16.mxu0 0
  %1328 = vmatpush1.bf16.msra.mxu0 0
  %1329 = vmatprep.subr.bf16.mxu0 0
  %1330 = vmatpush1.bf16.msra.mxu0 0
  %1331 = vmatprep.subr.bf16.mxu0 0
  %1332 = vmatpush1.bf16.msra.mxu0 %v1315
  %1333 = vmatprep.subr.bf16.mxu0 0
  %1334 = vmatpush2.bf16.msra.mxu0 0
  %1335 = vmatprep.subr.bf16.mxu0 0
  %1336 = vmatpush2.bf16.msra.mxu0 0
  %1337 = vmatprep.subr.bf16.mxu0 0
  %1338 = vmatpush2.bf16.msra.mxu0 0
  %1339 = vmatprep.subr.bf16.mxu0 0
  %1340 = vmatpush2.bf16.msra.mxu0 0
  %1341 = vmatprep.subr.bf16.mxu0 0
  %1342 = vmatpush2.bf16.msra.mxu0 0
  %1343 = vmatprep.subr.bf16.mxu0 0
  %1344 = vmatpush2.bf16.msra.mxu0 0
  %1345 = vmatprep.subr.bf16.mxu0 0
  %1346 = vmatpush2.bf16.msra.mxu0 0
  %1347 = vmatprep.subr.bf16.mxu0 0
  %1348 = vmatpush2.bf16.msra.mxu0 0
  %1349 = vmatprep.mubr.bf16.mxu0 0
  %1350 = vmatmul.mubr.bf16.gmra.mxu0 %v1312
  %v1351 = vpop.f32.mrf.mxu0
  %v1352 = vadd.f32 0.0, %v1351
  %v1353 = vpop.f32.mrf.mxu0
  %v1354 = vpop.f32.mrf.mxu0
  %v1355 = vpop.f32.mrf.mxu0
  %1356 = vdwg.mxu0
  %v1357 = vadd.f32 %v1308, %v1352
  %1358 = vrot.lane.b32.xlu0 %v1065, 108
  %v1359 = vpop.permute.xlu0 %1358
  %v1361 = vsel %vm1068, %v68, 0
  %v1364 = vsel %vm1072, %v1359, 0
  %1366 = vmatprep.subr.bf16.mxu0 0
  %1367 = vmatpush1.bf16.msra.mxu0 0
  %1368 = vmatprep.subr.bf16.mxu0 0
  %1369 = vmatpush1.bf16.msra.mxu0 0
  %1370 = vmatprep.subr.bf16.mxu0 0
  %1371 = vmatpush1.bf16.msra.mxu0 0
  %1372 = vmatprep.subr.bf16.mxu0 0
  %1373 = vmatpush1.bf16.msra.mxu0 0
  %1374 = vmatprep.subr.bf16.mxu0 0
  %1375 = vmatpush1.bf16.msra.mxu0 0
  %1376 = vmatprep.subr.bf16.mxu0 0
  %1377 = vmatpush1.bf16.msra.mxu0 0
  %1378 = vmatprep.subr.bf16.mxu0 0
  %1379 = vmatpush1.bf16.msra.mxu0 0
  %1380 = vmatprep.subr.bf16.mxu0 0
  %1381 = vmatpush1.bf16.msra.mxu0 %v1364
  %1382 = vmatprep.subr.bf16.mxu0 0
  %1383 = vmatpush2.bf16.msra.mxu0 0
  %1384 = vmatprep.subr.bf16.mxu0 0
  %1385 = vmatpush2.bf16.msra.mxu0 0
  %1386 = vmatprep.subr.bf16.mxu0 0
  %1387 = vmatpush2.bf16.msra.mxu0 0
  %1388 = vmatprep.subr.bf16.mxu0 0
  %1389 = vmatpush2.bf16.msra.mxu0 0
  %1390 = vmatprep.subr.bf16.mxu0 0
  %1391 = vmatpush2.bf16.msra.mxu0 0
  %1392 = vmatprep.subr.bf16.mxu0 0
  %1393 = vmatpush2.bf16.msra.mxu0 0
  %1394 = vmatprep.subr.bf16.mxu0 0
  %1395 = vmatpush2.bf16.msra.mxu0 0
  %1396 = vmatprep.subr.bf16.mxu0 0
  %1397 = vmatpush2.bf16.msra.mxu0 0
  %1398 = vmatprep.mubr.bf16.mxu0 0
  %1399 = vmatmul.mubr.bf16.gmra.mxu0 %v1361
  %v1400 = vpop.f32.mrf.mxu0
  %v1401 = vadd.f32 0.0, %v1400
  %v1402 = vpop.f32.mrf.mxu0
  %v1403 = vpop.f32.mrf.mxu0
  %v1404 = vpop.f32.mrf.mxu0
  %1405 = vdwg.mxu0
  %v1406 = vadd.f32 %v1357, %v1401
  %1407 = vrot.lane.b32.xlu0 %v1065, 107
  %v1408 = vpop.permute.xlu0 %1407
  %v1410 = vsel %vm1068, %v69, 0
  %v1413 = vsel %vm1072, %v1408, 0
  %1415 = vmatprep.subr.bf16.mxu0 0
  %1416 = vmatpush1.bf16.msra.mxu0 0
  %1417 = vmatprep.subr.bf16.mxu0 0
  %1418 = vmatpush1.bf16.msra.mxu0 0
  %1419 = vmatprep.subr.bf16.mxu0 0
  %1420 = vmatpush1.bf16.msra.mxu0 0
  %1421 = vmatprep.subr.bf16.mxu0 0
  %1422 = vmatpush1.bf16.msra.mxu0 0
  %1423 = vmatprep.subr.bf16.mxu0 0
  %1424 = vmatpush1.bf16.msra.mxu0 0
  %1425 = vmatprep.subr.bf16.mxu0 0
  %1426 = vmatpush1.bf16.msra.mxu0 0
  %1427 = vmatprep.subr.bf16.mxu0 0
  %1428 = vmatpush1.bf16.msra.mxu0 0
  %1429 = vmatprep.subr.bf16.mxu0 0
  %1430 = vmatpush1.bf16.msra.mxu0 %v1413
  %1431 = vmatprep.subr.bf16.mxu0 0
  %1432 = vmatpush2.bf16.msra.mxu0 0
  %1433 = vmatprep.subr.bf16.mxu0 0
  %1434 = vmatpush2.bf16.msra.mxu0 0
  %1435 = vmatprep.subr.bf16.mxu0 0
  %1436 = vmatpush2.bf16.msra.mxu0 0
  %1437 = vmatprep.subr.bf16.mxu0 0
  %1438 = vmatpush2.bf16.msra.mxu0 0
  %1439 = vmatprep.subr.bf16.mxu0 0
  %1440 = vmatpush2.bf16.msra.mxu0 0
  %1441 = vmatprep.subr.bf16.mxu0 0
  %1442 = vmatpush2.bf16.msra.mxu0 0
  %1443 = vmatprep.subr.bf16.mxu0 0
  %1444 = vmatpush2.bf16.msra.mxu0 0
  %1445 = vmatprep.subr.bf16.mxu0 0
  %1446 = vmatpush2.bf16.msra.mxu0 0
  %1447 = vmatprep.mubr.bf16.mxu0 0
  %1448 = vmatmul.mubr.bf16.gmra.mxu0 %v1410
  %v1449 = vpop.f32.mrf.mxu0
  %v1450 = vadd.f32 0.0, %v1449
  %v1451 = vpop.f32.mrf.mxu0
  %v1452 = vpop.f32.mrf.mxu0
  %v1453 = vpop.f32.mrf.mxu0
  %1454 = vdwg.mxu0
  %v1455 = vadd.f32 %v1406, %v1450
  %1456 = vrot.lane.b32.xlu0 %v1065, 106
  %v1457 = vpop.permute.xlu0 %1456
  %v1459 = vsel %vm1068, %v70, 0
  %v1462 = vsel %vm1072, %v1457, 0
  %1464 = vmatprep.subr.bf16.mxu0 0
  %1465 = vmatpush1.bf16.msra.mxu0 0
  %1466 = vmatprep.subr.bf16.mxu0 0
  %1467 = vmatpush1.bf16.msra.mxu0 0
  %1468 = vmatprep.subr.bf16.mxu0 0
  %1469 = vmatpush1.bf16.msra.mxu0 0
  %1470 = vmatprep.subr.bf16.mxu0 0
  %1471 = vmatpush1.bf16.msra.mxu0 0
  %1472 = vmatprep.subr.bf16.mxu0 0
  %1473 = vmatpush1.bf16.msra.mxu0 0
  %1474 = vmatprep.subr.bf16.mxu0 0
  %1475 = vmatpush1.bf16.msra.mxu0 0
  %1476 = vmatprep.subr.bf16.mxu0 0
  %1477 = vmatpush1.bf16.msra.mxu0 0
  %1478 = vmatprep.subr.bf16.mxu0 0
  %1479 = vmatpush1.bf16.msra.mxu0 %v1462
  %1480 = vmatprep.subr.bf16.mxu0 0
  %1481 = vmatpush2.bf16.msra.mxu0 0
  %1482 = vmatprep.subr.bf16.mxu0 0
  %1483 = vmatpush2.bf16.msra.mxu0 0
  %1484 = vmatprep.subr.bf16.mxu0 0
  %1485 = vmatpush2.bf16.msra.mxu0 0
  %1486 = vmatprep.subr.bf16.mxu0 0
  %1487 = vmatpush2.bf16.msra.mxu0 0
  %1488 = vmatprep.subr.bf16.mxu0 0
  %1489 = vmatpush2.bf16.msra.mxu0 0
  %1490 = vmatprep.subr.bf16.mxu0 0
  %1491 = vmatpush2.bf16.msra.mxu0 0
  %1492 = vmatprep.subr.bf16.mxu0 0
  %1493 = vmatpush2.bf16.msra.mxu0 0
  %1494 = vmatprep.subr.bf16.mxu0 0
  %1495 = vmatpush2.bf16.msra.mxu0 0
  %1496 = vmatprep.mubr.bf16.mxu0 0
  %1497 = vmatmul.mubr.bf16.gmra.mxu0 %v1459
  %v1498 = vpop.f32.mrf.mxu0
  %v1499 = vadd.f32 0.0, %v1498
  %v1500 = vpop.f32.mrf.mxu0
  %v1501 = vpop.f32.mrf.mxu0
  %v1502 = vpop.f32.mrf.mxu0
  %1503 = vdwg.mxu0
  %v1504 = vadd.f32 %v1455, %v1499
  %v1505 = vld [vmem:[%s10] sm:$0xff]
  %1507 = vset.pattern.permute.xlu0 0
  %1508 = vperm.xlu0 %1507, %v1505
  %v1509 = vpop.permute.xlu0 %1508
  %v1511 = vadd.f32 %v1504, %v1509
  %v1512 = vadd.f32 %v1511, %v1030
  %v1513 = vld [vmem:[%s11] sm:$0xff]
  %1515 = vset.pattern.permute.xlu0 0
  %1516 = vperm.xlu0 %1515, %v1513
  %v1517 = vpop.permute.xlu0 %1516
  %v1519 = vadd.f32 %v1512, %v1517
  %vm1520 = vcmask 654336
  %1521 = vst.msk [vmem:[%s12] sm:$0xff] %vm1520, %v1519
  %s1522 = scalar_lea.vmem %s0, 8
  %v1523 = vld [vmem:[%s1522] sm:$0x3]
  %v1524 = vld [vmem:[%s1522 + $0x2] sm:$0x3]
  %v1525 = vld [vmem:[%s1522 + $0x4] sm:$0x3]
  %v1526 = vld [vmem:[%s1522 + $0x6] sm:$0x3]
  %v1527 = vunpack.c.l.bf16 %v1523
  %v1528 = vunpack.c.l.bf16 %v1524
  %v1529 = vunpack.c.l.bf16 %v1525
  %v1530 = vunpack.c.l.bf16 %v1526
  %v1531 = vmul.f32 %v1527, %v89
  %v1532 = vmul.f32 %v1528, %v89
  %v1533 = vmul.f32 %v1529, %v89
  %v1534 = vmul.f32 %v1530, %v89
  %v1535 = vadd.f32 %v1531, %v98
  %v1536 = vadd.f32 %v1532, %v98
  %v1537 = vadd.f32 %v1533, %v98
  %v1538 = vadd.f32 %v1534, %v98
  %v1539 = vmax.f32 %v1535, 0.0
  %v1540 = vmax.f32 %v1536, 0.0
  %v1541 = vmax.f32 %v1537, 0.0
  %v1542 = vmax.f32 %v1538, 0.0
  %v1543 = vmul.f32 %v1539, %v115
  %v1544 = vmul.f32 %v1540, %v119
  %v1545 = vmul.f32 %v1541, %v123
  %v1546 = vmul.f32 %v1542, %v127
  %v1547 = vpack.c.bf16 %v1543, %v1543
  %v1548 = vpack.c.bf16 %v1544, %v1544
  %v1549 = vpack.c.bf16 %v1545, %v1545
  %v1550 = vpack.c.bf16 %v1546, %v1546
  %v1552 = vsel %vm144, %v1548, 0
  %1554 = vmatprep.subr.bf16.mxu0 0
  %1555 = vmatpush1.bf16.msra.mxu0 0
  %1556 = vmatprep.subr.bf16.mxu0 0
  %1557 = vmatpush1.bf16.msra.mxu0 0
  %1558 = vmatprep.subr.bf16.mxu0 0
  %1559 = vmatpush1.bf16.msra.mxu0 0
  %1560 = vmatprep.subr.bf16.mxu0 0
  %1561 = vmatpush1.bf16.msra.mxu0 0
  %1562 = vmatprep.subr.bf16.mxu0 0
  %1563 = vmatpush1.bf16.msra.mxu0 0
  %1564 = vmatprep.subr.bf16.mxu0 0
  %1565 = vmatpush1.bf16.msra.mxu0 0
  %1566 = vmatprep.subr.bf16.mxu0 0
  %1567 = vmatpush1.bf16.msra.mxu0 0
  %1568 = vmatprep.subr.bf16.mxu0 0
  %1569 = vmatpush1.bf16.msra.mxu0 %v1552
  %1570 = vmatprep.subr.bf16.mxu0 0
  %1571 = vmatpush2.bf16.msra.mxu0 0
  %1572 = vmatprep.subr.bf16.mxu0 0
  %1573 = vmatpush2.bf16.msra.mxu0 0
  %1574 = vmatprep.subr.bf16.mxu0 0
  %1575 = vmatpush2.bf16.msra.mxu0 0
  %1576 = vmatprep.subr.bf16.mxu0 0
  %1577 = vmatpush2.bf16.msra.mxu0 0
  %1578 = vmatprep.subr.bf16.mxu0 0
  %1579 = vmatpush2.bf16.msra.mxu0 0
  %1580 = vmatprep.subr.bf16.mxu0 0
  %1581 = vmatpush2.bf16.msra.mxu0 0
  %1582 = vmatprep.subr.bf16.mxu0 0
  %1583 = vmatpush2.bf16.msra.mxu0 0
  %1584 = vmatprep.subr.bf16.mxu0 0
  %1585 = vmatpush2.bf16.msra.mxu0 0
  %1586 = vmatprep.mubr.bf16.mxu0 0
  %1587 = vmatmul.mubr.bf16.gmra.mxu0 %v142
  %v1588 = vpop.f32.mrf.mxu0
  %v1589 = vadd.f32 0.0, %v1588
  %v1590 = vpop.f32.mrf.mxu0
  %v1591 = vpop.f32.mrf.mxu0
  %v1592 = vpop.f32.mrf.mxu0
  %1593 = vdwg.mxu0
  %v1595 = vsel %vm144, %v1547, 0
  %1597 = vmatprep.subr.bf16.mxu0 0
  %1598 = vmatpush1.bf16.msra.mxu0 0
  %1599 = vmatprep.subr.bf16.mxu0 0
  %1600 = vmatpush1.bf16.msra.mxu0 0
  %1601 = vmatprep.subr.bf16.mxu0 0
  %1602 = vmatpush1.bf16.msra.mxu0 0
  %1603 = vmatprep.subr.bf16.mxu0 0
  %1604 = vmatpush1.bf16.msra.mxu0 0
  %1605 = vmatprep.subr.bf16.mxu0 0
  %1606 = vmatpush1.bf16.msra.mxu0 0
  %1607 = vmatprep.subr.bf16.mxu0 0
  %1608 = vmatpush1.bf16.msra.mxu0 0
  %1609 = vmatprep.subr.bf16.mxu0 0
  %1610 = vmatpush1.bf16.msra.mxu0 0
  %1611 = vmatprep.subr.bf16.mxu0 0
  %1612 = vmatpush1.bf16.msra.mxu0 %v1595
  %1613 = vmatprep.subr.bf16.mxu0 0
  %1614 = vmatpush2.bf16.msra.mxu0 0
  %1615 = vmatprep.subr.bf16.mxu0 0
  %1616 = vmatpush2.bf16.msra.mxu0 0
  %1617 = vmatprep.subr.bf16.mxu0 0
  %1618 = vmatpush2.bf16.msra.mxu0 0
  %1619 = vmatprep.subr.bf16.mxu0 0
  %1620 = vmatpush2.bf16.msra.mxu0 0
  %1621 = vmatprep.subr.bf16.mxu0 0
  %1622 = vmatpush2.bf16.msra.mxu0 0
  %1623 = vmatprep.subr.bf16.mxu0 0
  %1624 = vmatpush2.bf16.msra.mxu0 0
  %1625 = vmatprep.subr.bf16.mxu0 0
  %1626 = vmatpush2.bf16.msra.mxu0 0
  %1627 = vmatprep.subr.bf16.mxu0 0
  %1628 = vmatpush2.bf16.msra.mxu0 0
  %1629 = vmatprep.mubr.bf16.mxu0 0
  %1630 = vmatmul.mubr.bf16.gmra.mxu0 %v189
  %v1631 = vpop.f32.mrf.mxu0
  %v1632 = vadd.f32 %v1589, %v1631
  %v1633 = vpop.f32.mrf.mxu0
  %v1634 = vpop.f32.mrf.mxu0
  %v1635 = vpop.f32.mrf.mxu0
  %1636 = vdwg.mxu0
  %v1638 = vsel %vm144, %v1524, 0
  %1640 = vmatprep.subr.bf16.mxu0 0
  %1641 = vmatpush1.bf16.msra.mxu0 0
  %1642 = vmatprep.subr.bf16.mxu0 0
  %1643 = vmatpush1.bf16.msra.mxu0 0
  %1644 = vmatprep.subr.bf16.mxu0 0
  %1645 = vmatpush1.bf16.msra.mxu0 0
  %1646 = vmatprep.subr.bf16.mxu0 0
  %1647 = vmatpush1.bf16.msra.mxu0 0
  %1648 = vmatprep.subr.bf16.mxu0 0
  %1649 = vmatpush1.bf16.msra.mxu0 0
  %1650 = vmatprep.subr.bf16.mxu0 0
  %1651 = vmatpush1.bf16.msra.mxu0 0
  %1652 = vmatprep.subr.bf16.mxu0 0
  %1653 = vmatpush1.bf16.msra.mxu0 0
  %1654 = vmatprep.subr.bf16.mxu0 0
  %1655 = vmatpush1.bf16.msra.mxu0 %v1638
  %1656 = vmatprep.subr.bf16.mxu0 0
  %1657 = vmatpush2.bf16.msra.mxu0 0
  %1658 = vmatprep.subr.bf16.mxu0 0
  %1659 = vmatpush2.bf16.msra.mxu0 0
  %1660 = vmatprep.subr.bf16.mxu0 0
  %1661 = vmatpush2.bf16.msra.mxu0 0
  %1662 = vmatprep.subr.bf16.mxu0 0
  %1663 = vmatpush2.bf16.msra.mxu0 0
  %1664 = vmatprep.subr.bf16.mxu0 0
  %1665 = vmatpush2.bf16.msra.mxu0 0
  %1666 = vmatprep.subr.bf16.mxu0 0
  %1667 = vmatpush2.bf16.msra.mxu0 0
  %1668 = vmatprep.subr.bf16.mxu0 0
  %1669 = vmatpush2.bf16.msra.mxu0 0
  %1670 = vmatprep.subr.bf16.mxu0 0
  %1671 = vmatpush2.bf16.msra.mxu0 0
  %1672 = vmatprep.mubr.bf16.mxu0 0
  %1673 = vmatmul.mubr.bf16.gmra.mxu0 %v235
  %v1674 = vpop.f32.mrf.mxu0
  %v1675 = vadd.f32 0.0, %v1674
  %v1676 = vpop.f32.mrf.mxu0
  %v1677 = vpop.f32.mrf.mxu0
  %v1678 = vpop.f32.mrf.mxu0
  %1679 = vdwg.mxu0
  %v1681 = vsel %vm144, %v1523, 0
  %1683 = vmatprep.subr.bf16.mxu0 0
  %1684 = vmatpush1.bf16.msra.mxu0 0
  %1685 = vmatprep.subr.bf16.mxu0 0
  %1686 = vmatpush1.bf16.msra.mxu0 0
  %1687 = vmatprep.subr.bf16.mxu0 0
  %1688 = vmatpush1.bf16.msra.mxu0 0
  %1689 = vmatprep.subr.bf16.mxu0 0
  %1690 = vmatpush1.bf16.msra.mxu0 0
  %1691 = vmatprep.subr.bf16.mxu0 0
  %1692 = vmatpush1.bf16.msra.mxu0 0
  %1693 = vmatprep.subr.bf16.mxu0 0
  %1694 = vmatpush1.bf16.msra.mxu0 0
  %1695 = vmatprep.subr.bf16.mxu0 0
  %1696 = vmatpush1.bf16.msra.mxu0 0
  %1697 = vmatprep.subr.bf16.mxu0 0
  %1698 = vmatpush1.bf16.msra.mxu0 %v1681
  %1699 = vmatprep.subr.bf16.mxu0 0
  %1700 = vmatpush2.bf16.msra.mxu0 0
  %1701 = vmatprep.subr.bf16.mxu0 0
  %1702 = vmatpush2.bf16.msra.mxu0 0
  %1703 = vmatprep.subr.bf16.mxu0 0
  %1704 = vmatpush2.bf16.msra.mxu0 0
  %1705 = vmatprep.subr.bf16.mxu0 0
  %1706 = vmatpush2.bf16.msra.mxu0 0
  %1707 = vmatprep.subr.bf16.mxu0 0
  %1708 = vmatpush2.bf16.msra.mxu0 0
  %1709 = vmatprep.subr.bf16.mxu0 0
  %1710 = vmatpush2.bf16.msra.mxu0 0
  %1711 = vmatprep.subr.bf16.mxu0 0
  %1712 = vmatpush2.bf16.msra.mxu0 0
  %1713 = vmatprep.subr.bf16.mxu0 0
  %1714 = vmatpush2.bf16.msra.mxu0 0
  %1715 = vmatprep.mubr.bf16.mxu0 0
  %1716 = vmatmul.mubr.bf16.gmra.mxu0 %v281
  %v1717 = vpop.f32.mrf.mxu0
  %v1718 = vadd.f32 %v1675, %v1717
  %v1719 = vpop.f32.mrf.mxu0
  %v1720 = vpop.f32.mrf.mxu0
  %v1721 = vpop.f32.mrf.mxu0
  %1722 = vdwg.mxu0
  %1724 = vrot.lane.b32.xlu0 %v1547, 127
  %v1725 = vpop.permute.xlu0 %1724
  %v1727 = vsel %vm144, %v1725, 0
  %1729 = vmatprep.subr.bf16.mxu0 0
  %1730 = vmatpush1.bf16.msra.mxu0 0
  %1731 = vmatprep.subr.bf16.mxu0 0
  %1732 = vmatpush1.bf16.msra.mxu0 0
  %1733 = vmatprep.subr.bf16.mxu0 0
  %1734 = vmatpush1.bf16.msra.mxu0 0
  %1735 = vmatprep.subr.bf16.mxu0 0
  %1736 = vmatpush1.bf16.msra.mxu0 0
  %1737 = vmatprep.subr.bf16.mxu0 0
  %1738 = vmatpush1.bf16.msra.mxu0 0
  %1739 = vmatprep.subr.bf16.mxu0 0
  %1740 = vmatpush1.bf16.msra.mxu0 0
  %1741 = vmatprep.subr.bf16.mxu0 0
  %1742 = vmatpush1.bf16.msra.mxu0 0
  %1743 = vmatprep.subr.bf16.mxu0 0
  %1744 = vmatpush1.bf16.msra.mxu0 %v1727
  %1745 = vmatprep.subr.bf16.mxu0 0
  %1746 = vmatpush2.bf16.msra.mxu0 0
  %1747 = vmatprep.subr.bf16.mxu0 0
  %1748 = vmatpush2.bf16.msra.mxu0 0
  %1749 = vmatprep.subr.bf16.mxu0 0
  %1750 = vmatpush2.bf16.msra.mxu0 0
  %1751 = vmatprep.subr.bf16.mxu0 0
  %1752 = vmatpush2.bf16.msra.mxu0 0
  %1753 = vmatprep.subr.bf16.mxu0 0
  %1754 = vmatpush2.bf16.msra.mxu0 0
  %1755 = vmatprep.subr.bf16.mxu0 0
  %1756 = vmatpush2.bf16.msra.mxu0 0
  %1757 = vmatprep.subr.bf16.mxu0 0
  %1758 = vmatpush2.bf16.msra.mxu0 0
  %1759 = vmatprep.subr.bf16.mxu0 0
  %1760 = vmatpush2.bf16.msra.mxu0 0
  %1761 = vmatprep.mubr.bf16.mxu0 0
  %1762 = vmatmul.mubr.bf16.gmra.mxu0 %v330
  %v1763 = vpop.f32.mrf.mxu0
  %v1764 = vadd.f32 0.0, %v1763
  %v1765 = vpop.f32.mrf.mxu0
  %v1766 = vpop.f32.mrf.mxu0
  %v1767 = vpop.f32.mrf.mxu0
  %1768 = vdwg.mxu0
  %v1769 = vadd.f32 %v1632, %v1764
  %v1772 = vunpack.c.l.s4 1983009808
  %v1773 = vunpack.c.0.s8 %v1772
  %v1774 = vlaneseq
  %v1775 = vshrl.u32 %v1774, 7
  %v1776 = vsub.s32 %v1773, %v1775
  %v1777 = vrot.slane %v1523, %v1776
  %1778 = vrot.lane.b32.xlu0 %v1777, 127
  %v1779 = vpop.permute.xlu0 %1778
  %v1781 = vsel %vm144, %v1779, 0
  %1783 = vmatprep.subr.bf16.mxu0 0
  %1784 = vmatpush1.bf16.msra.mxu0 0
  %1785 = vmatprep.subr.bf16.mxu0 0
  %1786 = vmatpush1.bf16.msra.mxu0 0
  %1787 = vmatprep.subr.bf16.mxu0 0
  %1788 = vmatpush1.bf16.msra.mxu0 0
  %1789 = vmatprep.subr.bf16.mxu0 0
  %1790 = vmatpush1.bf16.msra.mxu0 0
  %1791 = vmatprep.subr.bf16.mxu0 0
  %1792 = vmatpush1.bf16.msra.mxu0 0
  %1793 = vmatprep.subr.bf16.mxu0 0
  %1794 = vmatpush1.bf16.msra.mxu0 0
  %1795 = vmatprep.subr.bf16.mxu0 0
  %1796 = vmatpush1.bf16.msra.mxu0 0
  %1797 = vmatprep.subr.bf16.mxu0 0
  %1798 = vmatpush1.bf16.msra.mxu0 %v1781
  %1799 = vmatprep.subr.bf16.mxu0 0
  %1800 = vmatpush2.bf16.msra.mxu0 0
  %1801 = vmatprep.subr.bf16.mxu0 0
  %1802 = vmatpush2.bf16.msra.mxu0 0
  %1803 = vmatprep.subr.bf16.mxu0 0
  %1804 = vmatpush2.bf16.msra.mxu0 0
  %1805 = vmatprep.subr.bf16.mxu0 0
  %1806 = vmatpush2.bf16.msra.mxu0 0
  %1807 = vmatprep.subr.bf16.mxu0 0
  %1808 = vmatpush2.bf16.msra.mxu0 0
  %1809 = vmatprep.subr.bf16.mxu0 0
  %1810 = vmatpush2.bf16.msra.mxu0 0
  %1811 = vmatprep.subr.bf16.mxu0 0
  %1812 = vmatpush2.bf16.msra.mxu0 0
  %1813 = vmatprep.subr.bf16.mxu0 0
  %1814 = vmatpush2.bf16.msra.mxu0 0
  %1815 = vmatprep.mubr.bf16.mxu0 0
  %1816 = vmatmul.mubr.bf16.gmra.mxu0 %v387
  %v1817 = vpop.f32.mrf.mxu0
  %v1818 = vadd.f32 0.0, %v1817
  %v1819 = vpop.f32.mrf.mxu0
  %v1820 = vpop.f32.mrf.mxu0
  %v1821 = vpop.f32.mrf.mxu0
  %1822 = vdwg.mxu0
  %v1823 = vadd.f32 %v1718, %v1818
  %v1825 = vsel %vm144, %v1549, 0
  %1827 = vmatprep.subr.bf16.mxu0 0
  %1828 = vmatpush1.bf16.msra.mxu0 0
  %1829 = vmatprep.subr.bf16.mxu0 0
  %1830 = vmatpush1.bf16.msra.mxu0 0
  %1831 = vmatprep.subr.bf16.mxu0 0
  %1832 = vmatpush1.bf16.msra.mxu0 0
  %1833 = vmatprep.subr.bf16.mxu0 0
  %1834 = vmatpush1.bf16.msra.mxu0 0
  %1835 = vmatprep.subr.bf16.mxu0 0
  %1836 = vmatpush1.bf16.msra.mxu0 0
  %1837 = vmatprep.subr.bf16.mxu0 0
  %1838 = vmatpush1.bf16.msra.mxu0 0
  %1839 = vmatprep.subr.bf16.mxu0 0
  %1840 = vmatpush1.bf16.msra.mxu0 0
  %1841 = vmatprep.subr.bf16.mxu0 0
  %1842 = vmatpush1.bf16.msra.mxu0 %v1825
  %1843 = vmatprep.subr.bf16.mxu0 0
  %1844 = vmatpush2.bf16.msra.mxu0 0
  %1845 = vmatprep.subr.bf16.mxu0 0
  %1846 = vmatpush2.bf16.msra.mxu0 0
  %1847 = vmatprep.subr.bf16.mxu0 0
  %1848 = vmatpush2.bf16.msra.mxu0 0
  %1849 = vmatprep.subr.bf16.mxu0 0
  %1850 = vmatpush2.bf16.msra.mxu0 0
  %1851 = vmatprep.subr.bf16.mxu0 0
  %1852 = vmatpush2.bf16.msra.mxu0 0
  %1853 = vmatprep.subr.bf16.mxu0 0
  %1854 = vmatpush2.bf16.msra.mxu0 0
  %1855 = vmatprep.subr.bf16.mxu0 0
  %1856 = vmatpush2.bf16.msra.mxu0 0
  %1857 = vmatprep.subr.bf16.mxu0 0
  %1858 = vmatpush2.bf16.msra.mxu0 0
  %1859 = vmatprep.mubr.bf16.mxu0 0
  %1860 = vmatmul.mubr.bf16.gmra.mxu0 %v434
  %v1861 = vpop.f32.mrf.mxu0
  %v1862 = vadd.f32 0.0, %v1861
  %v1863 = vpop.f32.mrf.mxu0
  %v1864 = vpop.f32.mrf.mxu0
  %v1865 = vpop.f32.mrf.mxu0
  %1866 = vdwg.mxu0
  %v1867 = vadd.f32 %v1769, %v1862
  %v1869 = vsel %vm144, %v1525, 0
  %1871 = vmatprep.subr.bf16.mxu0 0
  %1872 = vmatpush1.bf16.msra.mxu0 0
  %1873 = vmatprep.subr.bf16.mxu0 0
  %1874 = vmatpush1.bf16.msra.mxu0 0
  %1875 = vmatprep.subr.bf16.mxu0 0
  %1876 = vmatpush1.bf16.msra.mxu0 0
  %1877 = vmatprep.subr.bf16.mxu0 0
  %1878 = vmatpush1.bf16.msra.mxu0 0
  %1879 = vmatprep.subr.bf16.mxu0 0
  %1880 = vmatpush1.bf16.msra.mxu0 0
  %1881 = vmatprep.subr.bf16.mxu0 0
  %1882 = vmatpush1.bf16.msra.mxu0 0
  %1883 = vmatprep.subr.bf16.mxu0 0
  %1884 = vmatpush1.bf16.msra.mxu0 0
  %1885 = vmatprep.subr.bf16.mxu0 0
  %1886 = vmatpush1.bf16.msra.mxu0 %v1869
  %1887 = vmatprep.subr.bf16.mxu0 0
  %1888 = vmatpush2.bf16.msra.mxu0 0
  %1889 = vmatprep.subr.bf16.mxu0 0
  %1890 = vmatpush2.bf16.msra.mxu0 0
  %1891 = vmatprep.subr.bf16.mxu0 0
  %1892 = vmatpush2.bf16.msra.mxu0 0
  %1893 = vmatprep.subr.bf16.mxu0 0
  %1894 = vmatpush2.bf16.msra.mxu0 0
  %1895 = vmatprep.subr.bf16.mxu0 0
  %1896 = vmatpush2.bf16.msra.mxu0 0
  %1897 = vmatprep.subr.bf16.mxu0 0
  %1898 = vmatpush2.bf16.msra.mxu0 0
  %1899 = vmatprep.subr.bf16.mxu0 0
  %1900 = vmatpush2.bf16.msra.mxu0 0
  %1901 = vmatprep.subr.bf16.mxu0 0
  %1902 = vmatpush2.bf16.msra.mxu0 0
  %1903 = vmatprep.mubr.bf16.mxu0 0
  %1904 = vmatmul.mubr.bf16.gmra.mxu0 %v481
  %v1905 = vpop.f32.mrf.mxu0
  %v1906 = vadd.f32 0.0, %v1905
  %v1907 = vpop.f32.mrf.mxu0
  %v1908 = vpop.f32.mrf.mxu0
  %v1909 = vpop.f32.mrf.mxu0
  %1910 = vdwg.mxu0
  %v1911 = vadd.f32 %v1823, %v1906
  %v1913 = vsel %vm144, %v1550, 0
  %1915 = vmatprep.subr.bf16.mxu0 0
  %1916 = vmatpush1.bf16.msra.mxu0 0
  %1917 = vmatprep.subr.bf16.mxu0 0
  %1918 = vmatpush1.bf16.msra.mxu0 0
  %1919 = vmatprep.subr.bf16.mxu0 0
  %1920 = vmatpush1.bf16.msra.mxu0 0
  %1921 = vmatprep.subr.bf16.mxu0 0
  %1922 = vmatpush1.bf16.msra.mxu0 0
  %1923 = vmatprep.subr.bf16.mxu0 0
  %1924 = vmatpush1.bf16.msra.mxu0 0
  %1925 = vmatprep.subr.bf16.mxu0 0
  %1926 = vmatpush1.bf16.msra.mxu0 0
  %1927 = vmatprep.subr.bf16.mxu0 0
  %1928 = vmatpush1.bf16.msra.mxu0 0
  %1929 = vmatprep.subr.bf16.mxu0 0
  %1930 = vmatpush1.bf16.msra.mxu0 %v1913
  %1931 = vmatprep.subr.bf16.mxu0 0
  %1932 = vmatpush2.bf16.msra.mxu0 0
  %1933 = vmatprep.subr.bf16.mxu0 0
  %1934 = vmatpush2.bf16.msra.mxu0 0
  %1935 = vmatprep.subr.bf16.mxu0 0
  %1936 = vmatpush2.bf16.msra.mxu0 0
  %1937 = vmatprep.subr.bf16.mxu0 0
  %1938 = vmatpush2.bf16.msra.mxu0 0
  %1939 = vmatprep.subr.bf16.mxu0 0
  %1940 = vmatpush2.bf16.msra.mxu0 0
  %1941 = vmatprep.subr.bf16.mxu0 0
  %1942 = vmatpush2.bf16.msra.mxu0 0
  %1943 = vmatprep.subr.bf16.mxu0 0
  %1944 = vmatpush2.bf16.msra.mxu0 0
  %1945 = vmatprep.subr.bf16.mxu0 0
  %1946 = vmatpush2.bf16.msra.mxu0 0
  %1947 = vmatprep.mubr.bf16.mxu0 0
  %1948 = vmatmul.mubr.bf16.gmra.mxu0 %v528
  %v1949 = vpop.f32.mrf.mxu0
  %v1950 = vadd.f32 0.0, %v1949
  %v1951 = vpop.f32.mrf.mxu0
  %v1952 = vpop.f32.mrf.mxu0
  %v1953 = vpop.f32.mrf.mxu0
  %1954 = vdwg.mxu0
  %v1955 = vadd.f32 %v1867, %v1950
  %v1957 = vsel %vm144, %v1526, 0
  %1959 = vmatprep.subr.bf16.mxu0 0
  %1960 = vmatpush1.bf16.msra.mxu0 0
  %1961 = vmatprep.subr.bf16.mxu0 0
  %1962 = vmatpush1.bf16.msra.mxu0 0
  %1963 = vmatprep.subr.bf16.mxu0 0
  %1964 = vmatpush1.bf16.msra.mxu0 0
  %1965 = vmatprep.subr.bf16.mxu0 0
  %1966 = vmatpush1.bf16.msra.mxu0 0
  %1967 = vmatprep.subr.bf16.mxu0 0
  %1968 = vmatpush1.bf16.msra.mxu0 0
  %1969 = vmatprep.subr.bf16.mxu0 0
  %1970 = vmatpush1.bf16.msra.mxu0 0
  %1971 = vmatprep.subr.bf16.mxu0 0
  %1972 = vmatpush1.bf16.msra.mxu0 0
  %1973 = vmatprep.subr.bf16.mxu0 0
  %1974 = vmatpush1.bf16.msra.mxu0 %v1957
  %1975 = vmatprep.subr.bf16.mxu0 0
  %1976 = vmatpush2.bf16.msra.mxu0 0
  %1977 = vmatprep.subr.bf16.mxu0 0
  %1978 = vmatpush2.bf16.msra.mxu0 0
  %1979 = vmatprep.subr.bf16.mxu0 0
  %1980 = vmatpush2.bf16.msra.mxu0 0
  %1981 = vmatprep.subr.bf16.mxu0 0
  %1982 = vmatpush2.bf16.msra.mxu0 0
  %1983 = vmatprep.subr.bf16.mxu0 0
  %1984 = vmatpush2.bf16.msra.mxu0 0
  %1985 = vmatprep.subr.bf16.mxu0 0
  %1986 = vmatpush2.bf16.msra.mxu0 0
  %1987 = vmatprep.subr.bf16.mxu0 0
  %1988 = vmatpush2.bf16.msra.mxu0 0
  %1989 = vmatprep.subr.bf16.mxu0 0
  %1990 = vmatpush2.bf16.msra.mxu0 0
  %1991 = vmatprep.mubr.bf16.mxu0 0
  %1992 = vmatmul.mubr.bf16.gmra.mxu0 %v575
  %v1993 = vpop.f32.mrf.mxu0
  %v1994 = vadd.f32 0.0, %v1993
  %v1995 = vpop.f32.mrf.mxu0
  %v1996 = vpop.f32.mrf.mxu0
  %v1997 = vpop.f32.mrf.mxu0
  %1998 = vdwg.mxu0
  %v1999 = vadd.f32 %v1911, %v1994
  %2001 = vrot.lane.b32.xlu0 %v1549, 127
  %v2002 = vpop.permute.xlu0 %2001
  %v2004 = vsel %vm144, %v2002, 0
  %2006 = vmatprep.subr.bf16.mxu0 0
  %2007 = vmatpush1.bf16.msra.mxu0 0
  %2008 = vmatprep.subr.bf16.mxu0 0
  %2009 = vmatpush1.bf16.msra.mxu0 0
  %2010 = vmatprep.subr.bf16.mxu0 0
  %2011 = vmatpush1.bf16.msra.mxu0 0
  %2012 = vmatprep.subr.bf16.mxu0 0
  %2013 = vmatpush1.bf16.msra.mxu0 0
  %2014 = vmatprep.subr.bf16.mxu0 0
  %2015 = vmatpush1.bf16.msra.mxu0 0
  %2016 = vmatprep.subr.bf16.mxu0 0
  %2017 = vmatpush1.bf16.msra.mxu0 0
  %2018 = vmatprep.subr.bf16.mxu0 0
  %2019 = vmatpush1.bf16.msra.mxu0 0
  %2020 = vmatprep.subr.bf16.mxu0 0
  %2021 = vmatpush1.bf16.msra.mxu0 %v2004
  %2022 = vmatprep.subr.bf16.mxu0 0
  %2023 = vmatpush2.bf16.msra.mxu0 0
  %2024 = vmatprep.subr.bf16.mxu0 0
  %2025 = vmatpush2.bf16.msra.mxu0 0
  %2026 = vmatprep.subr.bf16.mxu0 0
  %2027 = vmatpush2.bf16.msra.mxu0 0
  %2028 = vmatprep.subr.bf16.mxu0 0
  %2029 = vmatpush2.bf16.msra.mxu0 0
  %2030 = vmatprep.subr.bf16.mxu0 0
  %2031 = vmatpush2.bf16.msra.mxu0 0
  %2032 = vmatprep.subr.bf16.mxu0 0
  %2033 = vmatpush2.bf16.msra.mxu0 0
  %2034 = vmatprep.subr.bf16.mxu0 0
  %2035 = vmatpush2.bf16.msra.mxu0 0
  %2036 = vmatprep.subr.bf16.mxu0 0
  %2037 = vmatpush2.bf16.msra.mxu0 0
  %2038 = vmatprep.mubr.bf16.mxu0 0
  %2039 = vmatmul.mubr.bf16.gmra.mxu0 %v625
  %v2040 = vpop.f32.mrf.mxu0
  %v2041 = vadd.f32 0.0, %v2040
  %v2042 = vpop.f32.mrf.mxu0
  %v2043 = vpop.f32.mrf.mxu0
  %v2044 = vpop.f32.mrf.mxu0
  %2045 = vdwg.mxu0
  %v2046 = vadd.f32 %v1955, %v2041
  %v2049 = vunpack.c.l.s4 1983009808
  %v2050 = vunpack.c.0.s8 %v2049
  %v2051 = vlaneseq
  %v2052 = vshrl.u32 %v2051, 7
  %v2053 = vsub.s32 %v2050, %v2052
  %v2054 = vrot.slane %v1525, %v2053
  %2055 = vrot.lane.b32.xlu0 %v2054, 127
  %v2056 = vpop.permute.xlu0 %2055
  %v2058 = vsel %vm144, %v2056, 0
  %2060 = vmatprep.subr.bf16.mxu0 0
  %2061 = vmatpush1.bf16.msra.mxu0 0
  %2062 = vmatprep.subr.bf16.mxu0 0
  %2063 = vmatpush1.bf16.msra.mxu0 0
  %2064 = vmatprep.subr.bf16.mxu0 0
  %2065 = vmatpush1.bf16.msra.mxu0 0
  %2066 = vmatprep.subr.bf16.mxu0 0
  %2067 = vmatpush1.bf16.msra.mxu0 0
  %2068 = vmatprep.subr.bf16.mxu0 0
  %2069 = vmatpush1.bf16.msra.mxu0 0
  %2070 = vmatprep.subr.bf16.mxu0 0
  %2071 = vmatpush1.bf16.msra.mxu0 0
  %2072 = vmatprep.subr.bf16.mxu0 0
  %2073 = vmatpush1.bf16.msra.mxu0 0
  %2074 = vmatprep.subr.bf16.mxu0 0
  %2075 = vmatpush1.bf16.msra.mxu0 %v2058
  %2076 = vmatprep.subr.bf16.mxu0 0
  %2077 = vmatpush2.bf16.msra.mxu0 0
  %2078 = vmatprep.subr.bf16.mxu0 0
  %2079 = vmatpush2.bf16.msra.mxu0 0
  %2080 = vmatprep.subr.bf16.mxu0 0
  %2081 = vmatpush2.bf16.msra.mxu0 0
  %2082 = vmatprep.subr.bf16.mxu0 0
  %2083 = vmatpush2.bf16.msra.mxu0 0
  %2084 = vmatprep.subr.bf16.mxu0 0
  %2085 = vmatpush2.bf16.msra.mxu0 0
  %2086 = vmatprep.subr.bf16.mxu0 0
  %2087 = vmatpush2.bf16.msra.mxu0 0
  %2088 = vmatprep.subr.bf16.mxu0 0
  %2089 = vmatpush2.bf16.msra.mxu0 0
  %2090 = vmatprep.subr.bf16.mxu0 0
  %2091 = vmatpush2.bf16.msra.mxu0 0
  %2092 = vmatprep.mubr.bf16.mxu0 0
  %2093 = vmatmul.mubr.bf16.gmra.mxu0 %v682
  %v2094 = vpop.f32.mrf.mxu0
  %v2095 = vadd.f32 0.0, %v2094
  %v2096 = vpop.f32.mrf.mxu0
  %v2097 = vpop.f32.mrf.mxu0
  %v2098 = vpop.f32.mrf.mxu0
  %2099 = vdwg.mxu0
  %v2100 = vadd.f32 %v1999, %v2095
  %2101 = vrot.lane.b32.xlu0 %v1547, 118
  %v2102 = vpop.permute.xlu0 %2101
  %v2104 = vsel %vm144, %v2102, 0
  %2106 = vmatprep.subr.bf16.mxu0 0
  %2107 = vmatpush1.bf16.msra.mxu0 0
  %2108 = vmatprep.subr.bf16.mxu0 0
  %2109 = vmatpush1.bf16.msra.mxu0 0
  %2110 = vmatprep.subr.bf16.mxu0 0
  %2111 = vmatpush1.bf16.msra.mxu0 0
  %2112 = vmatprep.subr.bf16.mxu0 0
  %2113 = vmatpush1.bf16.msra.mxu0 0
  %2114 = vmatprep.subr.bf16.mxu0 0
  %2115 = vmatpush1.bf16.msra.mxu0 0
  %2116 = vmatprep.subr.bf16.mxu0 0
  %2117 = vmatpush1.bf16.msra.mxu0 0
  %2118 = vmatprep.subr.bf16.mxu0 0
  %2119 = vmatpush1.bf16.msra.mxu0 0
  %2120 = vmatprep.subr.bf16.mxu0 0
  %2121 = vmatpush1.bf16.msra.mxu0 %v2104
  %2122 = vmatprep.subr.bf16.mxu0 0
  %2123 = vmatpush2.bf16.msra.mxu0 0
  %2124 = vmatprep.subr.bf16.mxu0 0
  %2125 = vmatpush2.bf16.msra.mxu0 0
  %2126 = vmatprep.subr.bf16.mxu0 0
  %2127 = vmatpush2.bf16.msra.mxu0 0
  %2128 = vmatprep.subr.bf16.mxu0 0
  %2129 = vmatpush2.bf16.msra.mxu0 0
  %2130 = vmatprep.subr.bf16.mxu0 0
  %2131 = vmatpush2.bf16.msra.mxu0 0
  %2132 = vmatprep.subr.bf16.mxu0 0
  %2133 = vmatpush2.bf16.msra.mxu0 0
  %2134 = vmatprep.subr.bf16.mxu0 0
  %2135 = vmatpush2.bf16.msra.mxu0 0
  %2136 = vmatprep.subr.bf16.mxu0 0
  %2137 = vmatpush2.bf16.msra.mxu0 0
  %2138 = vmatprep.mubr.bf16.mxu0 0
  %2139 = vmatmul.mubr.bf16.gmra.mxu0 %v731
  %v2140 = vpop.f32.mrf.mxu0
  %v2141 = vadd.f32 0.0, %v2140
  %v2142 = vpop.f32.mrf.mxu0
  %v2143 = vpop.f32.mrf.mxu0
  %v2144 = vpop.f32.mrf.mxu0
  %2145 = vdwg.mxu0
  %v2146 = vadd.f32 %v2046, %v2141
  %2147 = vrot.lane.b32.xlu0 %v1777, 118
  %v2148 = vpop.permute.xlu0 %2147
  %v2150 = vsel %vm144, %v2148, 0
  %2152 = vmatprep.subr.bf16.mxu0 0
  %2153 = vmatpush1.bf16.msra.mxu0 0
  %2154 = vmatprep.subr.bf16.mxu0 0
  %2155 = vmatpush1.bf16.msra.mxu0 0
  %2156 = vmatprep.subr.bf16.mxu0 0
  %2157 = vmatpush1.bf16.msra.mxu0 0
  %2158 = vmatprep.subr.bf16.mxu0 0
  %2159 = vmatpush1.bf16.msra.mxu0 0
  %2160 = vmatprep.subr.bf16.mxu0 0
  %2161 = vmatpush1.bf16.msra.mxu0 0
  %2162 = vmatprep.subr.bf16.mxu0 0
  %2163 = vmatpush1.bf16.msra.mxu0 0
  %2164 = vmatprep.subr.bf16.mxu0 0
  %2165 = vmatpush1.bf16.msra.mxu0 0
  %2166 = vmatprep.subr.bf16.mxu0 0
  %2167 = vmatpush1.bf16.msra.mxu0 %v2150
  %2168 = vmatprep.subr.bf16.mxu0 0
  %2169 = vmatpush2.bf16.msra.mxu0 0
  %2170 = vmatprep.subr.bf16.mxu0 0
  %2171 = vmatpush2.bf16.msra.mxu0 0
  %2172 = vmatprep.subr.bf16.mxu0 0
  %2173 = vmatpush2.bf16.msra.mxu0 0
  %2174 = vmatprep.subr.bf16.mxu0 0
  %2175 = vmatpush2.bf16.msra.mxu0 0
  %2176 = vmatprep.subr.bf16.mxu0 0
  %2177 = vmatpush2.bf16.msra.mxu0 0
  %2178 = vmatprep.subr.bf16.mxu0 0
  %2179 = vmatpush2.bf16.msra.mxu0 0
  %2180 = vmatprep.subr.bf16.mxu0 0
  %2181 = vmatpush2.bf16.msra.mxu0 0
  %2182 = vmatprep.subr.bf16.mxu0 0
  %2183 = vmatpush2.bf16.msra.mxu0 0
  %2184 = vmatprep.mubr.bf16.mxu0 0
  %2185 = vmatmul.mubr.bf16.gmra.mxu0 %v780
  %v2186 = vpop.f32.mrf.mxu0
  %v2187 = vadd.f32 0.0, %v2186
  %v2188 = vpop.f32.mrf.mxu0
  %v2189 = vpop.f32.mrf.mxu0
  %v2190 = vpop.f32.mrf.mxu0
  %2191 = vdwg.mxu0
  %v2192 = vadd.f32 %v2100, %v2187
  %2194 = vrot.lane.b32.xlu0 %v1548, 118
  %v2195 = vpop.permute.xlu0 %2194
  %v2197 = vsel %vm144, %v2195, 0
  %2199 = vmatprep.subr.bf16.mxu0 0
  %2200 = vmatpush1.bf16.msra.mxu0 0
  %2201 = vmatprep.subr.bf16.mxu0 0
  %2202 = vmatpush1.bf16.msra.mxu0 0
  %2203 = vmatprep.subr.bf16.mxu0 0
  %2204 = vmatpush1.bf16.msra.mxu0 0
  %2205 = vmatprep.subr.bf16.mxu0 0
  %2206 = vmatpush1.bf16.msra.mxu0 0
  %2207 = vmatprep.subr.bf16.mxu0 0
  %2208 = vmatpush1.bf16.msra.mxu0 0
  %2209 = vmatprep.subr.bf16.mxu0 0
  %2210 = vmatpush1.bf16.msra.mxu0 0
  %2211 = vmatprep.subr.bf16.mxu0 0
  %2212 = vmatpush1.bf16.msra.mxu0 0
  %2213 = vmatprep.subr.bf16.mxu0 0
  %2214 = vmatpush1.bf16.msra.mxu0 %v2197
  %2215 = vmatprep.subr.bf16.mxu0 0
  %2216 = vmatpush2.bf16.msra.mxu0 0
  %2217 = vmatprep.subr.bf16.mxu0 0
  %2218 = vmatpush2.bf16.msra.mxu0 0
  %2219 = vmatprep.subr.bf16.mxu0 0
  %2220 = vmatpush2.bf16.msra.mxu0 0
  %2221 = vmatprep.subr.bf16.mxu0 0
  %2222 = vmatpush2.bf16.msra.mxu0 0
  %2223 = vmatprep.subr.bf16.mxu0 0
  %2224 = vmatpush2.bf16.msra.mxu0 0
  %2225 = vmatprep.subr.bf16.mxu0 0
  %2226 = vmatpush2.bf16.msra.mxu0 0
  %2227 = vmatprep.subr.bf16.mxu0 0
  %2228 = vmatpush2.bf16.msra.mxu0 0
  %2229 = vmatprep.subr.bf16.mxu0 0
  %2230 = vmatpush2.bf16.msra.mxu0 0
  %2231 = vmatprep.mubr.bf16.mxu0 0
  %2232 = vmatmul.mubr.bf16.gmra.mxu0 %v830
  %v2233 = vpop.f32.mrf.mxu0
  %v2234 = vadd.f32 0.0, %v2233
  %v2235 = vpop.f32.mrf.mxu0
  %v2236 = vpop.f32.mrf.mxu0
  %v2237 = vpop.f32.mrf.mxu0
  %2238 = vdwg.mxu0
  %v2239 = vadd.f32 %v2146, %v2234
  %v2242 = vunpack.c.l.s4 1983009808
  %v2243 = vunpack.c.0.s8 %v2242
  %v2244 = vlaneseq
  %v2245 = vshrl.u32 %v2244, 7
  %v2246 = vsub.s32 %v2243, %v2245
  %v2247 = vrot.slane %v1524, %v2246
  %2248 = vrot.lane.b32.xlu0 %v2247, 118
  %v2249 = vpop.permute.xlu0 %2248
  %v2251 = vsel %vm144, %v2249, 0
  %2253 = vmatprep.subr.bf16.mxu0 0
  %2254 = vmatpush1.bf16.msra.mxu0 0
  %2255 = vmatprep.subr.bf16.mxu0 0
  %2256 = vmatpush1.bf16.msra.mxu0 0
  %2257 = vmatprep.subr.bf16.mxu0 0
  %2258 = vmatpush1.bf16.msra.mxu0 0
  %2259 = vmatprep.subr.bf16.mxu0 0
  %2260 = vmatpush1.bf16.msra.mxu0 0
  %2261 = vmatprep.subr.bf16.mxu0 0
  %2262 = vmatpush1.bf16.msra.mxu0 0
  %2263 = vmatprep.subr.bf16.mxu0 0
  %2264 = vmatpush1.bf16.msra.mxu0 0
  %2265 = vmatprep.subr.bf16.mxu0 0
  %2266 = vmatpush1.bf16.msra.mxu0 0
  %2267 = vmatprep.subr.bf16.mxu0 0
  %2268 = vmatpush1.bf16.msra.mxu0 %v2251
  %2269 = vmatprep.subr.bf16.mxu0 0
  %2270 = vmatpush2.bf16.msra.mxu0 0
  %2271 = vmatprep.subr.bf16.mxu0 0
  %2272 = vmatpush2.bf16.msra.mxu0 0
  %2273 = vmatprep.subr.bf16.mxu0 0
  %2274 = vmatpush2.bf16.msra.mxu0 0
  %2275 = vmatprep.subr.bf16.mxu0 0
  %2276 = vmatpush2.bf16.msra.mxu0 0
  %2277 = vmatprep.subr.bf16.mxu0 0
  %2278 = vmatpush2.bf16.msra.mxu0 0
  %2279 = vmatprep.subr.bf16.mxu0 0
  %2280 = vmatpush2.bf16.msra.mxu0 0
  %2281 = vmatprep.subr.bf16.mxu0 0
  %2282 = vmatpush2.bf16.msra.mxu0 0
  %2283 = vmatprep.subr.bf16.mxu0 0
  %2284 = vmatpush2.bf16.msra.mxu0 0
  %2285 = vmatprep.mubr.bf16.mxu0 0
  %2286 = vmatmul.mubr.bf16.gmra.mxu0 %v887
  %v2287 = vpop.f32.mrf.mxu0
  %v2288 = vadd.f32 0.0, %v2287
  %v2289 = vpop.f32.mrf.mxu0
  %v2290 = vpop.f32.mrf.mxu0
  %v2291 = vpop.f32.mrf.mxu0
  %2292 = vdwg.mxu0
  %v2293 = vadd.f32 %v2192, %v2288
  %2294 = vrot.lane.b32.xlu0 %v1547, 117
  %v2295 = vpop.permute.xlu0 %2294
  %v2297 = vsel %vm144, %v2295, 0
  %2299 = vmatprep.subr.bf16.mxu0 0
  %2300 = vmatpush1.bf16.msra.mxu0 0
  %2301 = vmatprep.subr.bf16.mxu0 0
  %2302 = vmatpush1.bf16.msra.mxu0 0
  %2303 = vmatprep.subr.bf16.mxu0 0
  %2304 = vmatpush1.bf16.msra.mxu0 0
  %2305 = vmatprep.subr.bf16.mxu0 0
  %2306 = vmatpush1.bf16.msra.mxu0 0
  %2307 = vmatprep.subr.bf16.mxu0 0
  %2308 = vmatpush1.bf16.msra.mxu0 0
  %2309 = vmatprep.subr.bf16.mxu0 0
  %2310 = vmatpush1.bf16.msra.mxu0 0
  %2311 = vmatprep.subr.bf16.mxu0 0
  %2312 = vmatpush1.bf16.msra.mxu0 0
  %2313 = vmatprep.subr.bf16.mxu0 0
  %2314 = vmatpush1.bf16.msra.mxu0 %v2297
  %2315 = vmatprep.subr.bf16.mxu0 0
  %2316 = vmatpush2.bf16.msra.mxu0 0
  %2317 = vmatprep.subr.bf16.mxu0 0
  %2318 = vmatpush2.bf16.msra.mxu0 0
  %2319 = vmatprep.subr.bf16.mxu0 0
  %2320 = vmatpush2.bf16.msra.mxu0 0
  %2321 = vmatprep.subr.bf16.mxu0 0
  %2322 = vmatpush2.bf16.msra.mxu0 0
  %2323 = vmatprep.subr.bf16.mxu0 0
  %2324 = vmatpush2.bf16.msra.mxu0 0
  %2325 = vmatprep.subr.bf16.mxu0 0
  %2326 = vmatpush2.bf16.msra.mxu0 0
  %2327 = vmatprep.subr.bf16.mxu0 0
  %2328 = vmatpush2.bf16.msra.mxu0 0
  %2329 = vmatprep.subr.bf16.mxu0 0
  %2330 = vmatpush2.bf16.msra.mxu0 0
  %2331 = vmatprep.mubr.bf16.mxu0 0
  %2332 = vmatmul.mubr.bf16.gmra.mxu0 %v936
  %v2333 = vpop.f32.mrf.mxu0
  %v2334 = vadd.f32 0.0, %v2333
  %v2335 = vpop.f32.mrf.mxu0
  %v2336 = vpop.f32.mrf.mxu0
  %v2337 = vpop.f32.mrf.mxu0
  %2338 = vdwg.mxu0
  %v2339 = vadd.f32 %v2239, %v2334
  %2340 = vrot.lane.b32.xlu0 %v1777, 117
  %v2341 = vpop.permute.xlu0 %2340
  %v2343 = vsel %vm144, %v2341, 0
  %2345 = vmatprep.subr.bf16.mxu0 0
  %2346 = vmatpush1.bf16.msra.mxu0 0
  %2347 = vmatprep.subr.bf16.mxu0 0
  %2348 = vmatpush1.bf16.msra.mxu0 0
  %2349 = vmatprep.subr.bf16.mxu0 0
  %2350 = vmatpush1.bf16.msra.mxu0 0
  %2351 = vmatprep.subr.bf16.mxu0 0
  %2352 = vmatpush1.bf16.msra.mxu0 0
  %2353 = vmatprep.subr.bf16.mxu0 0
  %2354 = vmatpush1.bf16.msra.mxu0 0
  %2355 = vmatprep.subr.bf16.mxu0 0
  %2356 = vmatpush1.bf16.msra.mxu0 0
  %2357 = vmatprep.subr.bf16.mxu0 0
  %2358 = vmatpush1.bf16.msra.mxu0 0
  %2359 = vmatprep.subr.bf16.mxu0 0
  %2360 = vmatpush1.bf16.msra.mxu0 %v2343
  %2361 = vmatprep.subr.bf16.mxu0 0
  %2362 = vmatpush2.bf16.msra.mxu0 0
  %2363 = vmatprep.subr.bf16.mxu0 0
  %2364 = vmatpush2.bf16.msra.mxu0 0
  %2365 = vmatprep.subr.bf16.mxu0 0
  %2366 = vmatpush2.bf16.msra.mxu0 0
  %2367 = vmatprep.subr.bf16.mxu0 0
  %2368 = vmatpush2.bf16.msra.mxu0 0
  %2369 = vmatprep.subr.bf16.mxu0 0
  %2370 = vmatpush2.bf16.msra.mxu0 0
  %2371 = vmatprep.subr.bf16.mxu0 0
  %2372 = vmatpush2.bf16.msra.mxu0 0
  %2373 = vmatprep.subr.bf16.mxu0 0
  %2374 = vmatpush2.bf16.msra.mxu0 0
  %2375 = vmatprep.subr.bf16.mxu0 0
  %2376 = vmatpush2.bf16.msra.mxu0 0
  %2377 = vmatprep.mubr.bf16.mxu0 0
  %2378 = vmatmul.mubr.bf16.gmra.mxu0 %v985
  %v2379 = vpop.f32.mrf.mxu0
  %v2380 = vadd.f32 0.0, %v2379
  %v2381 = vpop.f32.mrf.mxu0
  %v2382 = vpop.f32.mrf.mxu0
  %v2383 = vpop.f32.mrf.mxu0
  %2384 = vdwg.mxu0
  %v2385 = vadd.f32 %v2293, %v2380
  %v2386 = vld [vmem:[%s8] sm:$0xff]
  %2388 = vset.pattern.permute.xlu0 0
  %2389 = vperm.xlu0 %2388, %v2386
  %v2390 = vpop.permute.xlu0 %2389
  %v2392 = vmul.f32 %v2339, %v2390
  %v2393 = vld [vmem:[%s9] sm:$0xff]
  %2395 = vset.pattern.permute.xlu0 0
  %2396 = vperm.xlu0 %2395, %v2393
  %v2397 = vpop.permute.xlu0 %2396
  %v2399 = vadd.f32 %v2392, %v2397
  %v2400 = vmax.f32 %v2399, 0.0
  %v2401 = vmul.f32 %v2400, %v1050
  %v2402 = vpack.c.bf16 %v2401, %v2401
  %v2404 = vunpack.c.l.b16 %v2402
  %v2405 = vpack.c.b16 %v2404, %v2404
  %2406 = vrot.lane.b32.xlu0 %v2405, 11
  %v2407 = vpop.permute.xlu0 %2406
  %2409 = vst.msk [vmem:[#allocation2] sm:$0xf] %vm1060, %v2407
  %v2410 = vld [vmem:[#allocation2] sm:$0xf]
  %v2412 = vunpack.c.l.b16 %v2410
  %v2413 = vpack.c.b16 %v2412, %v2412
  %2414 = vrot.lane.b32.xlu0 %v2413, 127
  %v2415 = vpop.permute.xlu0 %2414
  %v2417 = vsel %vm1072, %v2415, 0
  %2419 = vmatprep.subr.bf16.mxu0 0
  %2420 = vmatpush1.bf16.msra.mxu0 0
  %2421 = vmatprep.subr.bf16.mxu0 0
  %2422 = vmatpush1.bf16.msra.mxu0 0
  %2423 = vmatprep.subr.bf16.mxu0 0
  %2424 = vmatpush1.bf16.msra.mxu0 0
  %2425 = vmatprep.subr.bf16.mxu0 0
  %2426 = vmatpush1.bf16.msra.mxu0 0
  %2427 = vmatprep.subr.bf16.mxu0 0
  %2428 = vmatpush1.bf16.msra.mxu0 0
  %2429 = vmatprep.subr.bf16.mxu0 0
  %2430 = vmatpush1.bf16.msra.mxu0 0
  %2431 = vmatprep.subr.bf16.mxu0 0
  %2432 = vmatpush1.bf16.msra.mxu0 0
  %2433 = vmatprep.subr.bf16.mxu0 0
  %2434 = vmatpush1.bf16.msra.mxu0 %v2417
  %2435 = vmatprep.subr.bf16.mxu0 0
  %2436 = vmatpush2.bf16.msra.mxu0 0
  %2437 = vmatprep.subr.bf16.mxu0 0
  %2438 = vmatpush2.bf16.msra.mxu0 0
  %2439 = vmatprep.subr.bf16.mxu0 0
  %2440 = vmatpush2.bf16.msra.mxu0 0
  %2441 = vmatprep.subr.bf16.mxu0 0
  %2442 = vmatpush2.bf16.msra.mxu0 0
  %2443 = vmatprep.subr.bf16.mxu0 0
  %2444 = vmatpush2.bf16.msra.mxu0 0
  %2445 = vmatprep.subr.bf16.mxu0 0
  %2446 = vmatpush2.bf16.msra.mxu0 0
  %2447 = vmatprep.subr.bf16.mxu0 0
  %2448 = vmatpush2.bf16.msra.mxu0 0
  %2449 = vmatprep.subr.bf16.mxu0 0
  %2450 = vmatpush2.bf16.msra.mxu0 0
  %2451 = vmatprep.mubr.bf16.mxu0 0
  %2452 = vmatmul.mubr.bf16.gmra.mxu0 %v1070
  %v2453 = vpop.f32.mrf.mxu0
  %v2454 = vadd.f32 0.0, %v2453
  %v2455 = vpop.f32.mrf.mxu0
  %v2456 = vpop.f32.mrf.mxu0
  %v2457 = vpop.f32.mrf.mxu0
  %2458 = vdwg.mxu0
  %v2460 = vsel %vm1072, %v2410, 0
  %2462 = vmatprep.subr.bf16.mxu0 0
  %2463 = vmatpush1.bf16.msra.mxu0 0
  %2464 = vmatprep.subr.bf16.mxu0 0
  %2465 = vmatpush1.bf16.msra.mxu0 0
  %2466 = vmatprep.subr.bf16.mxu0 0
  %2467 = vmatpush1.bf16.msra.mxu0 0
  %2468 = vmatprep.subr.bf16.mxu0 0
  %2469 = vmatpush1.bf16.msra.mxu0 0
  %2470 = vmatprep.subr.bf16.mxu0 0
  %2471 = vmatpush1.bf16.msra.mxu0 0
  %2472 = vmatprep.subr.bf16.mxu0 0
  %2473 = vmatpush1.bf16.msra.mxu0 0
  %2474 = vmatprep.subr.bf16.mxu0 0
  %2475 = vmatpush1.bf16.msra.mxu0 0
  %2476 = vmatprep.subr.bf16.mxu0 0
  %2477 = vmatpush1.bf16.msra.mxu0 %v2460
  %2478 = vmatprep.subr.bf16.mxu0 0
  %2479 = vmatpush2.bf16.msra.mxu0 0
  %2480 = vmatprep.subr.bf16.mxu0 0
  %2481 = vmatpush2.bf16.msra.mxu0 0
  %2482 = vmatprep.subr.bf16.mxu0 0
  %2483 = vmatpush2.bf16.msra.mxu0 0
  %2484 = vmatprep.subr.bf16.mxu0 0
  %2485 = vmatpush2.bf16.msra.mxu0 0
  %2486 = vmatprep.subr.bf16.mxu0 0
  %2487 = vmatpush2.bf16.msra.mxu0 0
  %2488 = vmatprep.subr.bf16.mxu0 0
  %2489 = vmatpush2.bf16.msra.mxu0 0
  %2490 = vmatprep.subr.bf16.mxu0 0
  %2491 = vmatpush2.bf16.msra.mxu0 0
  %2492 = vmatprep.subr.bf16.mxu0 0
  %2493 = vmatpush2.bf16.msra.mxu0 0
  %2494 = vmatprep.mubr.bf16.mxu0 0
  %2495 = vmatmul.mubr.bf16.gmra.mxu0 %v1117
  %v2496 = vpop.f32.mrf.mxu0
  %v2497 = vadd.f32 %v2454, %v2496
  %v2498 = vpop.f32.mrf.mxu0
  %v2499 = vpop.f32.mrf.mxu0
  %v2500 = vpop.f32.mrf.mxu0
  %2501 = vdwg.mxu0
  %2502 = vrot.lane.b32.xlu0 %v2413, 126
  %v2503 = vpop.permute.xlu0 %2502
  %v2505 = vsel %vm1072, %v2503, 0
  %2507 = vmatprep.subr.bf16.mxu0 0
  %2508 = vmatpush1.bf16.msra.mxu0 0
  %2509 = vmatprep.subr.bf16.mxu0 0
  %2510 = vmatpush1.bf16.msra.mxu0 0
  %2511 = vmatprep.subr.bf16.mxu0 0
  %2512 = vmatpush1.bf16.msra.mxu0 0
  %2513 = vmatprep.subr.bf16.mxu0 0
  %2514 = vmatpush1.bf16.msra.mxu0 0
  %2515 = vmatprep.subr.bf16.mxu0 0
  %2516 = vmatpush1.bf16.msra.mxu0 0
  %2517 = vmatprep.subr.bf16.mxu0 0
  %2518 = vmatpush1.bf16.msra.mxu0 0
  %2519 = vmatprep.subr.bf16.mxu0 0
  %2520 = vmatpush1.bf16.msra.mxu0 0
  %2521 = vmatprep.subr.bf16.mxu0 0
  %2522 = vmatpush1.bf16.msra.mxu0 %v2505
  %2523 = vmatprep.subr.bf16.mxu0 0
  %2524 = vmatpush2.bf16.msra.mxu0 0
  %2525 = vmatprep.subr.bf16.mxu0 0
  %2526 = vmatpush2.bf16.msra.mxu0 0
  %2527 = vmatprep.subr.bf16.mxu0 0
  %2528 = vmatpush2.bf16.msra.mxu0 0
  %2529 = vmatprep.subr.bf16.mxu0 0
  %2530 = vmatpush2.bf16.msra.mxu0 0
  %2531 = vmatprep.subr.bf16.mxu0 0
  %2532 = vmatpush2.bf16.msra.mxu0 0
  %2533 = vmatprep.subr.bf16.mxu0 0
  %2534 = vmatpush2.bf16.msra.mxu0 0
  %2535 = vmatprep.subr.bf16.mxu0 0
  %2536 = vmatpush2.bf16.msra.mxu0 0
  %2537 = vmatprep.subr.bf16.mxu0 0
  %2538 = vmatpush2.bf16.msra.mxu0 0
  %2539 = vmatprep.mubr.bf16.mxu0 0
  %2540 = vmatmul.mubr.bf16.gmra.mxu0 %v1165
  %v2541 = vpop.f32.mrf.mxu0
  %v2542 = vadd.f32 0.0, %v2541
  %v2543 = vpop.f32.mrf.mxu0
  %v2544 = vpop.f32.mrf.mxu0
  %v2545 = vpop.f32.mrf.mxu0
  %2546 = vdwg.mxu0
  %v2547 = vadd.f32 %v2497, %v2542
  %2548 = vrot.lane.b32.xlu0 %v2413, 118
  %v2549 = vpop.permute.xlu0 %2548
  %v2551 = vsel %vm1072, %v2549, 0
  %2553 = vmatprep.subr.bf16.mxu0 0
  %2554 = vmatpush1.bf16.msra.mxu0 0
  %2555 = vmatprep.subr.bf16.mxu0 0
  %2556 = vmatpush1.bf16.msra.mxu0 0
  %2557 = vmatprep.subr.bf16.mxu0 0
  %2558 = vmatpush1.bf16.msra.mxu0 0
  %2559 = vmatprep.subr.bf16.mxu0 0
  %2560 = vmatpush1.bf16.msra.mxu0 0
  %2561 = vmatprep.subr.bf16.mxu0 0
  %2562 = vmatpush1.bf16.msra.mxu0 0
  %2563 = vmatprep.subr.bf16.mxu0 0
  %2564 = vmatpush1.bf16.msra.mxu0 0
  %2565 = vmatprep.subr.bf16.mxu0 0
  %2566 = vmatpush1.bf16.msra.mxu0 0
  %2567 = vmatprep.subr.bf16.mxu0 0
  %2568 = vmatpush1.bf16.msra.mxu0 %v2551
  %2569 = vmatprep.subr.bf16.mxu0 0
  %2570 = vmatpush2.bf16.msra.mxu0 0
  %2571 = vmatprep.subr.bf16.mxu0 0
  %2572 = vmatpush2.bf16.msra.mxu0 0
  %2573 = vmatprep.subr.bf16.mxu0 0
  %2574 = vmatpush2.bf16.msra.mxu0 0
  %2575 = vmatprep.subr.bf16.mxu0 0
  %2576 = vmatpush2.bf16.msra.mxu0 0
  %2577 = vmatprep.subr.bf16.mxu0 0
  %2578 = vmatpush2.bf16.msra.mxu0 0
  %2579 = vmatprep.subr.bf16.mxu0 0
  %2580 = vmatpush2.bf16.msra.mxu0 0
  %2581 = vmatprep.subr.bf16.mxu0 0
  %2582 = vmatpush2.bf16.msra.mxu0 0
  %2583 = vmatprep.subr.bf16.mxu0 0
  %2584 = vmatpush2.bf16.msra.mxu0 0
  %2585 = vmatprep.mubr.bf16.mxu0 0
  %2586 = vmatmul.mubr.bf16.gmra.mxu0 %v1214
  %v2587 = vpop.f32.mrf.mxu0
  %v2588 = vadd.f32 0.0, %v2587
  %v2589 = vpop.f32.mrf.mxu0
  %v2590 = vpop.f32.mrf.mxu0
  %v2591 = vpop.f32.mrf.mxu0
  %2592 = vdwg.mxu0
  %v2593 = vadd.f32 %v2547, %v2588
  %2594 = vrot.lane.b32.xlu0 %v2413, 117
  %v2595 = vpop.permute.xlu0 %2594
  %v2597 = vsel %vm1072, %v2595, 0
  %2599 = vmatprep.subr.bf16.mxu0 0
  %2600 = vmatpush1.bf16.msra.mxu0 0
  %2601 = vmatprep.subr.bf16.mxu0 0
  %2602 = vmatpush1.bf16.msra.mxu0 0
  %2603 = vmatprep.subr.bf16.mxu0 0
  %2604 = vmatpush1.bf16.msra.mxu0 0
  %2605 = vmatprep.subr.bf16.mxu0 0
  %2606 = vmatpush1.bf16.msra.mxu0 0
  %2607 = vmatprep.subr.bf16.mxu0 0
  %2608 = vmatpush1.bf16.msra.mxu0 0
  %2609 = vmatprep.subr.bf16.mxu0 0
  %2610 = vmatpush1.bf16.msra.mxu0 0
  %2611 = vmatprep.subr.bf16.mxu0 0
  %2612 = vmatpush1.bf16.msra.mxu0 0
  %2613 = vmatprep.subr.bf16.mxu0 0
  %2614 = vmatpush1.bf16.msra.mxu0 %v2597
  %2615 = vmatprep.subr.bf16.mxu0 0
  %2616 = vmatpush2.bf16.msra.mxu0 0
  %2617 = vmatprep.subr.bf16.mxu0 0
  %2618 = vmatpush2.bf16.msra.mxu0 0
  %2619 = vmatprep.subr.bf16.mxu0 0
  %2620 = vmatpush2.bf16.msra.mxu0 0
  %2621 = vmatprep.subr.bf16.mxu0 0
  %2622 = vmatpush2.bf16.msra.mxu0 0
  %2623 = vmatprep.subr.bf16.mxu0 0
  %2624 = vmatpush2.bf16.msra.mxu0 0
  %2625 = vmatprep.subr.bf16.mxu0 0
  %2626 = vmatpush2.bf16.msra.mxu0 0
  %2627 = vmatprep.subr.bf16.mxu0 0
  %2628 = vmatpush2.bf16.msra.mxu0 0
  %2629 = vmatprep.subr.bf16.mxu0 0
  %2630 = vmatpush2.bf16.msra.mxu0 0
  %2631 = vmatprep.mubr.bf16.mxu0 0
  %2632 = vmatmul.mubr.bf16.gmra.mxu0 %v1263
  %v2633 = vpop.f32.mrf.mxu0
  %v2634 = vadd.f32 0.0, %v2633
  %v2635 = vpop.f32.mrf.mxu0
  %v2636 = vpop.f32.mrf.mxu0
  %v2637 = vpop.f32.mrf.mxu0
  %2638 = vdwg.mxu0
  %v2639 = vadd.f32 %v2593, %v2634
  %2640 = vrot.lane.b32.xlu0 %v2413, 116
  %v2641 = vpop.permute.xlu0 %2640
  %v2643 = vsel %vm1072, %v2641, 0
  %2645 = vmatprep.subr.bf16.mxu0 0
  %2646 = vmatpush1.bf16.msra.mxu0 0
  %2647 = vmatprep.subr.bf16.mxu0 0
  %2648 = vmatpush1.bf16.msra.mxu0 0
  %2649 = vmatprep.subr.bf16.mxu0 0
  %2650 = vmatpush1.bf16.msra.mxu0 0
  %2651 = vmatprep.subr.bf16.mxu0 0
  %2652 = vmatpush1.bf16.msra.mxu0 0
  %2653 = vmatprep.subr.bf16.mxu0 0
  %2654 = vmatpush1.bf16.msra.mxu0 0
  %2655 = vmatprep.subr.bf16.mxu0 0
  %2656 = vmatpush1.bf16.msra.mxu0 0
  %2657 = vmatprep.subr.bf16.mxu0 0
  %2658 = vmatpush1.bf16.msra.mxu0 0
  %2659 = vmatprep.subr.bf16.mxu0 0
  %2660 = vmatpush1.bf16.msra.mxu0 %v2643
  %2661 = vmatprep.subr.bf16.mxu0 0
  %2662 = vmatpush2.bf16.msra.mxu0 0
  %2663 = vmatprep.subr.bf16.mxu0 0
  %2664 = vmatpush2.bf16.msra.mxu0 0
  %2665 = vmatprep.subr.bf16.mxu0 0
  %2666 = vmatpush2.bf16.msra.mxu0 0
  %2667 = vmatprep.subr.bf16.mxu0 0
  %2668 = vmatpush2.bf16.msra.mxu0 0
  %2669 = vmatprep.subr.bf16.mxu0 0
  %2670 = vmatpush2.bf16.msra.mxu0 0
  %2671 = vmatprep.subr.bf16.mxu0 0
  %2672 = vmatpush2.bf16.msra.mxu0 0
  %2673 = vmatprep.subr.bf16.mxu0 0
  %2674 = vmatpush2.bf16.msra.mxu0 0
  %2675 = vmatprep.subr.bf16.mxu0 0
  %2676 = vmatpush2.bf16.msra.mxu0 0
  %2677 = vmatprep.mubr.bf16.mxu0 0
  %2678 = vmatmul.mubr.bf16.gmra.mxu0 %v1312
  %v2679 = vpop.f32.mrf.mxu0
  %v2680 = vadd.f32 0.0, %v2679
  %v2681 = vpop.f32.mrf.mxu0
  %v2682 = vpop.f32.mrf.mxu0
  %v2683 = vpop.f32.mrf.mxu0
  %2684 = vdwg.mxu0
  %v2685 = vadd.f32 %v2639, %v2680
  %2686 = vrot.lane.b32.xlu0 %v2413, 108
  %v2687 = vpop.permute.xlu0 %2686
  %v2689 = vsel %vm1072, %v2687, 0
  %2691 = vmatprep.subr.bf16.mxu0 0
  %2692 = vmatpush1.bf16.msra.mxu0 0
  %2693 = vmatprep.subr.bf16.mxu0 0
  %2694 = vmatpush1.bf16.msra.mxu0 0
  %2695 = vmatprep.subr.bf16.mxu0 0
  %2696 = vmatpush1.bf16.msra.mxu0 0
  %2697 = vmatprep.subr.bf16.mxu0 0
  %2698 = vmatpush1.bf16.msra.mxu0 0
  %2699 = vmatprep.subr.bf16.mxu0 0
  %2700 = vmatpush1.bf16.msra.mxu0 0
  %2701 = vmatprep.subr.bf16.mxu0 0
  %2702 = vmatpush1.bf16.msra.mxu0 0
  %2703 = vmatprep.subr.bf16.mxu0 0
  %2704 = vmatpush1.bf16.msra.mxu0 0
  %2705 = vmatprep.subr.bf16.mxu0 0
  %2706 = vmatpush1.bf16.msra.mxu0 %v2689
  %2707 = vmatprep.subr.bf16.mxu0 0
  %2708 = vmatpush2.bf16.msra.mxu0 0
  %2709 = vmatprep.subr.bf16.mxu0 0
  %2710 = vmatpush2.bf16.msra.mxu0 0
  %2711 = vmatprep.subr.bf16.mxu0 0
  %2712 = vmatpush2.bf16.msra.mxu0 0
  %2713 = vmatprep.subr.bf16.mxu0 0
  %2714 = vmatpush2.bf16.msra.mxu0 0
  %2715 = vmatprep.subr.bf16.mxu0 0
  %2716 = vmatpush2.bf16.msra.mxu0 0
  %2717 = vmatprep.subr.bf16.mxu0 0
  %2718 = vmatpush2.bf16.msra.mxu0 0
  %2719 = vmatprep.subr.bf16.mxu0 0
  %2720 = vmatpush2.bf16.msra.mxu0 0
  %2721 = vmatprep.subr.bf16.mxu0 0
  %2722 = vmatpush2.bf16.msra.mxu0 0
  %2723 = vmatprep.mubr.bf16.mxu0 0
  %2724 = vmatmul.mubr.bf16.gmra.mxu0 %v1361
  %v2725 = vpop.f32.mrf.mxu0
  %v2726 = vadd.f32 0.0, %v2725
  %v2727 = vpop.f32.mrf.mxu0
  %v2728 = vpop.f32.mrf.mxu0
  %v2729 = vpop.f32.mrf.mxu0
  %2730 = vdwg.mxu0
  %v2731 = vadd.f32 %v2685, %v2726
  %2732 = vrot.lane.b32.xlu0 %v2413, 107
  %v2733 = vpop.permute.xlu0 %2732
  %v2735 = vsel %vm1072, %v2733, 0
  %2737 = vmatprep.subr.bf16.mxu0 0
  %2738 = vmatpush1.bf16.msra.mxu0 0
  %2739 = vmatprep.subr.bf16.mxu0 0
  %2740 = vmatpush1.bf16.msra.mxu0 0
  %2741 = vmatprep.subr.bf16.mxu0 0
  %2742 = vmatpush1.bf16.msra.mxu0 0
  %2743 = vmatprep.subr.bf16.mxu0 0
  %2744 = vmatpush1.bf16.msra.mxu0 0
  %2745 = vmatprep.subr.bf16.mxu0 0
  %2746 = vmatpush1.bf16.msra.mxu0 0
  %2747 = vmatprep.subr.bf16.mxu0 0
  %2748 = vmatpush1.bf16.msra.mxu0 0
  %2749 = vmatprep.subr.bf16.mxu0 0
  %2750 = vmatpush1.bf16.msra.mxu0 0
  %2751 = vmatprep.subr.bf16.mxu0 0
  %2752 = vmatpush1.bf16.msra.mxu0 %v2735
  %2753 = vmatprep.subr.bf16.mxu0 0
  %2754 = vmatpush2.bf16.msra.mxu0 0
  %2755 = vmatprep.subr.bf16.mxu0 0
  %2756 = vmatpush2.bf16.msra.mxu0 0
  %2757 = vmatprep.subr.bf16.mxu0 0
  %2758 = vmatpush2.bf16.msra.mxu0 0
  %2759 = vmatprep.subr.bf16.mxu0 0
  %2760 = vmatpush2.bf16.msra.mxu0 0
  %2761 = vmatprep.subr.bf16.mxu0 0
  %2762 = vmatpush2.bf16.msra.mxu0 0
  %2763 = vmatprep.subr.bf16.mxu0 0
  %2764 = vmatpush2.bf16.msra.mxu0 0
  %2765 = vmatprep.subr.bf16.mxu0 0
  %2766 = vmatpush2.bf16.msra.mxu0 0
  %2767 = vmatprep.subr.bf16.mxu0 0
  %2768 = vmatpush2.bf16.msra.mxu0 0
  %2769 = vmatprep.mubr.bf16.mxu0 0
  %2770 = vmatmul.mubr.bf16.gmra.mxu0 %v1410
  %v2771 = vpop.f32.mrf.mxu0
  %v2772 = vadd.f32 0.0, %v2771
  %v2773 = vpop.f32.mrf.mxu0
  %v2774 = vpop.f32.mrf.mxu0
  %v2775 = vpop.f32.mrf.mxu0
  %2776 = vdwg.mxu0
  %v2777 = vadd.f32 %v2731, %v2772
  %2778 = vrot.lane.b32.xlu0 %v2413, 106
  %v2779 = vpop.permute.xlu0 %2778
  %v2781 = vsel %vm1072, %v2779, 0
  %2783 = vmatprep.subr.bf16.mxu0 0
  %2784 = vmatpush1.bf16.msra.mxu0 0
  %2785 = vmatprep.subr.bf16.mxu0 0
  %2786 = vmatpush1.bf16.msra.mxu0 0
  %2787 = vmatprep.subr.bf16.mxu0 0
  %2788 = vmatpush1.bf16.msra.mxu0 0
  %2789 = vmatprep.subr.bf16.mxu0 0
  %2790 = vmatpush1.bf16.msra.mxu0 0
  %2791 = vmatprep.subr.bf16.mxu0 0
  %2792 = vmatpush1.bf16.msra.mxu0 0
  %2793 = vmatprep.subr.bf16.mxu0 0
  %2794 = vmatpush1.bf16.msra.mxu0 0
  %2795 = vmatprep.subr.bf16.mxu0 0
  %2796 = vmatpush1.bf16.msra.mxu0 0
  %2797 = vmatprep.subr.bf16.mxu0 0
  %2798 = vmatpush1.bf16.msra.mxu0 %v2781
  %2799 = vmatprep.subr.bf16.mxu0 0
  %2800 = vmatpush2.bf16.msra.mxu0 0
  %2801 = vmatprep.subr.bf16.mxu0 0
  %2802 = vmatpush2.bf16.msra.mxu0 0
  %2803 = vmatprep.subr.bf16.mxu0 0
  %2804 = vmatpush2.bf16.msra.mxu0 0
  %2805 = vmatprep.subr.bf16.mxu0 0
  %2806 = vmatpush2.bf16.msra.mxu0 0
  %2807 = vmatprep.subr.bf16.mxu0 0
  %2808 = vmatpush2.bf16.msra.mxu0 0
  %2809 = vmatprep.subr.bf16.mxu0 0
  %2810 = vmatpush2.bf16.msra.mxu0 0
  %2811 = vmatprep.subr.bf16.mxu0 0
  %2812 = vmatpush2.bf16.msra.mxu0 0
  %2813 = vmatprep.subr.bf16.mxu0 0
  %2814 = vmatpush2.bf16.msra.mxu0 0
  %2815 = vmatprep.mubr.bf16.mxu0 0
  %2816 = vmatmul.mubr.bf16.gmra.mxu0 %v1459
  %v2817 = vpop.f32.mrf.mxu0
  %v2818 = vadd.f32 0.0, %v2817
  %v2819 = vpop.f32.mrf.mxu0
  %v2820 = vpop.f32.mrf.mxu0
  %v2821 = vpop.f32.mrf.mxu0
  %2822 = vdwg.mxu0
  %v2823 = vadd.f32 %v2777, %v2818
  %v2824 = vld [vmem:[%s10] sm:$0xff]
  %2826 = vset.pattern.permute.xlu0 0
  %2827 = vperm.xlu0 %2826, %v2824
  %v2828 = vpop.permute.xlu0 %2827
  %v2830 = vadd.f32 %v2823, %v2828
  %v2831 = vadd.f32 %v2830, %v2385
  %v2832 = vld [vmem:[%s11] sm:$0xff]
  %2834 = vset.pattern.permute.xlu0 0
  %2835 = vperm.xlu0 %2834, %v2832
  %v2836 = vpop.permute.xlu0 %2835
  %v2838 = vadd.f32 %v2831, %v2836
  %s2839 = scalar_lea.vmem %s12, 8
  %2840 = vst.msk [vmem:[%s2839] sm:$0xff] %vm1520, %v2838
  // Predicated region
  $region50: #{residual_conv_forward.1} parent=0 // pred_check
    _
  $region51: #{residual_conv_forward.1} parent=0 // pred_check_branch
    %2842 = sbr.rel (0) target = $region53
  $region52: #{residual_conv_forward.1} parent=0 // pred_region
    _
  $region53: #{residual_conv_forward.1} parent=0 // pred_fallthru
    _
  // Predicated region
  $region54: #{residual_conv_forward.1} parent=0 // pred_check
    _
  $region55: #{residual_conv_forward.1} parent=0 // pred_check_branch
    %2844 = sbr.rel (0) target = $region57
  $region56: #{residual_conv_forward.1} parent=0 // pred_region
    _
  $region57: #{residual_conv_forward.1} parent=0 // pred_fallthru
    _

</llo_original>
